<compile_context>
chip_gen: v6e
topology: v6e:2x2x1
jax: 0.10.0
libtpu: 0.0.40
codegen_flags: <defaults>
</compile_context>

<pallas_src>
import jax
import jax.numpy as jnp
import numpy as np
from jax.experimental import pallas as pl
from jax.experimental.pallas import tpu as pltpu


# --------------------------------------------------------------------------
# Pallas kernel: the whole forward pass is a chain of lane-dense matmuls.
# --------------------------------------------------------------------------
def _forward_kernel(x_ref,
                    w1_ref, b1_ref, p1_ref,
                    w2_ref, b2_ref, p2_ref,
                    w3_ref, b3_ref,
                    w4_ref, b4_ref,
                    fw1_ref, fb1_ref, fw2_ref, fb2_ref, fw3_ref, fb3_ref,
                    out_ref):
    def dense_relu(a, w_ref, b_ref):
        y = jnp.dot(a, w_ref[...], preferred_element_type=jnp.float32) + b_ref[...]
        return jnp.maximum(y, 0.0)

    def maxpool(a, sel_ref):
        # max over four 0/1 selection matmuls (one per 2x2 pool tap).
        m = jnp.dot(a, sel_ref[0], preferred_element_type=jnp.float32)
        for k in range(1, 4):
            m = jnp.maximum(
                m, jnp.dot(a, sel_ref[k], preferred_element_type=jnp.float32))
        return m

    h = dense_relu(x_ref[...], w1_ref, b1_ref)   # (bn, 15*15*2)  conv1+relu
    h = maxpool(h, p1_ref)                       # (bn, 7*7*2)    pool
    h = dense_relu(h, w2_ref, b2_ref)            # (bn, 6*6*4)    conv2+relu
    h = maxpool(h, p2_ref)                       # (bn, 3*3*4)    pool
    h = dense_relu(h, w3_ref, b3_ref)            # (bn, 2*2*8)    conv3+relu
    h = dense_relu(h, w4_ref, b4_ref)            # (bn, 16)       conv4+relu
    h = dense_relu(h, fw1_ref, fb1_ref)          # (bn, 1280)     fc1 (padded)
    h = dense_relu(h, fw2_ref, fb2_ref)          # (bn, 128)      fc2 (padded)
    out_ref[...] = (jnp.dot(h, fw3_ref[...], preferred_element_type=jnp.float32)
                    + fb3_ref[...])              # (bn, 128)      fc3 (padded)


# --------------------------------------------------------------------------
# Wrapper-side weight repacking (batch independent).
# --------------------------------------------------------------------------
def _conv_dense(w, hin, win):
    """Torch (Cout,Cin,2,2) conv weight -> dense (hin*win*Cin, ho*wo*Cout) operator.

    Flattening convention for an (H, W, C) activation: index = (i*W + j)*C + c.
    """
    cout, cin = int(w.shape[0]), int(w.shape[1])
    ho, wo = hin - 1, win - 1
    rows, cols, oi, ci, dii, dji = [], [], [], [], [], []
    for i in range(ho):
        for j in range(wo):
            for di in range(2):
                for dj in range(2):
                    for c in range(cin):
                        for o in range(cout):
                            rows.append(((i + di) * win + (j + dj)) * cin + c)
                            cols.append((i * wo + j) * cout + o)
                            oi.append(o); ci.append(c); dii.append(di); dji.append(dj)
    vals = w[np.array(oi), np.array(ci), np.array(dii), np.array(dji)]
    mat = jnp.zeros((hin * win * cin, ho * wo * cout), jnp.float32)
    return mat.at[np.array(rows), np.array(cols)].set(vals.astype(jnp.float32))


def _pool_select(h, w, c):
    """0/1 selection matrices (4, h*w*c, (h//2)*(w//2)*c) for 2x2 stride-2 max pool."""
    hp, wp = h // 2, w // 2
    mats = np.zeros((4, h * w * c, hp * wp * c), np.float32)
    for k, (di, dj) in enumerate(((0, 0), (0, 1), (1, 0), (1, 1))):
        for i in range(hp):
            for j in range(wp):
                for ch in range(c):
                    mats[k, ((2 * i + di) * w + (2 * j + dj)) * c + ch,
                         (i * wp + j) * c + ch] = 1.0
    return jnp.asarray(mats)


def _pad_to(x, rows=None, cols=None):
    pr = 0 if rows is None else rows - x.shape[0]
    pc = 0 if cols is None else cols - x.shape[1]
    return jnp.pad(x, ((0, pr), (0, pc)))


def wifi_img_psk_net_forward(x_nchw, params):
    n, _, hin, win = x_nchw.shape
    n_label = params["fc3_b"].shape[0]
    assert hin == 16 and win == 16, "removeNull=True variant expects 16x16 input"

    # Conv layers as dense operators + spatially-tiled biases, pool selectors.
    w1 = _conv_dense(params["conv1_w"], 16, 16)                       # (256, 450)
    b1 = jnp.tile(params["conv1_b"].astype(jnp.float32), 15 * 15).reshape(1, -1)
    p1 = _pool_select(15, 15, 2)                                      # (4, 450, 98)
    w2 = _conv_dense(params["conv2_w"], 7, 7)                         # (98, 144)
    b2 = jnp.tile(params["conv2_b"].astype(jnp.float32), 6 * 6).reshape(1, -1)
    p2 = _pool_select(6, 6, 4)                                        # (4, 144, 36)
    w3 = _conv_dense(params["conv3_w"], 3, 3)                         # (36, 32)
    b3 = jnp.tile(params["conv3_b"].astype(jnp.float32), 2 * 2).reshape(1, -1)
    w4 = _conv_dense(params["conv4_w"], 2, 2)                         # (32, 16)
    b4 = params["conv4_b"].astype(jnp.float32).reshape(1, -1)

    # FC weights: torch (out, in) -> (in, out), zero-padded to lane multiples.
    fw1 = _pad_to(params["fc1_w"].T.astype(jnp.float32), cols=1280)               # (16, 1280)
    fb1 = _pad_to(params["fc1_b"].astype(jnp.float32).reshape(1, -1), cols=1280)
    fw2 = _pad_to(params["fc2_w"].T.astype(jnp.float32), rows=1280, cols=128)     # (1280, 128)
    fb2 = _pad_to(params["fc2_b"].astype(jnp.float32).reshape(1, -1), cols=128)
    fw3 = _pad_to(params["fc3_w"].T.astype(jnp.float32), rows=128, cols=128)      # (128, 128)
    fb3 = _pad_to(params["fc3_b"].astype(jnp.float32).reshape(1, -1), cols=128)

    # Activations: (N, H*W) lane-dense layout; pad batch to the block size.
    x2d = x_nchw.astype(jnp.float32).reshape(n, hin * win)
    bn = min(256, ((n + 7) // 8) * 8)            # rows per grid step (multiple of 8)
    n_pad = ((n + bn - 1) // bn) * bn
    x2d = jnp.pad(x2d, ((0, n_pad - n), (0, 0)))

    weights = [w1, b1, p1, w2, b2, p2, w3, b3, w4, b4,
               fw1, fb1, fw2, fb2, fw3, fb3]

    def const_spec(a):  # whole array, VMEM-resident across the batch grid
        return pl.BlockSpec(a.shape, lambda i, _nd=a.ndim: (0,) * _nd)

    out = pl.pallas_call(
        _forward_kernel,
        out_shape=jax.ShapeDtypeStruct((n_pad, 128), jnp.float32),
        grid=(n_pad // bn,),
        in_specs=[pl.BlockSpec((bn, hin * win), lambda i: (i, 0))]
                 + [const_spec(a) for a in weights],
        out_specs=pl.BlockSpec((bn, 128), lambda i: (i, 0)),
        compiler_params=pltpu.CompilerParams(
            dimension_semantics=("parallel",),
            vmem_limit_bytes=16 * 1024 * 1024),
    )(x2d, *weights)
    return out[:n, :n_label]


# --------------------------------------------------------------------------
# Deterministic init mimicking PyTorch defaults: U(-1/sqrt(fan_in), +1/sqrt(fan_in)).
# --------------------------------------------------------------------------
def init_params(key, n_label):
    specs = {
        "conv1_w": (2, 1, 2, 2), "conv1_b": (2,),
        "conv2_w": (4, 2, 2, 2), "conv2_b": (4,),
        "conv3_w": (8, 4, 2, 2), "conv3_b": (8,),
        "conv4_w": (16, 8, 2, 2), "conv4_b": (16,),
        "fc1_w": (1200, 16), "fc1_b": (1200,),
        "fc2_w": (84, 1200), "fc2_b": (84,),
        "fc3_w": (n_label, 84), "fc3_b": (n_label,),
    }
    fan_in = {"conv1": 4, "conv2": 8, "conv3": 16, "conv4": 32,
              "fc1": 16, "fc2": 1200, "fc3": 84}
    params = {}
    keys = jax.random.split(key, len(specs))
    for (name, shape), k in zip(specs.items(), keys):
        bound = 1.0 / np.sqrt(fan_in[name.split("_")[0]])
        params[name] = jax.random.uniform(k, shape, jnp.float32, -bound, bound)
    return params


# --------------------------------------------------------------------------
# Pure-JAX reference with identical semantics to the PyTorch forward.
# --------------------------------------------------------------------------
def reference_forward(x_nchw, p):
    x = jnp.transpose(x_nchw.astype(jnp.float32), (0, 2, 3, 1))  # NHWC

    def conv(x, w, b):
        w_hwio = jnp.transpose(w, (2, 3, 1, 0))
        y = jax.lax.conv_general_dilated(
            x, w_hwio, window_strides=(1, 1), padding="VALID",
            dimension_numbers=("NHWC", "HWIO", "NHWC"))
        return y + b.reshape(1, 1, 1, -1)

    def pool(x):
        return jax.lax.reduce_window(x, -jnp.inf, jax.lax.max,
                                     (1, 2, 2, 1), (1, 2, 2, 1), "VALID")

    x = pool(jax.nn.relu(conv(x, p["conv1_w"], p["conv1_b"])))
    x = pool(jax.nn.relu(conv(x, p["conv2_w"], p["conv2_b"])))
    x = jax.nn.relu(conv(x, p["conv3_w"], p["conv3_b"]))
    x = jax.nn.relu(conv(x, p["conv4_w"], p["conv4_b"]))
    x = x.reshape(x.shape[0], -1)  # final spatial is 1x1 -> (N, 16), matches torch flatten
    x = jax.nn.relu(x @ p["fc1_w"].T + p["fc1_b"])
    x = jax.nn.relu(x @ p["fc2_w"].T + p["fc2_b"])
    return x @ p["fc3_w"].T + p["fc3_b"]


if __name__ == "__main__":
    N, H, W = 2, 16, 16      # removeNull=True variant -> input_fc = 16
    N_LABEL = 6
    key = jax.random.PRNGKey(0)
    kx, kp = jax.random.split(key)
    x = jax.random.normal(kx, (N, 1, H, W), jnp.float32)  # NCHW, as in PyTorch
    params = init_params(kp, N_LABEL)

    out = jax.block_until_ready(wifi_img_psk_net_forward(x, params))
    ref = jax.block_until_ready(reference_forward(x, params))
    np.testing.assert_allclose(np.asarray(out), np.asarray(ref), rtol=2e-3, atol=2e-3)
    print("KERNEL_OK")
</pallas_src>

<mosaic_0001>
module attributes {stable_mosaic.version = 11 : i64} {
  func.func @_forward_kernel(%arg0: i32, %arg1: memref<8x256xf32, #tpu.memory_space<vmem>>, %arg2: memref<256x450xf32, #tpu.memory_space<vmem>>, %arg3: memref<1x450xf32, #tpu.memory_space<vmem>>, %arg4: memref<4x450x98xf32, #tpu.memory_space<vmem>>, %arg5: memref<98x144xf32, #tpu.memory_space<vmem>>, %arg6: memref<1x144xf32, #tpu.memory_space<vmem>>, %arg7: memref<4x144x36xf32, #tpu.memory_space<vmem>>, %arg8: memref<36x32xf32, #tpu.memory_space<vmem>>, %arg9: memref<1x32xf32, #tpu.memory_space<vmem>>, %arg10: memref<32x16xf32, #tpu.memory_space<vmem>>, %arg11: memref<1x16xf32, #tpu.memory_space<vmem>>, %arg12: memref<16x1280xf32, #tpu.memory_space<vmem>>, %arg13: memref<1x1280xf32, #tpu.memory_space<vmem>>, %arg14: memref<1280x128xf32, #tpu.memory_space<vmem>>, %arg15: memref<1x128xf32, #tpu.memory_space<vmem>>, %arg16: memref<128x128xf32, #tpu.memory_space<vmem>>, %arg17: memref<1x128xf32, #tpu.memory_space<vmem>>, %arg18: memref<8x128xf32, #tpu.memory_space<vmem>>) attributes {dimension_semantics = [#tpu.dimension_semantics<parallel>], iteration_bounds = array<i64: 1>, scalar_prefetch = 0 : i64, scratch_operands = 0 : i64, tpu.core_type = #tpu.core_type<tc>, window_params = [{transform_indices = @transform_0, window_bounds = array<i64: 8, 256>}, {pipeline_mode = #tpu.pipeline_mode<synchronous>, transform_indices = @transform_1, window_bounds = array<i64: 256, 450>}, {pipeline_mode = #tpu.pipeline_mode<synchronous>, transform_indices = @transform_2, window_bounds = array<i64: 1, 450>}, {pipeline_mode = #tpu.pipeline_mode<synchronous>, transform_indices = @transform_3, window_bounds = array<i64: 4, 450, 98>}, {pipeline_mode = #tpu.pipeline_mode<synchronous>, transform_indices = @transform_4, window_bounds = array<i64: 98, 144>}, {pipeline_mode = #tpu.pipeline_mode<synchronous>, transform_indices = @transform_5, window_bounds = array<i64: 1, 144>}, {pipeline_mode = #tpu.pipeline_mode<synchronous>, transform_indices = @transform_6, window_bounds = array<i64: 4, 144, 36>}, {pipeline_mode = #tpu.pipeline_mode<synchronous>, transform_indices = @transform_7, window_bounds = array<i64: 36, 32>}, {pipeline_mode = #tpu.pipeline_mode<synchronous>, transform_indices = @transform_8, window_bounds = array<i64: 1, 32>}, {pipeline_mode = #tpu.pipeline_mode<synchronous>, transform_indices = @transform_9, window_bounds = array<i64: 32, 16>}, {pipeline_mode = #tpu.pipeline_mode<synchronous>, transform_indices = @transform_10, window_bounds = array<i64: 1, 16>}, {pipeline_mode = #tpu.pipeline_mode<synchronous>, transform_indices = @transform_11, window_bounds = array<i64: 16, 1280>}, {pipeline_mode = #tpu.pipeline_mode<synchronous>, transform_indices = @transform_12, window_bounds = array<i64: 1, 1280>}, {pipeline_mode = #tpu.pipeline_mode<synchronous>, transform_indices = @transform_13, window_bounds = array<i64: 1280, 128>}, {pipeline_mode = #tpu.pipeline_mode<synchronous>, transform_indices = @transform_14, window_bounds = array<i64: 1, 128>}, {pipeline_mode = #tpu.pipeline_mode<synchronous>, transform_indices = @transform_15, window_bounds = array<i64: 128, 128>}, {pipeline_mode = #tpu.pipeline_mode<synchronous>, transform_indices = @transform_16, window_bounds = array<i64: 1, 128>}, {transform_indices = @transform_17, window_bounds = array<i64: 8, 128>}]} {
    %c0 = arith.constant 0 : index
    %c0_0 = arith.constant 0 : index
    %0 = vector.load %arg1[%c0, %c0_0] : memref<8x256xf32, #tpu.memory_space<vmem>>, vector<8x256xf32>
    %c0_1 = arith.constant 0 : index
    %c0_2 = arith.constant 0 : index
    %1 = vector.load %arg2[%c0_1, %c0_2] : memref<256x450xf32, #tpu.memory_space<vmem>>, vector<256x450xf32>
    %cst = arith.constant dense<0.000000e+00> : vector<8x450xf32>
    %2 = tpu.matmul %0, %1, %cst {dimension_numbers = #tpu.dot_dimension_numbers<[1], [0], [0], [1], [0, 0, 1, 1], [], []>} : vector<8x256xf32>, vector<256x450xf32>, vector<8x450xf32> -> vector<8x450xf32>
    %c0_3 = arith.constant 0 : index
    %c0_4 = arith.constant 0 : index
    %3 = vector.load %arg3[%c0_3, %c0_4] : memref<1x450xf32, #tpu.memory_space<vmem>>, vector<1x450xf32>
    %4 = vector.broadcast %3 : vector<1x450xf32> to vector<8x450xf32>
    %5 = arith.addf %2, %4 : vector<8x450xf32>
    %cst_5 = arith.constant 0.000000e+00 : f32
    %6 = vector.broadcast %cst_5 : f32 to vector<8x450xf32>
    %7 = arith.maximumf %5, %6 : vector<8x450xf32>
    %c0_6 = arith.constant 0 : index
    %c0_7 = arith.constant 0 : index
    %c0_8 = arith.constant 0 : index
    %8 = vector.load %arg4[%c0_6, %c0_7, %c0_8] : memref<4x450x98xf32, #tpu.memory_space<vmem>>, vector<1x450x98xf32>
    %9 = vector.shape_cast %8 : vector<1x450x98xf32> to vector<450x98xf32>
    %cst_9 = arith.constant dense<0.000000e+00> : vector<8x98xf32>
    %10 = tpu.matmul %7, %9, %cst_9 {dimension_numbers = #tpu.dot_dimension_numbers<[1], [0], [0], [1], [0, 0, 1, 1], [], []>} : vector<8x450xf32>, vector<450x98xf32>, vector<8x98xf32> -> vector<8x98xf32>
    %c1 = arith.constant 1 : index
    %c0_10 = arith.constant 0 : index
    %c0_11 = arith.constant 0 : index
    %11 = vector.load %arg4[%c1, %c0_10, %c0_11] : memref<4x450x98xf32, #tpu.memory_space<vmem>>, vector<1x450x98xf32>
    %12 = vector.shape_cast %11 : vector<1x450x98xf32> to vector<450x98xf32>
    %cst_12 = arith.constant dense<0.000000e+00> : vector<8x98xf32>
    %13 = tpu.matmul %7, %12, %cst_12 {dimension_numbers = #tpu.dot_dimension_numbers<[1], [0], [0], [1], [0, 0, 1, 1], [], []>} : vector<8x450xf32>, vector<450x98xf32>, vector<8x98xf32> -> vector<8x98xf32>
    %14 = arith.maximumf %10, %13 : vector<8x98xf32>
    %c2 = arith.constant 2 : index
    %c0_13 = arith.constant 0 : index
    %c0_14 = arith.constant 0 : index
    %15 = vector.load %arg4[%c2, %c0_13, %c0_14] : memref<4x450x98xf32, #tpu.memory_space<vmem>>, vector<1x450x98xf32>
    %16 = vector.shape_cast %15 : vector<1x450x98xf32> to vector<450x98xf32>
    %cst_15 = arith.constant dense<0.000000e+00> : vector<8x98xf32>
    %17 = tpu.matmul %7, %16, %cst_15 {dimension_numbers = #tpu.dot_dimension_numbers<[1], [0], [0], [1], [0, 0, 1, 1], [], []>} : vector<8x450xf32>, vector<450x98xf32>, vector<8x98xf32> -> vector<8x98xf32>
    %18 = arith.maximumf %14, %17 : vector<8x98xf32>
    %c3 = arith.constant 3 : index
    %c0_16 = arith.constant 0 : index
    %c0_17 = arith.constant 0 : index
    %19 = vector.load %arg4[%c3, %c0_16, %c0_17] : memref<4x450x98xf32, #tpu.memory_space<vmem>>, vector<1x450x98xf32>
    %20 = vector.shape_cast %19 : vector<1x450x98xf32> to vector<450x98xf32>
    %cst_18 = arith.constant dense<0.000000e+00> : vector<8x98xf32>
    %21 = tpu.matmul %7, %20, %cst_18 {dimension_numbers = #tpu.dot_dimension_numbers<[1], [0], [0], [1], [0, 0, 1, 1], [], []>} : vector<8x450xf32>, vector<450x98xf32>, vector<8x98xf32> -> vector<8x98xf32>
    %22 = arith.maximumf %18, %21 : vector<8x98xf32>
    %c0_19 = arith.constant 0 : index
    %c0_20 = arith.constant 0 : index
    %23 = vector.load %arg5[%c0_19, %c0_20] : memref<98x144xf32, #tpu.memory_space<vmem>>, vector<98x144xf32>
    %cst_21 = arith.constant dense<0.000000e+00> : vector<8x144xf32>
    %24 = tpu.matmul %22, %23, %cst_21 {dimension_numbers = #tpu.dot_dimension_numbers<[1], [0], [0], [1], [0, 0, 1, 1], [], []>} : vector<8x98xf32>, vector<98x144xf32>, vector<8x144xf32> -> vector<8x144xf32>
    %c0_22 = arith.constant 0 : index
    %c0_23 = arith.constant 0 : index
    %25 = vector.load %arg6[%c0_22, %c0_23] : memref<1x144xf32, #tpu.memory_space<vmem>>, vector<1x144xf32>
    %26 = vector.broadcast %25 : vector<1x144xf32> to vector<8x144xf32>
    %27 = arith.addf %24, %26 : vector<8x144xf32>
    %cst_24 = arith.constant 0.000000e+00 : f32
    %28 = vector.broadcast %cst_24 : f32 to vector<8x144xf32>
    %29 = arith.maximumf %27, %28 : vector<8x144xf32>
    %c0_25 = arith.constant 0 : index
    %c0_26 = arith.constant 0 : index
    %c0_27 = arith.constant 0 : index
    %30 = vector.load %arg7[%c0_25, %c0_26, %c0_27] : memref<4x144x36xf32, #tpu.memory_space<vmem>>, vector<1x144x36xf32>
    %31 = vector.shape_cast %30 : vector<1x144x36xf32> to vector<144x36xf32>
    %cst_28 = arith.constant dense<0.000000e+00> : vector<8x36xf32>
    %32 = tpu.matmul %29, %31, %cst_28 {dimension_numbers = #tpu.dot_dimension_numbers<[1], [0], [0], [1], [0, 0, 1, 1], [], []>} : vector<8x144xf32>, vector<144x36xf32>, vector<8x36xf32> -> vector<8x36xf32>
    %c1_29 = arith.constant 1 : index
    %c0_30 = arith.constant 0 : index
    %c0_31 = arith.constant 0 : index
    %33 = vector.load %arg7[%c1_29, %c0_30, %c0_31] : memref<4x144x36xf32, #tpu.memory_space<vmem>>, vector<1x144x36xf32>
    %34 = vector.shape_cast %33 : vector<1x144x36xf32> to vector<144x36xf32>
    %cst_32 = arith.constant dense<0.000000e+00> : vector<8x36xf32>
    %35 = tpu.matmul %29, %34, %cst_32 {dimension_numbers = #tpu.dot_dimension_numbers<[1], [0], [0], [1], [0, 0, 1, 1], [], []>} : vector<8x144xf32>, vector<144x36xf32>, vector<8x36xf32> -> vector<8x36xf32>
    %36 = arith.maximumf %32, %35 : vector<8x36xf32>
    %c2_33 = arith.constant 2 : index
    %c0_34 = arith.constant 0 : index
    %c0_35 = arith.constant 0 : index
    %37 = vector.load %arg7[%c2_33, %c0_34, %c0_35] : memref<4x144x36xf32, #tpu.memory_space<vmem>>, vector<1x144x36xf32>
    %38 = vector.shape_cast %37 : vector<1x144x36xf32> to vector<144x36xf32>
    %cst_36 = arith.constant dense<0.000000e+00> : vector<8x36xf32>
    %39 = tpu.matmul %29, %38, %cst_36 {dimension_numbers = #tpu.dot_dimension_numbers<[1], [0], [0], [1], [0, 0, 1, 1], [], []>} : vector<8x144xf32>, vector<144x36xf32>, vector<8x36xf32> -> vector<8x36xf32>
    %40 = arith.maximumf %36, %39 : vector<8x36xf32>
    %c3_37 = arith.constant 3 : index
    %c0_38 = arith.constant 0 : index
    %c0_39 = arith.constant 0 : index
    %41 = vector.load %arg7[%c3_37, %c0_38, %c0_39] : memref<4x144x36xf32, #tpu.memory_space<vmem>>, vector<1x144x36xf32>
    %42 = vector.shape_cast %41 : vector<1x144x36xf32> to vector<144x36xf32>
    %cst_40 = arith.constant dense<0.000000e+00> : vector<8x36xf32>
    %43 = tpu.matmul %29, %42, %cst_40 {dimension_numbers = #tpu.dot_dimension_numbers<[1], [0], [0], [1], [0, 0, 1, 1], [], []>} : vector<8x144xf32>, vector<144x36xf32>, vector<8x36xf32> -> vector<8x36xf32>
    %44 = arith.maximumf %40, %43 : vector<8x36xf32>
    %c0_41 = arith.constant 0 : index
    %c0_42 = arith.constant 0 : index
    %45 = vector.load %arg8[%c0_41, %c0_42] : memref<36x32xf32, #tpu.memory_space<vmem>>, vector<36x32xf32>
    %cst_43 = arith.constant dense<0.000000e+00> : vector<8x32xf32>
    %46 = tpu.matmul %44, %45, %cst_43 {dimension_numbers = #tpu.dot_dimension_numbers<[1], [0], [0], [1], [0, 0, 1, 1], [], []>} : vector<8x36xf32>, vector<36x32xf32>, vector<8x32xf32> -> vector<8x32xf32>
    %c0_44 = arith.constant 0 : index
    %c0_45 = arith.constant 0 : index
    %47 = vector.load %arg9[%c0_44, %c0_45] : memref<1x32xf32, #tpu.memory_space<vmem>>, vector<1x32xf32>
    %48 = vector.broadcast %47 : vector<1x32xf32> to vector<8x32xf32>
    %49 = arith.addf %46, %48 : vector<8x32xf32>
    %cst_46 = arith.constant 0.000000e+00 : f32
    %50 = vector.broadcast %cst_46 : f32 to vector<8x32xf32>
    %51 = arith.maximumf %49, %50 : vector<8x32xf32>
    %c0_47 = arith.constant 0 : index
    %c0_48 = arith.constant 0 : index
    %52 = vector.load %arg10[%c0_47, %c0_48] : memref<32x16xf32, #tpu.memory_space<vmem>>, vector<32x16xf32>
    %cst_49 = arith.constant dense<0.000000e+00> : vector<8x16xf32>
    %53 = tpu.matmul %51, %52, %cst_49 {dimension_numbers = #tpu.dot_dimension_numbers<[1], [0], [0], [1], [0, 0, 1, 1], [], []>} : vector<8x32xf32>, vector<32x16xf32>, vector<8x16xf32> -> vector<8x16xf32>
    %c0_50 = arith.constant 0 : index
    %c0_51 = arith.constant 0 : index
    %54 = vector.load %arg11[%c0_50, %c0_51] : memref<1x16xf32, #tpu.memory_space<vmem>>, vector<1x16xf32>
    %55 = vector.broadcast %54 : vector<1x16xf32> to vector<8x16xf32>
    %56 = arith.addf %53, %55 : vector<8x16xf32>
    %cst_52 = arith.constant 0.000000e+00 : f32
    %57 = vector.broadcast %cst_52 : f32 to vector<8x16xf32>
    %58 = arith.maximumf %56, %57 : vector<8x16xf32>
    %c0_53 = arith.constant 0 : index
    %c0_54 = arith.constant 0 : index
    %59 = vector.load %arg12[%c0_53, %c0_54] : memref<16x1280xf32, #tpu.memory_space<vmem>>, vector<16x1280xf32>
    %cst_55 = arith.constant dense<0.000000e+00> : vector<8x1280xf32>
    %60 = tpu.matmul %58, %59, %cst_55 {dimension_numbers = #tpu.dot_dimension_numbers<[1], [0], [0], [1], [0, 0, 1, 1], [], []>} : vector<8x16xf32>, vector<16x1280xf32>, vector<8x1280xf32> -> vector<8x1280xf32>
    %c0_56 = arith.constant 0 : index
    %c0_57 = arith.constant 0 : index
    %61 = vector.load %arg13[%c0_56, %c0_57] : memref<1x1280xf32, #tpu.memory_space<vmem>>, vector<1x1280xf32>
    %62 = vector.broadcast %61 : vector<1x1280xf32> to vector<8x1280xf32>
    %63 = arith.addf %60, %62 : vector<8x1280xf32>
    %cst_58 = arith.constant 0.000000e+00 : f32
    %64 = vector.broadcast %cst_58 : f32 to vector<8x1280xf32>
    %65 = arith.maximumf %63, %64 : vector<8x1280xf32>
    %c0_59 = arith.constant 0 : index
    %c0_60 = arith.constant 0 : index
    %66 = vector.load %arg14[%c0_59, %c0_60] : memref<1280x128xf32, #tpu.memory_space<vmem>>, vector<1280x128xf32>
    %cst_61 = arith.constant dense<0.000000e+00> : vector<8x128xf32>
    %67 = tpu.matmul %65, %66, %cst_61 {dimension_numbers = #tpu.dot_dimension_numbers<[1], [0], [0], [1], [0, 0, 1, 1], [], []>} : vector<8x1280xf32>, vector<1280x128xf32>, vector<8x128xf32> -> vector<8x128xf32>
    %c0_62 = arith.constant 0 : index
    %c0_63 = arith.constant 0 : index
    %68 = vector.load %arg15[%c0_62, %c0_63] : memref<1x128xf32, #tpu.memory_space<vmem>>, vector<1x128xf32>
    %69 = vector.broadcast %68 : vector<1x128xf32> to vector<8x128xf32>
    %70 = arith.addf %67, %69 : vector<8x128xf32>
    %cst_64 = arith.constant 0.000000e+00 : f32
    %71 = vector.broadcast %cst_64 : f32 to vector<8x128xf32>
    %72 = arith.maximumf %70, %71 : vector<8x128xf32>
    %c0_65 = arith.constant 0 : index
    %c0_66 = arith.constant 0 : index
    %73 = vector.load %arg16[%c0_65, %c0_66] : memref<128x128xf32, #tpu.memory_space<vmem>>, vector<128x128xf32>
    %cst_67 = arith.constant dense<0.000000e+00> : vector<8x128xf32>
    %74 = tpu.matmul %72, %73, %cst_67 {dimension_numbers = #tpu.dot_dimension_numbers<[1], [0], [0], [1], [0, 0, 1, 1], [], []>} : vector<8x128xf32>, vector<128x128xf32>, vector<8x128xf32> -> vector<8x128xf32>
    %c0_68 = arith.constant 0 : index
    %c0_69 = arith.constant 0 : index
    %75 = vector.load %arg17[%c0_68, %c0_69] : memref<1x128xf32, #tpu.memory_space<vmem>>, vector<1x128xf32>
    %76 = vector.broadcast %75 : vector<1x128xf32> to vector<8x128xf32>
    %77 = arith.addf %74, %76 : vector<8x128xf32>
    %c0_70 = arith.constant 0 : index
    %c0_71 = arith.constant 0 : index
    %78 = vector.load %arg18[%c0_70, %c0_71] : memref<8x128xf32, #tpu.memory_space<vmem>>, vector<8x128xf32>
    tpu.vector_store %arg18[%c0_70, %c0_71], %77 {strides = array<i32>} : memref<8x128xf32, #tpu.memory_space<vmem>>, vector<8x128xf32>,
    return
  }
  func.func @transform_0(%arg0: i32) -> (i32, i32) {
    %c0_i32 = arith.constant 0 : i32
    %c0_i32_0 = arith.constant 0 : i32
    return %arg0, %c0_i32 : i32, i32
  }
  func.func @transform_1(%arg0: i32) -> (i32, i32) {
    %c0_i32 = arith.constant 0 : i32
    %c0_i32_0 = arith.constant 0 : i32
    %c0_i32_1 = arith.constant 0 : i32
    return %c0_i32, %c0_i32_0 : i32, i32
  }
  func.func @transform_2(%arg0: i32) -> (i32, i32) {
    %c0_i32 = arith.constant 0 : i32
    %c0_i32_0 = arith.constant 0 : i32
    %c0_i32_1 = arith.constant 0 : i32
    return %c0_i32, %c0_i32_0 : i32, i32
  }
  func.func @transform_3(%arg0: i32) -> (i32, i32, i32) {
    %c0_i32 = arith.constant 0 : i32
    %c0_i32_0 = arith.constant 0 : i32
    %c0_i32_1 = arith.constant 0 : i32
    %c0_i32_2 = arith.constant 0 : i32
    return %c0_i32, %c0_i32_0, %c0_i32_1 : i32, i32, i32
  }
  func.func @transform_4(%arg0: i32) -> (i32, i32) {
    %c0_i32 = arith.constant 0 : i32
    %c0_i32_0 = arith.constant 0 : i32
    %c0_i32_1 = arith.constant 0 : i32
    return %c0_i32, %c0_i32_0 : i32, i32
  }
  func.func @transform_5(%arg0: i32) -> (i32, i32) {
    %c0_i32 = arith.constant 0 : i32
    %c0_i32_0 = arith.constant 0 : i32
    %c0_i32_1 = arith.constant 0 : i32
    return %c0_i32, %c0_i32_0 : i32, i32
  }
  func.func @transform_6(%arg0: i32) -> (i32, i32, i32) {
    %c0_i32 = arith.constant 0 : i32
    %c0_i32_0 = arith.constant 0 : i32
    %c0_i32_1 = arith.constant 0 : i32
    %c0_i32_2 = arith.constant 0 : i32
    return %c0_i32, %c0_i32_0, %c0_i32_1 : i32, i32, i32
  }
  func.func @transform_7(%arg0: i32) -> (i32, i32) {
    %c0_i32 = arith.constant 0 : i32
    %c0_i32_0 = arith.constant 0 : i32
    %c0_i32_1 = arith.constant 0 : i32
    return %c0_i32, %c0_i32_0 : i32, i32
  }
  func.func @transform_8(%arg0: i32) -> (i32, i32) {
    %c0_i32 = arith.constant 0 : i32
    %c0_i32_0 = arith.constant 0 : i32
    %c0_i32_1 = arith.constant 0 : i32
    return %c0_i32, %c0_i32_0 : i32, i32
  }
  func.func @transform_9(%arg0: i32) -> (i32, i32) {
    %c0_i32 = arith.constant 0 : i32
    %c0_i32_0 = arith.constant 0 : i32
    %c0_i32_1 = arith.constant 0 : i32
    return %c0_i32, %c0_i32_0 : i32, i32
  }
  func.func @transform_10(%arg0: i32) -> (i32, i32) {
    %c0_i32 = arith.constant 0 : i32
    %c0_i32_0 = arith.constant 0 : i32
    %c0_i32_1 = arith.constant 0 : i32
    return %c0_i32, %c0_i32_0 : i32, i32
  }
  func.func @transform_11(%arg0: i32) -> (i32, i32) {
    %c0_i32 = arith.constant 0 : i32
    %c0_i32_0 = arith.constant 0 : i32
    %c0_i32_1 = arith.constant 0 : i32
    return %c0_i32, %c0_i32_0 : i32, i32
  }
  func.func @transform_12(%arg0: i32) -> (i32, i32) {
    %c0_i32 = arith.constant 0 : i32
    %c0_i32_0 = arith.constant 0 : i32
    %c0_i32_1 = arith.constant 0 : i32
    return %c0_i32, %c0_i32_0 : i32, i32
  }
  func.func @transform_13(%arg0: i32) -> (i32, i32) {
    %c0_i32 = arith.constant 0 : i32
    %c0_i32_0 = arith.constant 0 : i32
    %c0_i32_1 = arith.constant 0 : i32
    return %c0_i32, %c0_i32_0 : i32, i32
  }
  func.func @transform_14(%arg0: i32) -> (i32, i32) {
    %c0_i32 = arith.constant 0 : i32
    %c0_i32_0 = arith.constant 0 : i32
    %c0_i32_1 = arith.constant 0 : i32
    return %c0_i32, %c0_i32_0 : i32, i32
  }
  func.func @transform_15(%arg0: i32) -> (i32, i32) {
    %c0_i32 = arith.constant 0 : i32
    %c0_i32_0 = arith.constant 0 : i32
    %c0_i32_1 = arith.constant 0 : i32
    return %c0_i32, %c0_i32_0 : i32, i32
  }
  func.func @transform_16(%arg0: i32) -> (i32, i32) {
    %c0_i32 = arith.constant 0 : i32
    %c0_i32_0 = arith.constant 0 : i32
    %c0_i32_1 = arith.constant 0 : i32
    return %c0_i32, %c0_i32_0 : i32, i32
  }
  func.func @transform_17(%arg0: i32) -> (i32, i32) {
    %c0_i32 = arith.constant 0 : i32
    %c0_i32_0 = arith.constant 0 : i32
    return %arg0, %c0_i32 : i32, i32
  }
}

</mosaic_0001>

<llo_original>
// kernel: tpu_custom_call.1
$region0: #{tpu_custom_call.1}
  #allocation0 [shape = 'u32[]', space=smem, size = 0x4, offset = 0x4, fixed_abs, tag = 'smem constant byte address 0x4 - core index']
  #allocation1 [shape = 'u32[144,128]{1,0:T(1,128)}', space=vmem, size = 0x12000, scoped, tag = 'internal scratch']
  %s0 = inlined_call_operand.vmem [shape: f32[8,256], index: 0, kind: input, shape index: {}]
  %s1 = inlined_call_operand.vmem [shape: f32[256,450], index: 1, kind: input, shape index: {}]
  %s2 = inlined_call_operand.vmem [shape: f32[1,450], index: 2, kind: input, shape index: {}]
  %s3 = inlined_call_operand.vmem [shape: f32[4,450,98], index: 3, kind: input, shape index: {}]
  %s4 = inlined_call_operand.vmem [shape: f32[98,144], index: 4, kind: input, shape index: {}]
  %s5 = inlined_call_operand.vmem [shape: f32[1,144], index: 5, kind: input, shape index: {}]
  %s6 = inlined_call_operand.vmem [shape: f32[4,144,36], index: 6, kind: input, shape index: {}]
  %s7 = inlined_call_operand.vmem [shape: f32[36,32], index: 7, kind: input, shape index: {}]
  %s8 = inlined_call_operand.vmem [shape: f32[1,32], index: 8, kind: input, shape index: {}]
  %s9 = inlined_call_operand.vmem [shape: f32[32,16], index: 9, kind: input, shape index: {}]
  %s10 = inlined_call_operand.vmem [shape: f32[1,16], index: 10, kind: input, shape index: {}]
  %s11 = inlined_call_operand.vmem [shape: f32[16,1280], index: 11, kind: input, shape index: {}]
  %s12 = inlined_call_operand.vmem [shape: f32[1,1280], index: 12, kind: input, shape index: {}]
  %s13 = inlined_call_operand.vmem [shape: f32[1280,128], index: 13, kind: input, shape index: {}]
  %s14 = inlined_call_operand.vmem [shape: f32[1,128], index: 14, kind: input, shape index: {}]
  %s15 = inlined_call_operand.vmem [shape: f32[128,128], index: 15, kind: input, shape index: {}]
  %s16 = inlined_call_operand.vmem [shape: f32[1,128], index: 16, kind: input, shape index: {}]
  %s17 = inlined_call_operand.hbm [shape: f32[8,128], index: 17, kind: output, shape index: {}]
  %s18 = sld [smem:[#allocation0]]
  $region78: #{tpu_custom_call.1} parent=0
    _
  %s20 = ssub.s32 1, %s18
  %s21 = scalar_select 0, %s20, %s18
  $region1: #{tpu_custom_call.1} parent=0
    #allocation2 [shape = 'u8[4096]{0}', space=vmem, size = 0x1000, scoped, tag = 'output window, operand 0, single buffered']
    #allocation3 [shape = 's32[1]{0}', space=sflag, size = 0x4, scoped, tag = 'scoped memory for tpu_custom_call.1']
    %22 = vsyncpa [#allocation3], 0
    // Predicated region
    $region2: #{tpu_custom_call.1} parent=1 // pred_check
      _
    $region3: #{tpu_custom_call.1} parent=1 // pred_check_branch
      %24 = sbr.rel (0) target = $region5
    $region4: #{tpu_custom_call.1} parent=1 // pred_region
      _
    $region5: #{tpu_custom_call.1} parent=1 // pred_fallthru
      _
    // Predicated region
    $region6: #{tpu_custom_call.1} parent=1 // pred_check
      _
    $region7: #{tpu_custom_call.1} parent=1 // pred_check_branch
      %26 = sbr.rel (0) target = $region9
    $region8: #{tpu_custom_call.1} parent=1 // pred_region
      _
    $region9: #{tpu_custom_call.1} parent=1 // pred_fallthru
      _
    // Predicated region
    $region10: #{tpu_custom_call.1} parent=1 // pred_check
      _
    $region11: #{tpu_custom_call.1} parent=1 // pred_check_branch
      %28 = sbr.rel (0) target = $region13
    $region12: #{tpu_custom_call.1} parent=1 // pred_region
      _
    $region13: #{tpu_custom_call.1} parent=1 // pred_fallthru
      _
    // Predicated region
    $region14: #{tpu_custom_call.1} parent=1 // pred_check
      _
    $region15: #{tpu_custom_call.1} parent=1 // pred_check_branch
      %30 = sbr.rel (0) target = $region17
    $region16: #{tpu_custom_call.1} parent=1 // pred_region
      _
    $region17: #{tpu_custom_call.1} parent=1 // pred_fallthru
      _
    // Predicated region
    $region18: #{tpu_custom_call.1} parent=1 // pred_check
      _
    $region19: #{tpu_custom_call.1} parent=1 // pred_check_branch
      %32 = sbr.rel (0) target = $region21
    $region20: #{tpu_custom_call.1} parent=1 // pred_region
      _
    $region21: #{tpu_custom_call.1} parent=1 // pred_fallthru
      _
    // Predicated region
    $region22: #{tpu_custom_call.1} parent=1 // pred_check
      _
    $region23: #{tpu_custom_call.1} parent=1 // pred_check_branch
      %34 = sbr.rel (0) target = $region25
    $region24: #{tpu_custom_call.1} parent=1 // pred_region
      _
    $region25: #{tpu_custom_call.1} parent=1 // pred_fallthru
      _
    // Predicated region
    $region26: #{tpu_custom_call.1} parent=1 // pred_check
      _
    $region27: #{tpu_custom_call.1} parent=1 // pred_check_branch
      %36 = sbr.rel (0) target = $region29
    $region28: #{tpu_custom_call.1} parent=1 // pred_region
      _
    $region29: #{tpu_custom_call.1} parent=1 // pred_fallthru
      _
    // Predicated region
    $region30: #{tpu_custom_call.1} parent=1 // pred_check
      _
    $region31: #{tpu_custom_call.1} parent=1 // pred_check_branch
      %38 = sbr.rel (0) target = $region33
    $region32: #{tpu_custom_call.1} parent=1 // pred_region
      _
    $region33: #{tpu_custom_call.1} parent=1 // pred_fallthru
      _
    // Predicated region
    $region34: #{tpu_custom_call.1} parent=1 // pred_check
      _
    $region35: #{tpu_custom_call.1} parent=1 // pred_check_branch
      %40 = sbr.rel (0) target = $region37
    $region36: #{tpu_custom_call.1} parent=1 // pred_region
      _
    $region37: #{tpu_custom_call.1} parent=1 // pred_fallthru
      _
    // Predicated region
    $region38: #{tpu_custom_call.1} parent=1 // pred_check
      _
    $region39: #{tpu_custom_call.1} parent=1 // pred_check_branch
      %42 = sbr.rel (0) target = $region41
    $region40: #{tpu_custom_call.1} parent=1 // pred_region
      _
    $region41: #{tpu_custom_call.1} parent=1 // pred_fallthru
      _
    // Predicated region
    $region42: #{tpu_custom_call.1} parent=1 // pred_check
      _
    $region43: #{tpu_custom_call.1} parent=1 // pred_check_branch
      %44 = sbr.rel (0) target = $region45
    $region44: #{tpu_custom_call.1} parent=1 // pred_region
      _
    $region45: #{tpu_custom_call.1} parent=1 // pred_fallthru
      _
    // Predicated region
    $region46: #{tpu_custom_call.1} parent=1 // pred_check
      _
    $region47: #{tpu_custom_call.1} parent=1 // pred_check_branch
      %46 = sbr.rel (0) target = $region49
    $region48: #{tpu_custom_call.1} parent=1 // pred_region
      _
    $region49: #{tpu_custom_call.1} parent=1 // pred_fallthru
      _
    // Predicated region
    $region50: #{tpu_custom_call.1} parent=1 // pred_check
      _
    $region51: #{tpu_custom_call.1} parent=1 // pred_check_branch
      %48 = sbr.rel (0) target = $region53
    $region52: #{tpu_custom_call.1} parent=1 // pred_region
      _
    $region53: #{tpu_custom_call.1} parent=1 // pred_fallthru
      _
    // Predicated region
    $region54: #{tpu_custom_call.1} parent=1 // pred_check
      _
    $region55: #{tpu_custom_call.1} parent=1 // pred_check_branch
      %50 = sbr.rel (0) target = $region57
    $region56: #{tpu_custom_call.1} parent=1 // pred_region
      _
    $region57: #{tpu_custom_call.1} parent=1 // pred_fallthru
      _
    // Predicated region
    $region58: #{tpu_custom_call.1} parent=1 // pred_check
      _
    $region59: #{tpu_custom_call.1} parent=1 // pred_check_branch
      %52 = sbr.rel (0) target = $region61
    $region60: #{tpu_custom_call.1} parent=1 // pred_region
      _
    $region61: #{tpu_custom_call.1} parent=1 // pred_fallthru
      _
    // Predicated region
    $region62: #{tpu_custom_call.1} parent=1 // pred_check
      _
    $region63: #{tpu_custom_call.1} parent=1 // pred_check_branch
      %54 = sbr.rel (0) target = $region65
    $region64: #{tpu_custom_call.1} parent=1 // pred_region
      _
    $region65: #{tpu_custom_call.1} parent=1 // pred_fallthru
      _
    // Predicated region
    $region66: #{tpu_custom_call.1} parent=1 // pred_check
      _
    $region67: #{tpu_custom_call.1} parent=1 // pred_check_branch
      %56 = sbr.rel (0) target = $region69
    $region68: #{tpu_custom_call.1} parent=1 // pred_region
      _
    $region69: #{tpu_custom_call.1} parent=1 // pred_fallthru
      _
    %v57 = vld [vmem:[%s0] sm:$0xff]
    %v58 = vld [vmem:[%s0 + $0x8] sm:$0xff]
    %v59 = vld [vmem:[%s1] sm:$0xff]
    %v60 = vld [vmem:[%s1 + $0x8] sm:$0xff]
    %v61 = vld [vmem:[%s1 + $0x10] sm:$0xff]
    %v62 = vld [vmem:[%s1 + $0x18] sm:$0xff]
    %v63 = vld [vmem:[%s1 + $0x20] sm:$0xff]
    %v64 = vld [vmem:[%s1 + $0x28] sm:$0xff]
    %v65 = vld [vmem:[%s1 + $0x30] sm:$0xff]
    %v66 = vld [vmem:[%s1 + $0x38] sm:$0xff]
    %v67 = vld [vmem:[%s1 + $0x40] sm:$0xff]
    %v68 = vld [vmem:[%s1 + $0x48] sm:$0xff]
    %v69 = vld [vmem:[%s1 + $0x50] sm:$0xff]
    %v70 = vld [vmem:[%s1 + $0x58] sm:$0xff]
    %v71 = vld [vmem:[%s1 + $0x60] sm:$0xff]
    %v72 = vld [vmem:[%s1 + $0x68] sm:$0xff]
    %v73 = vld [vmem:[%s1 + $0x70] sm:$0xff]
    %v74 = vld [vmem:[%s1 + $0x78] sm:$0xff]
    %v75 = vld [vmem:[%s1 + $0x80] sm:$0xff]
    %v76 = vld [vmem:[%s1 + $0x88] sm:$0xff]
    %v77 = vld [vmem:[%s1 + $0x90] sm:$0xff]
    %v78 = vld [vmem:[%s1 + $0x98] sm:$0xff]
    %v79 = vld [vmem:[%s1 + $0xa0] sm:$0xff]
    %v80 = vld [vmem:[%s1 + $0xa8] sm:$0xff]
    %v81 = vld [vmem:[%s1 + $0xb0] sm:$0xff]
    %v82 = vld [vmem:[%s1 + $0xb8] sm:$0xff]
    %v83 = vld [vmem:[%s1 + $0xc0] sm:$0xff]
    %v84 = vld [vmem:[%s1 + $0xc8] sm:$0xff]
    %v85 = vld [vmem:[%s1 + $0xd0] sm:$0xff]
    %v86 = vld [vmem:[%s1 + $0xd8] sm:$0xff]
    %v87 = vld [vmem:[%s1 + $0xe0] sm:$0xff]
    %v88 = vld [vmem:[%s1 + $0xe8] sm:$0xff]
    %v89 = vld [vmem:[%s1 + $0xf0] sm:$0xff]
    %v90 = vld [vmem:[%s1 + $0xf8] sm:$0xff]
    %v91 = vld [vmem:[%s1 + $0x100] sm:$0xff]
    %v92 = vld [vmem:[%s1 + $0x108] sm:$0xff]
    %v93 = vld [vmem:[%s1 + $0x110] sm:$0xff]
    %v94 = vld [vmem:[%s1 + $0x118] sm:$0xff]
    %v95 = vld [vmem:[%s1 + $0x120] sm:$0xff]
    %v96 = vld [vmem:[%s1 + $0x128] sm:$0xff]
    %v97 = vld [vmem:[%s1 + $0x130] sm:$0xff]
    %v98 = vld [vmem:[%s1 + $0x138] sm:$0xff]
    %v99 = vld [vmem:[%s1 + $0x140] sm:$0xff]
    %v100 = vld [vmem:[%s1 + $0x148] sm:$0xff]
    %v101 = vld [vmem:[%s1 + $0x150] sm:$0xff]
    %v102 = vld [vmem:[%s1 + $0x158] sm:$0xff]
    %v103 = vld [vmem:[%s1 + $0x160] sm:$0xff]
    %v104 = vld [vmem:[%s1 + $0x168] sm:$0xff]
    %v105 = vld [vmem:[%s1 + $0x170] sm:$0xff]
    %v106 = vld [vmem:[%s1 + $0x178] sm:$0xff]
    %v107 = vld [vmem:[%s1 + $0x180] sm:$0xff]
    %v108 = vld [vmem:[%s1 + $0x188] sm:$0xff]
    %v109 = vld [vmem:[%s1 + $0x190] sm:$0xff]
    %v110 = vld [vmem:[%s1 + $0x198] sm:$0xff]
    %v111 = vld [vmem:[%s1 + $0x1a0] sm:$0xff]
    %v112 = vld [vmem:[%s1 + $0x1a8] sm:$0xff]
    %v113 = vld [vmem:[%s1 + $0x1b0] sm:$0xff]
    %v114 = vld [vmem:[%s1 + $0x1b8] sm:$0xff]
    %v115 = vld [vmem:[%s1 + $0x1c0] sm:$0xff]
    %v116 = vld [vmem:[%s1 + $0x1c8] sm:$0xff]
    %v117 = vld [vmem:[%s1 + $0x1d0] sm:$0xff]
    %v118 = vld [vmem:[%s1 + $0x1d8] sm:$0xff]
    %v119 = vld [vmem:[%s1 + $0x1e0] sm:$0xff]
    %v120 = vld [vmem:[%s1 + $0x1e8] sm:$0xff]
    %v121 = vld [vmem:[%s1 + $0x1f0] sm:$0xff]
    %v122 = vld [vmem:[%s1 + $0x1f8] sm:$0xff]
    %v123 = vld [vmem:[%s1 + $0x200] sm:$0xff]
    %v124 = vld [vmem:[%s1 + $0x208] sm:$0xff]
    %v125 = vld [vmem:[%s1 + $0x210] sm:$0xff]
    %v126 = vld [vmem:[%s1 + $0x218] sm:$0xff]
    %v127 = vld [vmem:[%s1 + $0x220] sm:$0xff]
    %v128 = vld [vmem:[%s1 + $0x228] sm:$0xff]
    %v129 = vld [vmem:[%s1 + $0x230] sm:$0xff]
    %v130 = vld [vmem:[%s1 + $0x238] sm:$0xff]
    %v131 = vld [vmem:[%s1 + $0x240] sm:$0xff]
    %v132 = vld [vmem:[%s1 + $0x248] sm:$0xff]
    %v133 = vld [vmem:[%s1 + $0x250] sm:$0xff]
    %v134 = vld [vmem:[%s1 + $0x258] sm:$0xff]
    %v135 = vld [vmem:[%s1 + $0x260] sm:$0xff]
    %v136 = vld [vmem:[%s1 + $0x268] sm:$0xff]
    %v137 = vld [vmem:[%s1 + $0x270] sm:$0xff]
    %v138 = vld [vmem:[%s1 + $0x278] sm:$0xff]
    %v139 = vld [vmem:[%s1 + $0x280] sm:$0xff]
    %v140 = vld [vmem:[%s1 + $0x288] sm:$0xff]
    %v141 = vld [vmem:[%s1 + $0x290] sm:$0xff]
    %v142 = vld [vmem:[%s1 + $0x298] sm:$0xff]
    %v143 = vld [vmem:[%s1 + $0x2a0] sm:$0xff]
    %v144 = vld [vmem:[%s1 + $0x2a8] sm:$0xff]
    %v145 = vld [vmem:[%s1 + $0x2b0] sm:$0xff]
    %v146 = vld [vmem:[%s1 + $0x2b8] sm:$0xff]
    %v147 = vld [vmem:[%s1 + $0x2c0] sm:$0xff]
    %v148 = vld [vmem:[%s1 + $0x2c8] sm:$0xff]
    %v149 = vld [vmem:[%s1 + $0x2d0] sm:$0xff]
    %v150 = vld [vmem:[%s1 + $0x2d8] sm:$0xff]
    %v151 = vld [vmem:[%s1 + $0x2e0] sm:$0xff]
    %v152 = vld [vmem:[%s1 + $0x2e8] sm:$0xff]
    %v153 = vld [vmem:[%s1 + $0x2f0] sm:$0xff]
    %v154 = vld [vmem:[%s1 + $0x2f8] sm:$0xff]
    %v155 = vld [vmem:[%s1 + $0x300] sm:$0xff]
    %v156 = vld [vmem:[%s1 + $0x308] sm:$0xff]
    %v157 = vld [vmem:[%s1 + $0x310] sm:$0xff]
    %v158 = vld [vmem:[%s1 + $0x318] sm:$0xff]
    %v159 = vld [vmem:[%s1 + $0x320] sm:$0xff]
    %v160 = vld [vmem:[%s1 + $0x328] sm:$0xff]
    %v161 = vld [vmem:[%s1 + $0x330] sm:$0xff]
    %v162 = vld [vmem:[%s1 + $0x338] sm:$0xff]
    %v163 = vld [vmem:[%s1 + $0x340] sm:$0xff]
    %v164 = vld [vmem:[%s1 + $0x348] sm:$0xff]
    %v165 = vld [vmem:[%s1 + $0x350] sm:$0xff]
    %v166 = vld [vmem:[%s1 + $0x358] sm:$0xff]
    %v167 = vld [vmem:[%s1 + $0x360] sm:$0xff]
    %v168 = vld [vmem:[%s1 + $0x368] sm:$0xff]
    %v169 = vld [vmem:[%s1 + $0x370] sm:$0xff]
    %v170 = vld [vmem:[%s1 + $0x378] sm:$0xff]
    %v171 = vld [vmem:[%s1 + $0x380] sm:$0xff]
    %v172 = vld [vmem:[%s1 + $0x388] sm:$0xff]
    %v173 = vld [vmem:[%s1 + $0x390] sm:$0xff]
    %v174 = vld [vmem:[%s1 + $0x398] sm:$0xff]
    %v175 = vld [vmem:[%s1 + $0x3a0] sm:$0xff]
    %v176 = vld [vmem:[%s1 + $0x3a8] sm:$0xff]
    %v177 = vld [vmem:[%s1 + $0x3b0] sm:$0xff]
    %v178 = vld [vmem:[%s1 + $0x3b8] sm:$0xff]
    %v179 = vld [vmem:[%s1 + $0x3c0] sm:$0xff]
    %v180 = vld [vmem:[%s1 + $0x3c8] sm:$0xff]
    %v181 = vld [vmem:[%s1 + $0x3d0] sm:$0xff]
    %v182 = vld [vmem:[%s1 + $0x3d8] sm:$0xff]
    %v183 = vld [vmem:[%s1 + $0x3e0] sm:$0xff]
    %v184 = vld [vmem:[%s1 + $0x3e8] sm:$0xff]
    %v185 = vld [vmem:[%s1 + $0x3f0] sm:$0xff]
    %v186 = vld [vmem:[%s1 + $0x3f8] sm:$0xff]
    %v187 = vld [vmem:[%s2] sm:$0xf]
    %v189 = vlaneseq
    %v190 = vshrl.u32 %v189, 7
    %v191 = vsub.s32 0, %v190
    %v192 = vrot.slane %v187, %v191
    %v193 = vlaneseq
    %v194 = vshrl.u32 %v193, 7
    %v195 = vsub.s32 1, %v194
    %v196 = vrot.slane %v187, %v195
    %v197 = vlaneseq
    %v198 = vshrl.u32 %v197, 7
    %v199 = vsub.s32 2, %v198
    %v200 = vrot.slane %v187, %v199
    %v201 = vlaneseq
    %v202 = vshrl.u32 %v201, 7
    %v203 = vsub.s32 3, %v202
    %v204 = vrot.slane %v187, %v203
    %209 = vmatprep.subr.mxu0 %v120
    %210 = vmatpush1.msra.mxu0 %v119
    %211 = vmatprep.subr.mxu0 %v116
    %212 = vmatpush1.msra.mxu0 %v115
    %213 = vmatprep.subr.mxu0 %v112
    %214 = vmatpush1.msra.mxu0 %v111
    %215 = vmatprep.subr.mxu0 %v108
    %216 = vmatpush1.msra.mxu0 %v107
    %217 = vmatprep.subr.mxu0 %v104
    %218 = vmatpush1.msra.mxu0 %v103
    %219 = vmatprep.subr.mxu0 %v100
    %220 = vmatpush1.msra.mxu0 %v99
    %221 = vmatprep.subr.mxu0 %v96
    %222 = vmatpush1.msra.mxu0 %v95
    %223 = vmatprep.subr.mxu0 %v92
    %224 = vmatpush1.msra.mxu0 %v91
    %225 = vmatprep.subr.mxu0 %v88
    %226 = vmatpush1.msra.mxu0 %v87
    %227 = vmatprep.subr.mxu0 %v84
    %228 = vmatpush1.msra.mxu0 %v83
    %229 = vmatprep.subr.mxu0 %v80
    %230 = vmatpush1.msra.mxu0 %v79
    %231 = vmatprep.subr.mxu0 %v76
    %232 = vmatpush1.msra.mxu0 %v75
    %233 = vmatprep.subr.mxu0 %v72
    %234 = vmatpush1.msra.mxu0 %v71
    %235 = vmatprep.subr.mxu0 %v68
    %236 = vmatpush1.msra.mxu0 %v67
    %237 = vmatprep.subr.mxu0 %v64
    %238 = vmatpush1.msra.mxu0 %v63
    %239 = vmatprep.subr.mxu0 %v60
    %240 = vmatpush1.msra.mxu0 %v59
    %241 = vmatprep.subr.mxu0 %v184
    %242 = vmatpush2.msra.mxu0 %v183
    %243 = vmatprep.subr.mxu0 %v180
    %244 = vmatpush2.msra.mxu0 %v179
    %245 = vmatprep.subr.mxu0 %v176
    %246 = vmatpush2.msra.mxu0 %v175
    %247 = vmatprep.subr.mxu0 %v172
    %248 = vmatpush2.msra.mxu0 %v171
    %249 = vmatprep.subr.mxu0 %v168
    %250 = vmatpush2.msra.mxu0 %v167
    %251 = vmatprep.subr.mxu0 %v164
    %252 = vmatpush2.msra.mxu0 %v163
    %253 = vmatprep.subr.mxu0 %v160
    %254 = vmatpush2.msra.mxu0 %v159
    %255 = vmatprep.subr.mxu0 %v156
    %256 = vmatpush2.msra.mxu0 %v155
    %257 = vmatprep.subr.mxu0 %v152
    %258 = vmatpush2.msra.mxu0 %v151
    %259 = vmatprep.subr.mxu0 %v148
    %260 = vmatpush2.msra.mxu0 %v147
    %261 = vmatprep.subr.mxu0 %v144
    %262 = vmatpush2.msra.mxu0 %v143
    %263 = vmatprep.subr.mxu0 %v140
    %264 = vmatpush2.msra.mxu0 %v139
    %265 = vmatprep.subr.mxu0 %v136
    %266 = vmatpush2.msra.mxu0 %v135
    %267 = vmatprep.subr.mxu0 %v132
    %268 = vmatpush2.msra.mxu0 %v131
    %269 = vmatprep.subr.mxu0 %v128
    %270 = vmatpush2.msra.mxu0 %v127
    %271 = vmatprep.subr.mxu0 %v124
    %272 = vmatpush2.msra.mxu0 %v123
    %273 = vmatprep.mubr.f32.mxu0 %v58
    %274 = vmatmul.mubr.f32.gmra.mxu0 %v57
    %v275 = vpop.f32.mrf.mxu0
    %v276 = vadd.f32 %v192, %v275
    %v277 = vpop.f32.mrf.mxu0
    %v278 = vadd.f32 %v196, %v277
    %279 = vdwg.mxu0
    %280 = vmatprep.subr.mxu0 %v122
    %281 = vmatpush1.msra.mxu0 %v121
    %282 = vmatprep.subr.mxu0 %v118
    %283 = vmatpush1.msra.mxu0 %v117
    %284 = vmatprep.subr.mxu0 %v114
    %285 = vmatpush1.msra.mxu0 %v113
    %286 = vmatprep.subr.mxu0 %v110
    %287 = vmatpush1.msra.mxu0 %v109
    %288 = vmatprep.subr.mxu0 %v106
    %289 = vmatpush1.msra.mxu0 %v105
    %290 = vmatprep.subr.mxu0 %v102
    %291 = vmatpush1.msra.mxu0 %v101
    %292 = vmatprep.subr.mxu0 %v98
    %293 = vmatpush1.msra.mxu0 %v97
    %294 = vmatprep.subr.mxu0 %v94
    %295 = vmatpush1.msra.mxu0 %v93
    %296 = vmatprep.subr.mxu0 %v90
    %297 = vmatpush1.msra.mxu0 %v89
    %298 = vmatprep.subr.mxu0 %v86
    %299 = vmatpush1.msra.mxu0 %v85
    %300 = vmatprep.subr.mxu0 %v82
    %301 = vmatpush1.msra.mxu0 %v81
    %302 = vmatprep.subr.mxu0 %v78
    %303 = vmatpush1.msra.mxu0 %v77
    %304 = vmatprep.subr.mxu0 %v74
    %305 = vmatpush1.msra.mxu0 %v73
    %306 = vmatprep.subr.mxu0 %v70
    %307 = vmatpush1.msra.mxu0 %v69
    %308 = vmatprep.subr.mxu0 %v66
    %309 = vmatpush1.msra.mxu0 %v65
    %310 = vmatprep.subr.mxu0 %v62
    %311 = vmatpush1.msra.mxu0 %v61
    %312 = vmatprep.subr.mxu0 %v186
    %313 = vmatpush2.msra.mxu0 %v185
    %314 = vmatprep.subr.mxu0 %v182
    %315 = vmatpush2.msra.mxu0 %v181
    %316 = vmatprep.subr.mxu0 %v178
    %317 = vmatpush2.msra.mxu0 %v177
    %318 = vmatprep.subr.mxu0 %v174
    %319 = vmatpush2.msra.mxu0 %v173
    %320 = vmatprep.subr.mxu0 %v170
    %321 = vmatpush2.msra.mxu0 %v169
    %322 = vmatprep.subr.mxu0 %v166
    %323 = vmatpush2.msra.mxu0 %v165
    %324 = vmatprep.subr.mxu0 %v162
    %325 = vmatpush2.msra.mxu0 %v161
    %326 = vmatprep.subr.mxu0 %v158
    %327 = vmatpush2.msra.mxu0 %v157
    %328 = vmatprep.subr.mxu0 %v154
    %329 = vmatpush2.msra.mxu0 %v153
    %330 = vmatprep.subr.mxu0 %v150
    %331 = vmatpush2.msra.mxu0 %v149
    %332 = vmatprep.subr.mxu0 %v146
    %333 = vmatpush2.msra.mxu0 %v145
    %334 = vmatprep.subr.mxu0 %v142
    %335 = vmatpush2.msra.mxu0 %v141
    %336 = vmatprep.subr.mxu0 %v138
    %337 = vmatpush2.msra.mxu0 %v137
    %338 = vmatprep.subr.mxu0 %v134
    %339 = vmatpush2.msra.mxu0 %v133
    %340 = vmatprep.subr.mxu0 %v130
    %341 = vmatpush2.msra.mxu0 %v129
    %342 = vmatprep.subr.mxu0 %v126
    %343 = vmatpush2.msra.mxu0 %v125
    %344 = vmatprep.mubr.f32.mxu0 %v58
    %345 = vmatmul.mubr.f32.gmra.mxu0 %v57
    %v346 = vpop.f32.mrf.mxu0
    %v347 = vadd.f32 %v200, %v346
    %v348 = vpop.f32.mrf.mxu0
    %v349 = vadd.f32 %v204, %v348
    %350 = vdwg.mxu0
    %v351 = vmax.f32 %v276, 0.0
    %v352 = vmax.f32 %v278, 0.0
    %v353 = vmax.f32 %v347, 0.0
    %v354 = vmax.f32 %v349, 0.0
    %v355 = vld [vmem:[%s3] sm:$0xff]
    %v356 = vld [vmem:[%s3 + $0x8] sm:$0xff]
    %v357 = vld [vmem:[%s3 + $0x10] sm:$0xff]
    %v358 = vld [vmem:[%s3 + $0x18] sm:$0xff]
    %v359 = vld [vmem:[%s3 + $0x20] sm:$0xff]
    %v360 = vld [vmem:[%s3 + $0x28] sm:$0xff]
    %v361 = vld [vmem:[%s3 + $0x30] sm:$0xff]
    %v362 = vld [vmem:[%s3 + $0x38] sm:$0xff]
    %v363 = vld [vmem:[%s3 + $0x40] sm:$0xff]
    %v364 = vld [vmem:[%s3 + $0x48] sm:$0xff]
    %v365 = vld [vmem:[%s3 + $0x50] sm:$0xff]
    %v366 = vld [vmem:[%s3 + $0x58] sm:$0xff]
    %v367 = vld [vmem:[%s3 + $0x60] sm:$0xff]
    %v368 = vld [vmem:[%s3 + $0x68] sm:$0xff]
    %v369 = vld [vmem:[%s3 + $0x70] sm:$0xff]
    %v370 = vld [vmem:[%s3 + $0x78] sm:$0xff]
    %v371 = vld [vmem:[%s3 + $0x80] sm:$0xff]
    %v372 = vld [vmem:[%s3 + $0x88] sm:$0xff]
    %v373 = vld [vmem:[%s3 + $0x90] sm:$0xff]
    %v374 = vld [vmem:[%s3 + $0x98] sm:$0xff]
    %v375 = vld [vmem:[%s3 + $0xa0] sm:$0xff]
    %v376 = vld [vmem:[%s3 + $0xa8] sm:$0xff]
    %v377 = vld [vmem:[%s3 + $0xb0] sm:$0xff]
    %v378 = vld [vmem:[%s3 + $0xb8] sm:$0xff]
    %v379 = vld [vmem:[%s3 + $0xc0] sm:$0xff]
    %v380 = vld [vmem:[%s3 + $0xc8] sm:$0xff]
    %v381 = vld [vmem:[%s3 + $0xd0] sm:$0xff]
    %v382 = vld [vmem:[%s3 + $0xd8] sm:$0xff]
    %v383 = vld [vmem:[%s3 + $0xe0] sm:$0xff]
    %v384 = vld [vmem:[%s3 + $0xe8] sm:$0xff]
    %v385 = vld [vmem:[%s3 + $0xf0] sm:$0xff]
    %v386 = vld [vmem:[%s3 + $0xf8] sm:$0xff]
    %v387 = vld [vmem:[%s3 + $0x100] sm:$0xff]
    %v388 = vld [vmem:[%s3 + $0x108] sm:$0xff]
    %v389 = vld [vmem:[%s3 + $0x110] sm:$0xff]
    %v390 = vld [vmem:[%s3 + $0x118] sm:$0xff]
    %v391 = vld [vmem:[%s3 + $0x120] sm:$0xff]
    %v392 = vld [vmem:[%s3 + $0x128] sm:$0xff]
    %v393 = vld [vmem:[%s3 + $0x130] sm:$0xff]
    %v394 = vld [vmem:[%s3 + $0x138] sm:$0xff]
    %v395 = vld [vmem:[%s3 + $0x140] sm:$0xff]
    %v396 = vld [vmem:[%s3 + $0x148] sm:$0xff]
    %v397 = vld [vmem:[%s3 + $0x150] sm:$0xff]
    %v398 = vld [vmem:[%s3 + $0x158] sm:$0xff]
    %v399 = vld [vmem:[%s3 + $0x160] sm:$0xff]
    %v400 = vld [vmem:[%s3 + $0x168] sm:$0xff]
    %v401 = vld [vmem:[%s3 + $0x170] sm:$0xff]
    %v402 = vld [vmem:[%s3 + $0x178] sm:$0xff]
    %v403 = vld [vmem:[%s3 + $0x180] sm:$0xff]
    %v404 = vld [vmem:[%s3 + $0x188] sm:$0xff]
    %v405 = vld [vmem:[%s3 + $0x190] sm:$0xff]
    %v406 = vld [vmem:[%s3 + $0x198] sm:$0xff]
    %v407 = vld [vmem:[%s3 + $0x1a0] sm:$0xff]
    %v408 = vld [vmem:[%s3 + $0x1a8] sm:$0xff]
    %v409 = vld [vmem:[%s3 + $0x1b0] sm:$0xff]
    %v410 = vld [vmem:[%s3 + $0x1b8] sm:$0xff]
    %v411 = vld [vmem:[%s3 + $0x1c0] sm:$0x3]
    %vm412 = vcmask 539648
    %v414 = vsel %vm412, %v354, 0
    %vm416 = vcmask 1041408
    %v418 = vsel %vm416, %v411, 0
    %420 = vmatprep.subr.mxu0 0.0
    %421 = vmatpush1.msra.mxu0 %v370
    %422 = vmatprep.subr.mxu0 0.0
    %423 = vmatpush1.msra.mxu0 %v369
    %424 = vmatprep.subr.mxu0 0.0
    %425 = vmatpush1.msra.mxu0 %v368
    %426 = vmatprep.subr.mxu0 0.0
    %427 = vmatpush1.msra.mxu0 %v367
    %428 = vmatprep.subr.mxu0 0.0
    %429 = vmatpush1.msra.mxu0 %v366
    %430 = vmatprep.subr.mxu0 0.0
    %431 = vmatpush1.msra.mxu0 %v365
    %432 = vmatprep.subr.mxu0 0.0
    %433 = vmatpush1.msra.mxu0 %v364
    %434 = vmatprep.subr.mxu0 0.0
    %435 = vmatpush1.msra.mxu0 %v363
    %436 = vmatprep.subr.mxu0 0.0
    %437 = vmatpush1.msra.mxu0 %v362
    %438 = vmatprep.subr.mxu0 0.0
    %439 = vmatpush1.msra.mxu0 %v361
    %440 = vmatprep.subr.mxu0 0.0
    %441 = vmatpush1.msra.mxu0 %v360
    %442 = vmatprep.subr.mxu0 0.0
    %443 = vmatpush1.msra.mxu0 %v359
    %444 = vmatprep.subr.mxu0 0.0
    %445 = vmatpush1.msra.mxu0 %v358
    %446 = vmatprep.subr.mxu0 0.0
    %447 = vmatpush1.msra.mxu0 %v357
    %448 = vmatprep.subr.mxu0 0.0
    %449 = vmatpush1.msra.mxu0 %v356
    %450 = vmatprep.subr.mxu0 0.0
    %451 = vmatpush1.msra.mxu0 %v355
    %452 = vmatprep.subr.mxu0 0.0
    %453 = vmatpush2.msra.mxu0 %v386
    %454 = vmatprep.subr.mxu0 0.0
    %455 = vmatpush2.msra.mxu0 %v385
    %456 = vmatprep.subr.mxu0 0.0
    %457 = vmatpush2.msra.mxu0 %v384
    %458 = vmatprep.subr.mxu0 0.0
    %459 = vmatpush2.msra.mxu0 %v383
    %460 = vmatprep.subr.mxu0 0.0
    %461 = vmatpush2.msra.mxu0 %v382
    %462 = vmatprep.subr.mxu0 0.0
    %463 = vmatpush2.msra.mxu0 %v381
    %464 = vmatprep.subr.mxu0 0.0
    %465 = vmatpush2.msra.mxu0 %v380
    %466 = vmatprep.subr.mxu0 0.0
    %467 = vmatpush2.msra.mxu0 %v379
    %468 = vmatprep.subr.mxu0 0.0
    %469 = vmatpush2.msra.mxu0 %v378
    %470 = vmatprep.subr.mxu0 0.0
    %471 = vmatpush2.msra.mxu0 %v377
    %472 = vmatprep.subr.mxu0 0.0
    %473 = vmatpush2.msra.mxu0 %v376
    %474 = vmatprep.subr.mxu0 0.0
    %475 = vmatpush2.msra.mxu0 %v375
    %476 = vmatprep.subr.mxu0 0.0
    %477 = vmatpush2.msra.mxu0 %v374
    %478 = vmatprep.subr.mxu0 0.0
    %479 = vmatpush2.msra.mxu0 %v373
    %480 = vmatprep.subr.mxu0 0.0
    %481 = vmatpush2.msra.mxu0 %v372
    %482 = vmatprep.subr.mxu0 0.0
    %483 = vmatpush2.msra.mxu0 %v371
    %484 = vmatprep.mubr.f32.mxu0 %v352
    %485 = vmatmul.mubr.f32.gmra.mxu0 %v351
    %v486 = vpop.f32.mrf.mxu0
    %v487 = vadd.f32 0.0, %v486
    %v488 = vpop.f32.mrf.mxu0
    %489 = vdwg.mxu0
    %490 = vmatprep.subr.mxu0 0.0
    %491 = vmatpush1.msra.mxu0 %v402
    %492 = vmatprep.subr.mxu0 0.0
    %493 = vmatpush1.msra.mxu0 %v401
    %494 = vmatprep.subr.mxu0 0.0
    %495 = vmatpush1.msra.mxu0 %v400
    %496 = vmatprep.subr.mxu0 0.0
    %497 = vmatpush1.msra.mxu0 %v399
    %498 = vmatprep.subr.mxu0 0.0
    %499 = vmatpush1.msra.mxu0 %v398
    %500 = vmatprep.subr.mxu0 0.0
    %501 = vmatpush1.msra.mxu0 %v397
    %502 = vmatprep.subr.mxu0 0.0
    %503 = vmatpush1.msra.mxu0 %v396
    %504 = vmatprep.subr.mxu0 0.0
    %505 = vmatpush1.msra.mxu0 %v395
    %506 = vmatprep.subr.mxu0 0.0
    %507 = vmatpush1.msra.mxu0 %v394
    %508 = vmatprep.subr.mxu0 0.0
    %509 = vmatpush1.msra.mxu0 %v393
    %510 = vmatprep.subr.mxu0 0.0
    %511 = vmatpush1.msra.mxu0 %v392
    %512 = vmatprep.subr.mxu0 0.0
    %513 = vmatpush1.msra.mxu0 %v391
    %514 = vmatprep.subr.mxu0 0.0
    %515 = vmatpush1.msra.mxu0 %v390
    %516 = vmatprep.subr.mxu0 0.0
    %517 = vmatpush1.msra.mxu0 %v389
    %518 = vmatprep.subr.mxu0 0.0
    %519 = vmatpush1.msra.mxu0 %v388
    %520 = vmatprep.subr.mxu0 0.0
    %521 = vmatpush1.msra.mxu0 %v387
    %522 = vmatprep.subr.mxu0 0.0
    %523 = vmatpush2.msra.mxu0 0.0
    %524 = vmatprep.subr.mxu0 0.0
    %525 = vmatpush2.msra.mxu0 0.0
    %526 = vmatprep.subr.mxu0 0.0
    %527 = vmatpush2.msra.mxu0 0.0
    %528 = vmatprep.subr.mxu0 0.0
    %529 = vmatpush2.msra.mxu0 0.0
    %530 = vmatprep.subr.mxu0 0.0
    %531 = vmatpush2.msra.mxu0 0.0
    %532 = vmatprep.subr.mxu0 0.0
    %533 = vmatpush2.msra.mxu0 0.0
    %534 = vmatprep.subr.mxu0 0.0
    %535 = vmatpush2.msra.mxu0 0.0
    %536 = vmatprep.subr.mxu0 0.0
    %537 = vmatpush2.msra.mxu0 %v418
    %538 = vmatprep.subr.mxu0 0.0
    %539 = vmatpush2.msra.mxu0 %v410
    %540 = vmatprep.subr.mxu0 0.0
    %541 = vmatpush2.msra.mxu0 %v409
    %542 = vmatprep.subr.mxu0 0.0
    %543 = vmatpush2.msra.mxu0 %v408
    %544 = vmatprep.subr.mxu0 0.0
    %545 = vmatpush2.msra.mxu0 %v407
    %546 = vmatprep.subr.mxu0 0.0
    %547 = vmatpush2.msra.mxu0 %v406
    %548 = vmatprep.subr.mxu0 0.0
    %549 = vmatpush2.msra.mxu0 %v405
    %550 = vmatprep.subr.mxu0 0.0
    %551 = vmatpush2.msra.mxu0 %v404
    %552 = vmatprep.subr.mxu0 0.0
    %553 = vmatpush2.msra.mxu0 %v403
    %554 = vmatprep.mubr.f32.mxu0 %v414
    %555 = vmatmul.mubr.f32.gmra.mxu0 %v353
    %v556 = vpop.f32.mrf.mxu0
    %v557 = vadd.f32 %v487, %v556
    %v558 = vpop.f32.mrf.mxu0
    %559 = vdwg.mxu0
    %s560 = scalar_lea.vmem %s3, 456
    %v561 = vld [vmem:[%s560] sm:$0xff]
    %v562 = vld [vmem:[%s560 + $0x8] sm:$0xff]
    %v563 = vld [vmem:[%s560 + $0x10] sm:$0xff]
    %v564 = vld [vmem:[%s560 + $0x18] sm:$0xff]
    %v565 = vld [vmem:[%s560 + $0x20] sm:$0xff]
    %v566 = vld [vmem:[%s560 + $0x28] sm:$0xff]
    %v567 = vld [vmem:[%s560 + $0x30] sm:$0xff]
    %v568 = vld [vmem:[%s560 + $0x38] sm:$0xff]
    %v569 = vld [vmem:[%s560 + $0x40] sm:$0xff]
    %v570 = vld [vmem:[%s560 + $0x48] sm:$0xff]
    %v571 = vld [vmem:[%s560 + $0x50] sm:$0xff]
    %v572 = vld [vmem:[%s560 + $0x58] sm:$0xff]
    %v573 = vld [vmem:[%s560 + $0x60] sm:$0xff]
    %v574 = vld [vmem:[%s560 + $0x68] sm:$0xff]
    %v575 = vld [vmem:[%s560 + $0x70] sm:$0xff]
    %v576 = vld [vmem:[%s560 + $0x78] sm:$0xff]
    %v577 = vld [vmem:[%s560 + $0x80] sm:$0xff]
    %v578 = vld [vmem:[%s560 + $0x88] sm:$0xff]
    %v579 = vld [vmem:[%s560 + $0x90] sm:$0xff]
    %v580 = vld [vmem:[%s560 + $0x98] sm:$0xff]
    %v581 = vld [vmem:[%s560 + $0xa0] sm:$0xff]
    %v582 = vld [vmem:[%s560 + $0xa8] sm:$0xff]
    %v583 = vld [vmem:[%s560 + $0xb0] sm:$0xff]
    %v584 = vld [vmem:[%s560 + $0xb8] sm:$0xff]
    %v585 = vld [vmem:[%s560 + $0xc0] sm:$0xff]
    %v586 = vld [vmem:[%s560 + $0xc8] sm:$0xff]
    %v587 = vld [vmem:[%s560 + $0xd0] sm:$0xff]
    %v588 = vld [vmem:[%s560 + $0xd8] sm:$0xff]
    %v589 = vld [vmem:[%s560 + $0xe0] sm:$0xff]
    %v590 = vld [vmem:[%s560 + $0xe8] sm:$0xff]
    %v591 = vld [vmem:[%s560 + $0xf0] sm:$0xff]
    %v592 = vld [vmem:[%s560 + $0xf8] sm:$0xff]
    %v593 = vld [vmem:[%s560 + $0x100] sm:$0xff]
    %v594 = vld [vmem:[%s560 + $0x108] sm:$0xff]
    %v595 = vld [vmem:[%s560 + $0x110] sm:$0xff]
    %v596 = vld [vmem:[%s560 + $0x118] sm:$0xff]
    %v597 = vld [vmem:[%s560 + $0x120] sm:$0xff]
    %v598 = vld [vmem:[%s560 + $0x128] sm:$0xff]
    %v599 = vld [vmem:[%s560 + $0x130] sm:$0xff]
    %v600 = vld [vmem:[%s560 + $0x138] sm:$0xff]
    %v601 = vld [vmem:[%s560 + $0x140] sm:$0xff]
    %v602 = vld [vmem:[%s560 + $0x148] sm:$0xff]
    %v603 = vld [vmem:[%s560 + $0x150] sm:$0xff]
    %v604 = vld [vmem:[%s560 + $0x158] sm:$0xff]
    %v605 = vld [vmem:[%s560 + $0x160] sm:$0xff]
    %v606 = vld [vmem:[%s560 + $0x168] sm:$0xff]
    %v607 = vld [vmem:[%s560 + $0x170] sm:$0xff]
    %v608 = vld [vmem:[%s560 + $0x178] sm:$0xff]
    %v609 = vld [vmem:[%s560 + $0x180] sm:$0xff]
    %v610 = vld [vmem:[%s560 + $0x188] sm:$0xff]
    %v611 = vld [vmem:[%s560 + $0x190] sm:$0xff]
    %v612 = vld [vmem:[%s560 + $0x198] sm:$0xff]
    %v613 = vld [vmem:[%s560 + $0x1a0] sm:$0xff]
    %v614 = vld [vmem:[%s560 + $0x1a8] sm:$0xff]
    %v615 = vld [vmem:[%s560 + $0x1b0] sm:$0xff]
    %v616 = vld [vmem:[%s560 + $0x1b8] sm:$0xff]
    %v617 = vld [vmem:[%s560 + $0x1c0] sm:$0x3]
    %v619 = vsel %vm416, %v617, 0
    %621 = vmatprep.subr.mxu0 0.0
    %622 = vmatpush1.msra.mxu0 %v576
    %623 = vmatprep.subr.mxu0 0.0
    %624 = vmatpush1.msra.mxu0 %v575
    %625 = vmatprep.subr.mxu0 0.0
    %626 = vmatpush1.msra.mxu0 %v574
    %627 = vmatprep.subr.mxu0 0.0
    %628 = vmatpush1.msra.mxu0 %v573
    %629 = vmatprep.subr.mxu0 0.0
    %630 = vmatpush1.msra.mxu0 %v572
    %631 = vmatprep.subr.mxu0 0.0
    %632 = vmatpush1.msra.mxu0 %v571
    %633 = vmatprep.subr.mxu0 0.0
    %634 = vmatpush1.msra.mxu0 %v570
    %635 = vmatprep.subr.mxu0 0.0
    %636 = vmatpush1.msra.mxu0 %v569
    %637 = vmatprep.subr.mxu0 0.0
    %638 = vmatpush1.msra.mxu0 %v568
    %639 = vmatprep.subr.mxu0 0.0
    %640 = vmatpush1.msra.mxu0 %v567
    %641 = vmatprep.subr.mxu0 0.0
    %642 = vmatpush1.msra.mxu0 %v566
    %643 = vmatprep.subr.mxu0 0.0
    %644 = vmatpush1.msra.mxu0 %v565
    %645 = vmatprep.subr.mxu0 0.0
    %646 = vmatpush1.msra.mxu0 %v564
    %647 = vmatprep.subr.mxu0 0.0
    %648 = vmatpush1.msra.mxu0 %v563
    %649 = vmatprep.subr.mxu0 0.0
    %650 = vmatpush1.msra.mxu0 %v562
    %651 = vmatprep.subr.mxu0 0.0
    %652 = vmatpush1.msra.mxu0 %v561
    %653 = vmatprep.subr.mxu0 0.0
    %654 = vmatpush2.msra.mxu0 %v592
    %655 = vmatprep.subr.mxu0 0.0
    %656 = vmatpush2.msra.mxu0 %v591
    %657 = vmatprep.subr.mxu0 0.0
    %658 = vmatpush2.msra.mxu0 %v590
    %659 = vmatprep.subr.mxu0 0.0
    %660 = vmatpush2.msra.mxu0 %v589
    %661 = vmatprep.subr.mxu0 0.0
    %662 = vmatpush2.msra.mxu0 %v588
    %663 = vmatprep.subr.mxu0 0.0
    %664 = vmatpush2.msra.mxu0 %v587
    %665 = vmatprep.subr.mxu0 0.0
    %666 = vmatpush2.msra.mxu0 %v586
    %667 = vmatprep.subr.mxu0 0.0
    %668 = vmatpush2.msra.mxu0 %v585
    %669 = vmatprep.subr.mxu0 0.0
    %670 = vmatpush2.msra.mxu0 %v584
    %671 = vmatprep.subr.mxu0 0.0
    %672 = vmatpush2.msra.mxu0 %v583
    %673 = vmatprep.subr.mxu0 0.0
    %674 = vmatpush2.msra.mxu0 %v582
    %675 = vmatprep.subr.mxu0 0.0
    %676 = vmatpush2.msra.mxu0 %v581
    %677 = vmatprep.subr.mxu0 0.0
    %678 = vmatpush2.msra.mxu0 %v580
    %679 = vmatprep.subr.mxu0 0.0
    %680 = vmatpush2.msra.mxu0 %v579
    %681 = vmatprep.subr.mxu0 0.0
    %682 = vmatpush2.msra.mxu0 %v578
    %683 = vmatprep.subr.mxu0 0.0
    %684 = vmatpush2.msra.mxu0 %v577
    %685 = vmatprep.mubr.f32.mxu0 %v352
    %686 = vmatmul.mubr.f32.gmra.mxu0 %v351
    %v687 = vpop.f32.mrf.mxu0
    %v688 = vadd.f32 0.0, %v687
    %v689 = vpop.f32.mrf.mxu0
    %690 = vdwg.mxu0
    %691 = vmatprep.subr.mxu0 0.0
    %692 = vmatpush1.msra.mxu0 %v608
    %693 = vmatprep.subr.mxu0 0.0
    %694 = vmatpush1.msra.mxu0 %v607
    %695 = vmatprep.subr.mxu0 0.0
    %696 = vmatpush1.msra.mxu0 %v606
    %697 = vmatprep.subr.mxu0 0.0
    %698 = vmatpush1.msra.mxu0 %v605
    %699 = vmatprep.subr.mxu0 0.0
    %700 = vmatpush1.msra.mxu0 %v604
    %701 = vmatprep.subr.mxu0 0.0
    %702 = vmatpush1.msra.mxu0 %v603
    %703 = vmatprep.subr.mxu0 0.0
    %704 = vmatpush1.msra.mxu0 %v602
    %705 = vmatprep.subr.mxu0 0.0
    %706 = vmatpush1.msra.mxu0 %v601
    %707 = vmatprep.subr.mxu0 0.0
    %708 = vmatpush1.msra.mxu0 %v600
    %709 = vmatprep.subr.mxu0 0.0
    %710 = vmatpush1.msra.mxu0 %v599
    %711 = vmatprep.subr.mxu0 0.0
    %712 = vmatpush1.msra.mxu0 %v598
    %713 = vmatprep.subr.mxu0 0.0
    %714 = vmatpush1.msra.mxu0 %v597
    %715 = vmatprep.subr.mxu0 0.0
    %716 = vmatpush1.msra.mxu0 %v596
    %717 = vmatprep.subr.mxu0 0.0
    %718 = vmatpush1.msra.mxu0 %v595
    %719 = vmatprep.subr.mxu0 0.0
    %720 = vmatpush1.msra.mxu0 %v594
    %721 = vmatprep.subr.mxu0 0.0
    %722 = vmatpush1.msra.mxu0 %v593
    %723 = vmatprep.subr.mxu0 0.0
    %724 = vmatpush2.msra.mxu0 0.0
    %725 = vmatprep.subr.mxu0 0.0
    %726 = vmatpush2.msra.mxu0 0.0
    %727 = vmatprep.subr.mxu0 0.0
    %728 = vmatpush2.msra.mxu0 0.0
    %729 = vmatprep.subr.mxu0 0.0
    %730 = vmatpush2.msra.mxu0 0.0
    %731 = vmatprep.subr.mxu0 0.0
    %732 = vmatpush2.msra.mxu0 0.0
    %733 = vmatprep.subr.mxu0 0.0
    %734 = vmatpush2.msra.mxu0 0.0
    %735 = vmatprep.subr.mxu0 0.0
    %736 = vmatpush2.msra.mxu0 0.0
    %737 = vmatprep.subr.mxu0 0.0
    %738 = vmatpush2.msra.mxu0 %v619
    %739 = vmatprep.subr.mxu0 0.0
    %740 = vmatpush2.msra.mxu0 %v616
    %741 = vmatprep.subr.mxu0 0.0
    %742 = vmatpush2.msra.mxu0 %v615
    %743 = vmatprep.subr.mxu0 0.0
    %744 = vmatpush2.msra.mxu0 %v614
    %745 = vmatprep.subr.mxu0 0.0
    %746 = vmatpush2.msra.mxu0 %v613
    %747 = vmatprep.subr.mxu0 0.0
    %748 = vmatpush2.msra.mxu0 %v612
    %749 = vmatprep.subr.mxu0 0.0
    %750 = vmatpush2.msra.mxu0 %v611
    %751 = vmatprep.subr.mxu0 0.0
    %752 = vmatpush2.msra.mxu0 %v610
    %753 = vmatprep.subr.mxu0 0.0
    %754 = vmatpush2.msra.mxu0 %v609
    %755 = vmatprep.mubr.f32.mxu0 %v414
    %756 = vmatmul.mubr.f32.gmra.mxu0 %v353
    %v757 = vpop.f32.mrf.mxu0
    %v758 = vadd.f32 %v688, %v757
    %v759 = vpop.f32.mrf.mxu0
    %760 = vdwg.mxu0
    %v761 = vmax.f32 %v557, %v758
    %s762 = scalar_lea.vmem %s3, 912
    %v763 = vld [vmem:[%s762] sm:$0xff]
    %v764 = vld [vmem:[%s762 + $0x8] sm:$0xff]
    %v765 = vld [vmem:[%s762 + $0x10] sm:$0xff]
    %v766 = vld [vmem:[%s762 + $0x18] sm:$0xff]
    %v767 = vld [vmem:[%s762 + $0x20] sm:$0xff]
    %v768 = vld [vmem:[%s762 + $0x28] sm:$0xff]
    %v769 = vld [vmem:[%s762 + $0x30] sm:$0xff]
    %v770 = vld [vmem:[%s762 + $0x38] sm:$0xff]
    %v771 = vld [vmem:[%s762 + $0x40] sm:$0xff]
    %v772 = vld [vmem:[%s762 + $0x48] sm:$0xff]
    %v773 = vld [vmem:[%s762 + $0x50] sm:$0xff]
    %v774 = vld [vmem:[%s762 + $0x58] sm:$0xff]
    %v775 = vld [vmem:[%s762 + $0x60] sm:$0xff]
    %v776 = vld [vmem:[%s762 + $0x68] sm:$0xff]
    %v777 = vld [vmem:[%s762 + $0x70] sm:$0xff]
    %v778 = vld [vmem:[%s762 + $0x78] sm:$0xff]
    %v779 = vld [vmem:[%s762 + $0x80] sm:$0xff]
    %v780 = vld [vmem:[%s762 + $0x88] sm:$0xff]
    %v781 = vld [vmem:[%s762 + $0x90] sm:$0xff]
    %v782 = vld [vmem:[%s762 + $0x98] sm:$0xff]
    %v783 = vld [vmem:[%s762 + $0xa0] sm:$0xff]
    %v784 = vld [vmem:[%s762 + $0xa8] sm:$0xff]
    %v785 = vld [vmem:[%s762 + $0xb0] sm:$0xff]
    %v786 = vld [vmem:[%s762 + $0xb8] sm:$0xff]
    %v787 = vld [vmem:[%s762 + $0xc0] sm:$0xff]
    %v788 = vld [vmem:[%s762 + $0xc8] sm:$0xff]
    %v789 = vld [vmem:[%s762 + $0xd0] sm:$0xff]
    %v790 = vld [vmem:[%s762 + $0xd8] sm:$0xff]
    %v791 = vld [vmem:[%s762 + $0xe0] sm:$0xff]
    %v792 = vld [vmem:[%s762 + $0xe8] sm:$0xff]
    %v793 = vld [vmem:[%s762 + $0xf0] sm:$0xff]
    %v794 = vld [vmem:[%s762 + $0xf8] sm:$0xff]
    %v795 = vld [vmem:[%s762 + $0x100] sm:$0xff]
    %v796 = vld [vmem:[%s762 + $0x108] sm:$0xff]
    %v797 = vld [vmem:[%s762 + $0x110] sm:$0xff]
    %v798 = vld [vmem:[%s762 + $0x118] sm:$0xff]
    %v799 = vld [vmem:[%s762 + $0x120] sm:$0xff]
    %v800 = vld [vmem:[%s762 + $0x128] sm:$0xff]
    %v801 = vld [vmem:[%s762 + $0x130] sm:$0xff]
    %v802 = vld [vmem:[%s762 + $0x138] sm:$0xff]
    %v803 = vld [vmem:[%s762 + $0x140] sm:$0xff]
    %v804 = vld [vmem:[%s762 + $0x148] sm:$0xff]
    %v805 = vld [vmem:[%s762 + $0x150] sm:$0xff]
    %v806 = vld [vmem:[%s762 + $0x158] sm:$0xff]
    %v807 = vld [vmem:[%s762 + $0x160] sm:$0xff]
    %v808 = vld [vmem:[%s762 + $0x168] sm:$0xff]
    %v809 = vld [vmem:[%s762 + $0x170] sm:$0xff]
    %v810 = vld [vmem:[%s762 + $0x178] sm:$0xff]
    %v811 = vld [vmem:[%s762 + $0x180] sm:$0xff]
    %v812 = vld [vmem:[%s762 + $0x188] sm:$0xff]
    %v813 = vld [vmem:[%s762 + $0x190] sm:$0xff]
    %v814 = vld [vmem:[%s762 + $0x198] sm:$0xff]
    %v815 = vld [vmem:[%s762 + $0x1a0] sm:$0xff]
    %v816 = vld [vmem:[%s762 + $0x1a8] sm:$0xff]
    %v817 = vld [vmem:[%s762 + $0x1b0] sm:$0xff]
    %v818 = vld [vmem:[%s762 + $0x1b8] sm:$0xff]
    %v819 = vld [vmem:[%s762 + $0x1c0] sm:$0x3]
    %v821 = vsel %vm416, %v819, 0
    %823 = vmatprep.subr.mxu0 0.0
    %824 = vmatpush1.msra.mxu0 %v778
    %825 = vmatprep.subr.mxu0 0.0
    %826 = vmatpush1.msra.mxu0 %v777
    %827 = vmatprep.subr.mxu0 0.0
    %828 = vmatpush1.msra.mxu0 %v776
    %829 = vmatprep.subr.mxu0 0.0
    %830 = vmatpush1.msra.mxu0 %v775
    %831 = vmatprep.subr.mxu0 0.0
    %832 = vmatpush1.msra.mxu0 %v774
    %833 = vmatprep.subr.mxu0 0.0
    %834 = vmatpush1.msra.mxu0 %v773
    %835 = vmatprep.subr.mxu0 0.0
    %836 = vmatpush1.msra.mxu0 %v772
    %837 = vmatprep.subr.mxu0 0.0
    %838 = vmatpush1.msra.mxu0 %v771
    %839 = vmatprep.subr.mxu0 0.0
    %840 = vmatpush1.msra.mxu0 %v770
    %841 = vmatprep.subr.mxu0 0.0
    %842 = vmatpush1.msra.mxu0 %v769
    %843 = vmatprep.subr.mxu0 0.0
    %844 = vmatpush1.msra.mxu0 %v768
    %845 = vmatprep.subr.mxu0 0.0
    %846 = vmatpush1.msra.mxu0 %v767
    %847 = vmatprep.subr.mxu0 0.0
    %848 = vmatpush1.msra.mxu0 %v766
    %849 = vmatprep.subr.mxu0 0.0
    %850 = vmatpush1.msra.mxu0 %v765
    %851 = vmatprep.subr.mxu0 0.0
    %852 = vmatpush1.msra.mxu0 %v764
    %853 = vmatprep.subr.mxu0 0.0
    %854 = vmatpush1.msra.mxu0 %v763
    %855 = vmatprep.subr.mxu0 0.0
    %856 = vmatpush2.msra.mxu0 %v794
    %857 = vmatprep.subr.mxu0 0.0
    %858 = vmatpush2.msra.mxu0 %v793
    %859 = vmatprep.subr.mxu0 0.0
    %860 = vmatpush2.msra.mxu0 %v792
    %861 = vmatprep.subr.mxu0 0.0
    %862 = vmatpush2.msra.mxu0 %v791
    %863 = vmatprep.subr.mxu0 0.0
    %864 = vmatpush2.msra.mxu0 %v790
    %865 = vmatprep.subr.mxu0 0.0
    %866 = vmatpush2.msra.mxu0 %v789
    %867 = vmatprep.subr.mxu0 0.0
    %868 = vmatpush2.msra.mxu0 %v788
    %869 = vmatprep.subr.mxu0 0.0
    %870 = vmatpush2.msra.mxu0 %v787
    %871 = vmatprep.subr.mxu0 0.0
    %872 = vmatpush2.msra.mxu0 %v786
    %873 = vmatprep.subr.mxu0 0.0
    %874 = vmatpush2.msra.mxu0 %v785
    %875 = vmatprep.subr.mxu0 0.0
    %876 = vmatpush2.msra.mxu0 %v784
    %877 = vmatprep.subr.mxu0 0.0
    %878 = vmatpush2.msra.mxu0 %v783
    %879 = vmatprep.subr.mxu0 0.0
    %880 = vmatpush2.msra.mxu0 %v782
    %881 = vmatprep.subr.mxu0 0.0
    %882 = vmatpush2.msra.mxu0 %v781
    %883 = vmatprep.subr.mxu0 0.0
    %884 = vmatpush2.msra.mxu0 %v780
    %885 = vmatprep.subr.mxu0 0.0
    %886 = vmatpush2.msra.mxu0 %v779
    %887 = vmatprep.mubr.f32.mxu0 %v352
    %888 = vmatmul.mubr.f32.gmra.mxu0 %v351
    %v889 = vpop.f32.mrf.mxu0
    %v890 = vadd.f32 0.0, %v889
    %v891 = vpop.f32.mrf.mxu0
    %892 = vdwg.mxu0
    %893 = vmatprep.subr.mxu0 0.0
    %894 = vmatpush1.msra.mxu0 %v810
    %895 = vmatprep.subr.mxu0 0.0
    %896 = vmatpush1.msra.mxu0 %v809
    %897 = vmatprep.subr.mxu0 0.0
    %898 = vmatpush1.msra.mxu0 %v808
    %899 = vmatprep.subr.mxu0 0.0
    %900 = vmatpush1.msra.mxu0 %v807
    %901 = vmatprep.subr.mxu0 0.0
    %902 = vmatpush1.msra.mxu0 %v806
    %903 = vmatprep.subr.mxu0 0.0
    %904 = vmatpush1.msra.mxu0 %v805
    %905 = vmatprep.subr.mxu0 0.0
    %906 = vmatpush1.msra.mxu0 %v804
    %907 = vmatprep.subr.mxu0 0.0
    %908 = vmatpush1.msra.mxu0 %v803
    %909 = vmatprep.subr.mxu0 0.0
    %910 = vmatpush1.msra.mxu0 %v802
    %911 = vmatprep.subr.mxu0 0.0
    %912 = vmatpush1.msra.mxu0 %v801
    %913 = vmatprep.subr.mxu0 0.0
    %914 = vmatpush1.msra.mxu0 %v800
    %915 = vmatprep.subr.mxu0 0.0
    %916 = vmatpush1.msra.mxu0 %v799
    %917 = vmatprep.subr.mxu0 0.0
    %918 = vmatpush1.msra.mxu0 %v798
    %919 = vmatprep.subr.mxu0 0.0
    %920 = vmatpush1.msra.mxu0 %v797
    %921 = vmatprep.subr.mxu0 0.0
    %922 = vmatpush1.msra.mxu0 %v796
    %923 = vmatprep.subr.mxu0 0.0
    %924 = vmatpush1.msra.mxu0 %v795
    %925 = vmatprep.subr.mxu0 0.0
    %926 = vmatpush2.msra.mxu0 0.0
    %927 = vmatprep.subr.mxu0 0.0
    %928 = vmatpush2.msra.mxu0 0.0
    %929 = vmatprep.subr.mxu0 0.0
    %930 = vmatpush2.msra.mxu0 0.0
    %931 = vmatprep.subr.mxu0 0.0
    %932 = vmatpush2.msra.mxu0 0.0
    %933 = vmatprep.subr.mxu0 0.0
    %934 = vmatpush2.msra.mxu0 0.0
    %935 = vmatprep.subr.mxu0 0.0
    %936 = vmatpush2.msra.mxu0 0.0
    %937 = vmatprep.subr.mxu0 0.0
    %938 = vmatpush2.msra.mxu0 0.0
    %939 = vmatprep.subr.mxu0 0.0
    %940 = vmatpush2.msra.mxu0 %v821
    %941 = vmatprep.subr.mxu0 0.0
    %942 = vmatpush2.msra.mxu0 %v818
    %943 = vmatprep.subr.mxu0 0.0
    %944 = vmatpush2.msra.mxu0 %v817
    %945 = vmatprep.subr.mxu0 0.0
    %946 = vmatpush2.msra.mxu0 %v816
    %947 = vmatprep.subr.mxu0 0.0
    %948 = vmatpush2.msra.mxu0 %v815
    %949 = vmatprep.subr.mxu0 0.0
    %950 = vmatpush2.msra.mxu0 %v814
    %951 = vmatprep.subr.mxu0 0.0
    %952 = vmatpush2.msra.mxu0 %v813
    %953 = vmatprep.subr.mxu0 0.0
    %954 = vmatpush2.msra.mxu0 %v812
    %955 = vmatprep.subr.mxu0 0.0
    %956 = vmatpush2.msra.mxu0 %v811
    %957 = vmatprep.mubr.f32.mxu0 %v414
    %958 = vmatmul.mubr.f32.gmra.mxu0 %v353
    %v959 = vpop.f32.mrf.mxu0
    %v960 = vadd.f32 %v890, %v959
    %v961 = vpop.f32.mrf.mxu0
    %962 = vdwg.mxu0
    %v963 = vmax.f32 %v761, %v960
    %s964 = scalar_lea.vmem %s3, 1368
    %v965 = vld [vmem:[%s964] sm:$0xff]
    %v966 = vld [vmem:[%s964 + $0x8] sm:$0xff]
    %v967 = vld [vmem:[%s964 + $0x10] sm:$0xff]
    %v968 = vld [vmem:[%s964 + $0x18] sm:$0xff]
    %v969 = vld [vmem:[%s964 + $0x20] sm:$0xff]
    %v970 = vld [vmem:[%s964 + $0x28] sm:$0xff]
    %v971 = vld [vmem:[%s964 + $0x30] sm:$0xff]
    %v972 = vld [vmem:[%s964 + $0x38] sm:$0xff]
    %v973 = vld [vmem:[%s964 + $0x40] sm:$0xff]
    %v974 = vld [vmem:[%s964 + $0x48] sm:$0xff]
    %v975 = vld [vmem:[%s964 + $0x50] sm:$0xff]
    %v976 = vld [vmem:[%s964 + $0x58] sm:$0xff]
    %v977 = vld [vmem:[%s964 + $0x60] sm:$0xff]
    %v978 = vld [vmem:[%s964 + $0x68] sm:$0xff]
    %v979 = vld [vmem:[%s964 + $0x70] sm:$0xff]
    %v980 = vld [vmem:[%s964 + $0x78] sm:$0xff]
    %v981 = vld [vmem:[%s964 + $0x80] sm:$0xff]
    %v982 = vld [vmem:[%s964 + $0x88] sm:$0xff]
    %v983 = vld [vmem:[%s964 + $0x90] sm:$0xff]
    %v984 = vld [vmem:[%s964 + $0x98] sm:$0xff]
    %v985 = vld [vmem:[%s964 + $0xa0] sm:$0xff]
    %v986 = vld [vmem:[%s964 + $0xa8] sm:$0xff]
    %v987 = vld [vmem:[%s964 + $0xb0] sm:$0xff]
    %v988 = vld [vmem:[%s964 + $0xb8] sm:$0xff]
    %v989 = vld [vmem:[%s964 + $0xc0] sm:$0xff]
    %v990 = vld [vmem:[%s964 + $0xc8] sm:$0xff]
    %v991 = vld [vmem:[%s964 + $0xd0] sm:$0xff]
    %v992 = vld [vmem:[%s964 + $0xd8] sm:$0xff]
    %v993 = vld [vmem:[%s964 + $0xe0] sm:$0xff]
    %v994 = vld [vmem:[%s964 + $0xe8] sm:$0xff]
    %v995 = vld [vmem:[%s964 + $0xf0] sm:$0xff]
    %v996 = vld [vmem:[%s964 + $0xf8] sm:$0xff]
    %v997 = vld [vmem:[%s964 + $0x100] sm:$0xff]
    %v998 = vld [vmem:[%s964 + $0x108] sm:$0xff]
    %v999 = vld [vmem:[%s964 + $0x110] sm:$0xff]
    %v1000 = vld [vmem:[%s964 + $0x118] sm:$0xff]
    %v1001 = vld [vmem:[%s964 + $0x120] sm:$0xff]
    %v1002 = vld [vmem:[%s964 + $0x128] sm:$0xff]
    %v1003 = vld [vmem:[%s964 + $0x130] sm:$0xff]
    %v1004 = vld [vmem:[%s964 + $0x138] sm:$0xff]
    %v1005 = vld [vmem:[%s964 + $0x140] sm:$0xff]
    %v1006 = vld [vmem:[%s964 + $0x148] sm:$0xff]
    %v1007 = vld [vmem:[%s964 + $0x150] sm:$0xff]
    %v1008 = vld [vmem:[%s964 + $0x158] sm:$0xff]
    %v1009 = vld [vmem:[%s964 + $0x160] sm:$0xff]
    %v1010 = vld [vmem:[%s964 + $0x168] sm:$0xff]
    %v1011 = vld [vmem:[%s964 + $0x170] sm:$0xff]
    %v1012 = vld [vmem:[%s964 + $0x178] sm:$0xff]
    %v1013 = vld [vmem:[%s964 + $0x180] sm:$0xff]
    %v1014 = vld [vmem:[%s964 + $0x188] sm:$0xff]
    %v1015 = vld [vmem:[%s964 + $0x190] sm:$0xff]
    %v1016 = vld [vmem:[%s964 + $0x198] sm:$0xff]
    %v1017 = vld [vmem:[%s964 + $0x1a0] sm:$0xff]
    %v1018 = vld [vmem:[%s964 + $0x1a8] sm:$0xff]
    %v1019 = vld [vmem:[%s964 + $0x1b0] sm:$0xff]
    %v1020 = vld [vmem:[%s964 + $0x1b8] sm:$0xff]
    %v1021 = vld [vmem:[%s964 + $0x1c0] sm:$0x3]
    %v1023 = vsel %vm416, %v1021, 0
    %1025 = vmatprep.subr.mxu0 0.0
    %1026 = vmatpush1.msra.mxu0 %v980
    %1027 = vmatprep.subr.mxu0 0.0
    %1028 = vmatpush1.msra.mxu0 %v979
    %1029 = vmatprep.subr.mxu0 0.0
    %1030 = vmatpush1.msra.mxu0 %v978
    %1031 = vmatprep.subr.mxu0 0.0
    %1032 = vmatpush1.msra.mxu0 %v977
    %1033 = vmatprep.subr.mxu0 0.0
    %1034 = vmatpush1.msra.mxu0 %v976
    %1035 = vmatprep.subr.mxu0 0.0
    %1036 = vmatpush1.msra.mxu0 %v975
    %1037 = vmatprep.subr.mxu0 0.0
    %1038 = vmatpush1.msra.mxu0 %v974
    %1039 = vmatprep.subr.mxu0 0.0
    %1040 = vmatpush1.msra.mxu0 %v973
    %1041 = vmatprep.subr.mxu0 0.0
    %1042 = vmatpush1.msra.mxu0 %v972
    %1043 = vmatprep.subr.mxu0 0.0
    %1044 = vmatpush1.msra.mxu0 %v971
    %1045 = vmatprep.subr.mxu0 0.0
    %1046 = vmatpush1.msra.mxu0 %v970
    %1047 = vmatprep.subr.mxu0 0.0
    %1048 = vmatpush1.msra.mxu0 %v969
    %1049 = vmatprep.subr.mxu0 0.0
    %1050 = vmatpush1.msra.mxu0 %v968
    %1051 = vmatprep.subr.mxu0 0.0
    %1052 = vmatpush1.msra.mxu0 %v967
    %1053 = vmatprep.subr.mxu0 0.0
    %1054 = vmatpush1.msra.mxu0 %v966
    %1055 = vmatprep.subr.mxu0 0.0
    %1056 = vmatpush1.msra.mxu0 %v965
    %1057 = vmatprep.subr.mxu0 0.0
    %1058 = vmatpush2.msra.mxu0 %v996
    %1059 = vmatprep.subr.mxu0 0.0
    %1060 = vmatpush2.msra.mxu0 %v995
    %1061 = vmatprep.subr.mxu0 0.0
    %1062 = vmatpush2.msra.mxu0 %v994
    %1063 = vmatprep.subr.mxu0 0.0
    %1064 = vmatpush2.msra.mxu0 %v993
    %1065 = vmatprep.subr.mxu0 0.0
    %1066 = vmatpush2.msra.mxu0 %v992
    %1067 = vmatprep.subr.mxu0 0.0
    %1068 = vmatpush2.msra.mxu0 %v991
    %1069 = vmatprep.subr.mxu0 0.0
    %1070 = vmatpush2.msra.mxu0 %v990
    %1071 = vmatprep.subr.mxu0 0.0
    %1072 = vmatpush2.msra.mxu0 %v989
    %1073 = vmatprep.subr.mxu0 0.0
    %1074 = vmatpush2.msra.mxu0 %v988
    %1075 = vmatprep.subr.mxu0 0.0
    %1076 = vmatpush2.msra.mxu0 %v987
    %1077 = vmatprep.subr.mxu0 0.0
    %1078 = vmatpush2.msra.mxu0 %v986
    %1079 = vmatprep.subr.mxu0 0.0
    %1080 = vmatpush2.msra.mxu0 %v985
    %1081 = vmatprep.subr.mxu0 0.0
    %1082 = vmatpush2.msra.mxu0 %v984
    %1083 = vmatprep.subr.mxu0 0.0
    %1084 = vmatpush2.msra.mxu0 %v983
    %1085 = vmatprep.subr.mxu0 0.0
    %1086 = vmatpush2.msra.mxu0 %v982
    %1087 = vmatprep.subr.mxu0 0.0
    %1088 = vmatpush2.msra.mxu0 %v981
    %1089 = vmatprep.mubr.f32.mxu0 %v352
    %1090 = vmatmul.mubr.f32.gmra.mxu0 %v351
    %v1091 = vpop.f32.mrf.mxu0
    %v1092 = vadd.f32 0.0, %v1091
    %v1093 = vpop.f32.mrf.mxu0
    %1094 = vdwg.mxu0
    %1095 = vmatprep.subr.mxu0 0.0
    %1096 = vmatpush1.msra.mxu0 %v1012
    %1097 = vmatprep.subr.mxu0 0.0
    %1098 = vmatpush1.msra.mxu0 %v1011
    %1099 = vmatprep.subr.mxu0 0.0
    %1100 = vmatpush1.msra.mxu0 %v1010
    %1101 = vmatprep.subr.mxu0 0.0
    %1102 = vmatpush1.msra.mxu0 %v1009
    %1103 = vmatprep.subr.mxu0 0.0
    %1104 = vmatpush1.msra.mxu0 %v1008
    %1105 = vmatprep.subr.mxu0 0.0
    %1106 = vmatpush1.msra.mxu0 %v1007
    %1107 = vmatprep.subr.mxu0 0.0
    %1108 = vmatpush1.msra.mxu0 %v1006
    %1109 = vmatprep.subr.mxu0 0.0
    %1110 = vmatpush1.msra.mxu0 %v1005
    %1111 = vmatprep.subr.mxu0 0.0
    %1112 = vmatpush1.msra.mxu0 %v1004
    %1113 = vmatprep.subr.mxu0 0.0
    %1114 = vmatpush1.msra.mxu0 %v1003
    %1115 = vmatprep.subr.mxu0 0.0
    %1116 = vmatpush1.msra.mxu0 %v1002
    %1117 = vmatprep.subr.mxu0 0.0
    %1118 = vmatpush1.msra.mxu0 %v1001
    %1119 = vmatprep.subr.mxu0 0.0
    %1120 = vmatpush1.msra.mxu0 %v1000
    %1121 = vmatprep.subr.mxu0 0.0
    %1122 = vmatpush1.msra.mxu0 %v999
    %1123 = vmatprep.subr.mxu0 0.0
    %1124 = vmatpush1.msra.mxu0 %v998
    %1125 = vmatprep.subr.mxu0 0.0
    %1126 = vmatpush1.msra.mxu0 %v997
    %1127 = vmatprep.subr.mxu0 0.0
    %1128 = vmatpush2.msra.mxu0 0.0
    %1129 = vmatprep.subr.mxu0 0.0
    %1130 = vmatpush2.msra.mxu0 0.0
    %1131 = vmatprep.subr.mxu0 0.0
    %1132 = vmatpush2.msra.mxu0 0.0
    %1133 = vmatprep.subr.mxu0 0.0
    %1134 = vmatpush2.msra.mxu0 0.0
    %1135 = vmatprep.subr.mxu0 0.0
    %1136 = vmatpush2.msra.mxu0 0.0
    %1137 = vmatprep.subr.mxu0 0.0
    %1138 = vmatpush2.msra.mxu0 0.0
    %1139 = vmatprep.subr.mxu0 0.0
    %1140 = vmatpush2.msra.mxu0 0.0
    %1141 = vmatprep.subr.mxu0 0.0
    %1142 = vmatpush2.msra.mxu0 %v1023
    %1143 = vmatprep.subr.mxu0 0.0
    %1144 = vmatpush2.msra.mxu0 %v1020
    %1145 = vmatprep.subr.mxu0 0.0
    %1146 = vmatpush2.msra.mxu0 %v1019
    %1147 = vmatprep.subr.mxu0 0.0
    %1148 = vmatpush2.msra.mxu0 %v1018
    %1149 = vmatprep.subr.mxu0 0.0
    %1150 = vmatpush2.msra.mxu0 %v1017
    %1151 = vmatprep.subr.mxu0 0.0
    %1152 = vmatpush2.msra.mxu0 %v1016
    %1153 = vmatprep.subr.mxu0 0.0
    %1154 = vmatpush2.msra.mxu0 %v1015
    %1155 = vmatprep.subr.mxu0 0.0
    %1156 = vmatpush2.msra.mxu0 %v1014
    %1157 = vmatprep.subr.mxu0 0.0
    %1158 = vmatpush2.msra.mxu0 %v1013
    %1159 = vmatprep.mubr.f32.mxu0 %v414
    %1160 = vmatmul.mubr.f32.gmra.mxu0 %v353
    %v1161 = vpop.f32.mrf.mxu0
    %v1162 = vadd.f32 %v1092, %v1161
    %v1163 = vpop.f32.mrf.mxu0
    %1164 = vdwg.mxu0
    %v1165 = vmax.f32 %v963, %v1162
    %v1166 = vld [vmem:[%s4] sm:$0xff]
    %v1167 = vld [vmem:[%s4 + $0x8] sm:$0xff]
    %v1168 = vld [vmem:[%s4 + $0x10] sm:$0xff]
    %v1169 = vld [vmem:[%s4 + $0x18] sm:$0xff]
    %v1170 = vld [vmem:[%s4 + $0x20] sm:$0xff]
    %v1171 = vld [vmem:[%s4 + $0x28] sm:$0xff]
    %v1172 = vld [vmem:[%s4 + $0x30] sm:$0xff]
    %v1173 = vld [vmem:[%s4 + $0x38] sm:$0xff]
    %v1174 = vld [vmem:[%s4 + $0x40] sm:$0xff]
    %v1175 = vld [vmem:[%s4 + $0x48] sm:$0xff]
    %v1176 = vld [vmem:[%s4 + $0x50] sm:$0xff]
    %v1177 = vld [vmem:[%s4 + $0x58] sm:$0xff]
    %v1178 = vld [vmem:[%s4 + $0x60] sm:$0xff]
    %v1179 = vld [vmem:[%s4 + $0x68] sm:$0xff]
    %v1180 = vld [vmem:[%s4 + $0x70] sm:$0xff]
    %v1181 = vld [vmem:[%s4 + $0x78] sm:$0xff]
    %v1182 = vld [vmem:[%s4 + $0x80] sm:$0xff]
    %v1183 = vld [vmem:[%s4 + $0x88] sm:$0xff]
    %v1184 = vld [vmem:[%s4 + $0x90] sm:$0xff]
    %v1185 = vld [vmem:[%s4 + $0x98] sm:$0xff]
    %v1186 = vld [vmem:[%s4 + $0xa0] sm:$0xff]
    %v1187 = vld [vmem:[%s4 + $0xa8] sm:$0xff]
    %v1188 = vld [vmem:[%s4 + $0xb0] sm:$0xff]
    %v1189 = vld [vmem:[%s4 + $0xb8] sm:$0xff]
    %v1190 = vld [vmem:[%s4 + $0xc0] sm:$0x3]
    %v1191 = vld [vmem:[%s4 + $0xc8] sm:$0x3]
    %v1192 = vld [vmem:[%s5] sm:$0x3]
    %v1194 = vlaneseq
    %v1195 = vshrl.u32 %v1194, 7
    %v1196 = vsub.s32 0, %v1195
    %v1197 = vrot.slane %v1192, %v1196
    %v1198 = vlaneseq
    %v1199 = vshrl.u32 %v1198, 7
    %v1200 = vsub.s32 1, %v1199
    %v1201 = vrot.slane %v1192, %v1200
    %vm1204 = vcmask 801792
    %v1206 = vsel %vm1204, %v1165, 0
    %v1209 = vsel %vm416, %v1190, 0
    %v1212 = vsel %vm416, %v1191, 0
    %1214 = vmatprep.subr.mxu0 0.0
    %1215 = vmatpush1.msra.mxu0 0.0
    %1216 = vmatprep.subr.mxu0 0.0
    %1217 = vmatpush1.msra.mxu0 0.0
    %1218 = vmatprep.subr.mxu0 0.0
    %1219 = vmatpush1.msra.mxu0 0.0
    %1220 = vmatprep.subr.mxu0 %v1212
    %1221 = vmatpush1.msra.mxu0 %v1209
    %1222 = vmatprep.subr.mxu0 %v1189
    %1223 = vmatpush1.msra.mxu0 %v1188
    %1224 = vmatprep.subr.mxu0 %v1187
    %1225 = vmatpush1.msra.mxu0 %v1186
    %1226 = vmatprep.subr.mxu0 %v1185
    %1227 = vmatpush1.msra.mxu0 %v1184
    %1228 = vmatprep.subr.mxu0 %v1183
    %1229 = vmatpush1.msra.mxu0 %v1182
    %1230 = vmatprep.subr.mxu0 %v1181
    %1231 = vmatpush1.msra.mxu0 %v1180
    %1232 = vmatprep.subr.mxu0 %v1179
    %1233 = vmatpush1.msra.mxu0 %v1178
    %1234 = vmatprep.subr.mxu0 %v1177
    %1235 = vmatpush1.msra.mxu0 %v1176
    %1236 = vmatprep.subr.mxu0 %v1175
    %1237 = vmatpush1.msra.mxu0 %v1174
    %1238 = vmatprep.subr.mxu0 %v1173
    %1239 = vmatpush1.msra.mxu0 %v1172
    %1240 = vmatprep.subr.mxu0 %v1171
    %1241 = vmatpush1.msra.mxu0 %v1170
    %1242 = vmatprep.subr.mxu0 %v1169
    %1243 = vmatpush1.msra.mxu0 %v1168
    %1244 = vmatprep.subr.mxu0 %v1167
    %1245 = vmatpush1.msra.mxu0 %v1166
    %1246 = vmatprep.subr.mxu0 0.0
    %1247 = vmatpush2.msra.mxu0 0.0
    %1248 = vmatprep.subr.mxu0 0.0
    %1249 = vmatpush2.msra.mxu0 0.0
    %1250 = vmatprep.subr.mxu0 0.0
    %1251 = vmatpush2.msra.mxu0 0.0
    %1252 = vmatprep.subr.mxu0 0.0
    %1253 = vmatpush2.msra.mxu0 0.0
    %1254 = vmatprep.subr.mxu0 0.0
    %1255 = vmatpush2.msra.mxu0 0.0
    %1256 = vmatprep.subr.mxu0 0.0
    %1257 = vmatpush2.msra.mxu0 0.0
    %1258 = vmatprep.subr.mxu0 0.0
    %1259 = vmatpush2.msra.mxu0 0.0
    %1260 = vmatprep.subr.mxu0 0.0
    %1261 = vmatpush2.msra.mxu0 0.0
    %1262 = vmatprep.subr.mxu0 0.0
    %1263 = vmatpush2.msra.mxu0 0.0
    %1264 = vmatprep.subr.mxu0 0.0
    %1265 = vmatpush2.msra.mxu0 0.0
    %1266 = vmatprep.subr.mxu0 0.0
    %1267 = vmatpush2.msra.mxu0 0.0
    %1268 = vmatprep.subr.mxu0 0.0
    %1269 = vmatpush2.msra.mxu0 0.0
    %1270 = vmatprep.subr.mxu0 0.0
    %1271 = vmatpush2.msra.mxu0 0.0
    %1272 = vmatprep.subr.mxu0 0.0
    %1273 = vmatpush2.msra.mxu0 0.0
    %1274 = vmatprep.subr.mxu0 0.0
    %1275 = vmatpush2.msra.mxu0 0.0
    %1276 = vmatprep.subr.mxu0 0.0
    %1277 = vmatpush2.msra.mxu0 0.0
    %1278 = vmatprep.mubr.f32.mxu0 0.0
    %1279 = vmatmul.mubr.f32.gmra.mxu0 %v1206
    %v1280 = vpop.f32.mrf.mxu0
    %v1281 = vadd.f32 %v1197, %v1280
    %v1282 = vpop.f32.mrf.mxu0
    %v1283 = vadd.f32 %v1201, %v1282
    %1284 = vdwg.mxu0
    %v1285 = vmax.f32 %v1281, 0.0
    %v1286 = vmax.f32 %v1283, 0.0
    %v1287 = vld [vmem:[%s6] sm:$0xff]
    %v1288 = vld [vmem:[%s6 + $0x8] sm:$0xff]
    %v1289 = vld [vmem:[%s6 + $0x10] sm:$0xff]
    %v1290 = vld [vmem:[%s6 + $0x18] sm:$0xff]
    %v1291 = vld [vmem:[%s6 + $0x20] sm:$0xff]
    %v1292 = vld [vmem:[%s6 + $0x28] sm:$0xff]
    %v1293 = vld [vmem:[%s6 + $0x30] sm:$0xff]
    %v1294 = vld [vmem:[%s6 + $0x38] sm:$0xff]
    %v1295 = vld [vmem:[%s6 + $0x40] sm:$0xff]
    %v1296 = vld [vmem:[%s6 + $0x48] sm:$0xff]
    %v1297 = vld [vmem:[%s6 + $0x50] sm:$0xff]
    %v1298 = vld [vmem:[%s6 + $0x58] sm:$0xff]
    %v1299 = vld [vmem:[%s6 + $0x60] sm:$0xff]
    %v1300 = vld [vmem:[%s6 + $0x68] sm:$0xff]
    %v1301 = vld [vmem:[%s6 + $0x70] sm:$0xff]
    %v1302 = vld [vmem:[%s6 + $0x78] sm:$0xff]
    %v1303 = vld [vmem:[%s6 + $0x80] sm:$0xff]
    %v1304 = vld [vmem:[%s6 + $0x88] sm:$0xff]
    %vm1305 = vcmask 130048
    %v1307 = vsel %vm1305, %v1286, 0
    %1309 = vmatprep.subr.mxu0 0.0
    %1310 = vmatpush1.msra.mxu0 %v1302
    %1311 = vmatprep.subr.mxu0 0.0
    %1312 = vmatpush1.msra.mxu0 %v1301
    %1313 = vmatprep.subr.mxu0 0.0
    %1314 = vmatpush1.msra.mxu0 %v1300
    %1315 = vmatprep.subr.mxu0 0.0
    %1316 = vmatpush1.msra.mxu0 %v1299
    %1317 = vmatprep.subr.mxu0 0.0
    %1318 = vmatpush1.msra.mxu0 %v1298
    %1319 = vmatprep.subr.mxu0 0.0
    %1320 = vmatpush1.msra.mxu0 %v1297
    %1321 = vmatprep.subr.mxu0 0.0
    %1322 = vmatpush1.msra.mxu0 %v1296
    %1323 = vmatprep.subr.mxu0 0.0
    %1324 = vmatpush1.msra.mxu0 %v1295
    %1325 = vmatprep.subr.mxu0 0.0
    %1326 = vmatpush1.msra.mxu0 %v1294
    %1327 = vmatprep.subr.mxu0 0.0
    %1328 = vmatpush1.msra.mxu0 %v1293
    %1329 = vmatprep.subr.mxu0 0.0
    %1330 = vmatpush1.msra.mxu0 %v1292
    %1331 = vmatprep.subr.mxu0 0.0
    %1332 = vmatpush1.msra.mxu0 %v1291
    %1333 = vmatprep.subr.mxu0 0.0
    %1334 = vmatpush1.msra.mxu0 %v1290
    %1335 = vmatprep.subr.mxu0 0.0
    %1336 = vmatpush1.msra.mxu0 %v1289
    %1337 = vmatprep.subr.mxu0 0.0
    %1338 = vmatpush1.msra.mxu0 %v1288
    %1339 = vmatprep.subr.mxu0 0.0
    %1340 = vmatpush1.msra.mxu0 %v1287
    %1341 = vmatprep.subr.mxu0 0.0
    %1342 = vmatpush2.msra.mxu0 0.0
    %1343 = vmatprep.subr.mxu0 0.0
    %1344 = vmatpush2.msra.mxu0 0.0
    %1345 = vmatprep.subr.mxu0 0.0
    %1346 = vmatpush2.msra.mxu0 0.0
    %1347 = vmatprep.subr.mxu0 0.0
    %1348 = vmatpush2.msra.mxu0 0.0
    %1349 = vmatprep.subr.mxu0 0.0
    %1350 = vmatpush2.msra.mxu0 0.0
    %1351 = vmatprep.subr.mxu0 0.0
    %1352 = vmatpush2.msra.mxu0 0.0
    %1353 = vmatprep.subr.mxu0 0.0
    %1354 = vmatpush2.msra.mxu0 0.0
    %1355 = vmatprep.subr.mxu0 0.0
    %1356 = vmatpush2.msra.mxu0 0.0
    %1357 = vmatprep.subr.mxu0 0.0
    %1358 = vmatpush2.msra.mxu0 0.0
    %1359 = vmatprep.subr.mxu0 0.0
    %1360 = vmatpush2.msra.mxu0 0.0
    %1361 = vmatprep.subr.mxu0 0.0
    %1362 = vmatpush2.msra.mxu0 0.0
    %1363 = vmatprep.subr.mxu0 0.0
    %1364 = vmatpush2.msra.mxu0 0.0
    %1365 = vmatprep.subr.mxu0 0.0
    %1366 = vmatpush2.msra.mxu0 0.0
    %1367 = vmatprep.subr.mxu0 0.0
    %1368 = vmatpush2.msra.mxu0 0.0
    %1369 = vmatprep.subr.mxu0 0.0
    %1370 = vmatpush2.msra.mxu0 %v1304
    %1371 = vmatprep.subr.mxu0 0.0
    %1372 = vmatpush2.msra.mxu0 %v1303
    %1373 = vmatprep.mubr.f32.mxu0 %v1307
    %1374 = vmatmul.mubr.f32.gmra.mxu0 %v1285
    %v1375 = vpop.f32.mrf.mxu0
    %v1376 = vadd.f32 0.0, %v1375
    %v1377 = vpop.f32.mrf.mxu0
    %1378 = vdwg.mxu0
    %s1379 = scalar_lea.vmem %s6, 144
    %v1380 = vld [vmem:[%s1379] sm:$0xff]
    %v1381 = vld [vmem:[%s1379 + $0x8] sm:$0xff]
    %v1382 = vld [vmem:[%s1379 + $0x10] sm:$0xff]
    %v1383 = vld [vmem:[%s1379 + $0x18] sm:$0xff]
    %v1384 = vld [vmem:[%s1379 + $0x20] sm:$0xff]
    %v1385 = vld [vmem:[%s1379 + $0x28] sm:$0xff]
    %v1386 = vld [vmem:[%s1379 + $0x30] sm:$0xff]
    %v1387 = vld [vmem:[%s1379 + $0x38] sm:$0xff]
    %v1388 = vld [vmem:[%s1379 + $0x40] sm:$0xff]
    %v1389 = vld [vmem:[%s1379 + $0x48] sm:$0xff]
    %v1390 = vld [vmem:[%s1379 + $0x50] sm:$0xff]
    %v1391 = vld [vmem:[%s1379 + $0x58] sm:$0xff]
    %v1392 = vld [vmem:[%s1379 + $0x60] sm:$0xff]
    %v1393 = vld [vmem:[%s1379 + $0x68] sm:$0xff]
    %v1394 = vld [vmem:[%s1379 + $0x70] sm:$0xff]
    %v1395 = vld [vmem:[%s1379 + $0x78] sm:$0xff]
    %v1396 = vld [vmem:[%s1379 + $0x80] sm:$0xff]
    %v1397 = vld [vmem:[%s1379 + $0x88] sm:$0xff]
    %1398 = vmatprep.subr.mxu0 0.0
    %1399 = vmatpush1.msra.mxu0 %v1395
    %1400 = vmatprep.subr.mxu0 0.0
    %1401 = vmatpush1.msra.mxu0 %v1394
    %1402 = vmatprep.subr.mxu0 0.0
    %1403 = vmatpush1.msra.mxu0 %v1393
    %1404 = vmatprep.subr.mxu0 0.0
    %1405 = vmatpush1.msra.mxu0 %v1392
    %1406 = vmatprep.subr.mxu0 0.0
    %1407 = vmatpush1.msra.mxu0 %v1391
    %1408 = vmatprep.subr.mxu0 0.0
    %1409 = vmatpush1.msra.mxu0 %v1390
    %1410 = vmatprep.subr.mxu0 0.0
    %1411 = vmatpush1.msra.mxu0 %v1389
    %1412 = vmatprep.subr.mxu0 0.0
    %1413 = vmatpush1.msra.mxu0 %v1388
    %1414 = vmatprep.subr.mxu0 0.0
    %1415 = vmatpush1.msra.mxu0 %v1387
    %1416 = vmatprep.subr.mxu0 0.0
    %1417 = vmatpush1.msra.mxu0 %v1386
    %1418 = vmatprep.subr.mxu0 0.0
    %1419 = vmatpush1.msra.mxu0 %v1385
    %1420 = vmatprep.subr.mxu0 0.0
    %1421 = vmatpush1.msra.mxu0 %v1384
    %1422 = vmatprep.subr.mxu0 0.0
    %1423 = vmatpush1.msra.mxu0 %v1383
    %1424 = vmatprep.subr.mxu0 0.0
    %1425 = vmatpush1.msra.mxu0 %v1382
    %1426 = vmatprep.subr.mxu0 0.0
    %1427 = vmatpush1.msra.mxu0 %v1381
    %1428 = vmatprep.subr.mxu0 0.0
    %1429 = vmatpush1.msra.mxu0 %v1380
    %1430 = vmatprep.subr.mxu0 0.0
    %1431 = vmatpush2.msra.mxu0 0.0
    %1432 = vmatprep.subr.mxu0 0.0
    %1433 = vmatpush2.msra.mxu0 0.0
    %1434 = vmatprep.subr.mxu0 0.0
    %1435 = vmatpush2.msra.mxu0 0.0
    %1436 = vmatprep.subr.mxu0 0.0
    %1437 = vmatpush2.msra.mxu0 0.0
    %1438 = vmatprep.subr.mxu0 0.0
    %1439 = vmatpush2.msra.mxu0 0.0
    %1440 = vmatprep.subr.mxu0 0.0
    %1441 = vmatpush2.msra.mxu0 0.0
    %1442 = vmatprep.subr.mxu0 0.0
    %1443 = vmatpush2.msra.mxu0 0.0
    %1444 = vmatprep.subr.mxu0 0.0
    %1445 = vmatpush2.msra.mxu0 0.0
    %1446 = vmatprep.subr.mxu0 0.0
    %1447 = vmatpush2.msra.mxu0 0.0
    %1448 = vmatprep.subr.mxu0 0.0
    %1449 = vmatpush2.msra.mxu0 0.0
    %1450 = vmatprep.subr.mxu0 0.0
    %1451 = vmatpush2.msra.mxu0 0.0
    %1452 = vmatprep.subr.mxu0 0.0
    %1453 = vmatpush2.msra.mxu0 0.0
    %1454 = vmatprep.subr.mxu0 0.0
    %1455 = vmatpush2.msra.mxu0 0.0
    %1456 = vmatprep.subr.mxu0 0.0
    %1457 = vmatpush2.msra.mxu0 0.0
    %1458 = vmatprep.subr.mxu0 0.0
    %1459 = vmatpush2.msra.mxu0 %v1397
    %1460 = vmatprep.subr.mxu0 0.0
    %1461 = vmatpush2.msra.mxu0 %v1396
    %1462 = vmatprep.mubr.f32.mxu0 %v1307
    %1463 = vmatmul.mubr.f32.gmra.mxu0 %v1285
    %v1464 = vpop.f32.mrf.mxu0
    %v1465 = vadd.f32 0.0, %v1464
    %v1466 = vpop.f32.mrf.mxu0
    %1467 = vdwg.mxu0
    %v1468 = vmax.f32 %v1376, %v1465
    %s1469 = scalar_lea.vmem %s6, 288
    %v1470 = vld [vmem:[%s1469] sm:$0xff]
    %v1471 = vld [vmem:[%s1469 + $0x8] sm:$0xff]
    %v1472 = vld [vmem:[%s1469 + $0x10] sm:$0xff]
    %v1473 = vld [vmem:[%s1469 + $0x18] sm:$0xff]
    %v1474 = vld [vmem:[%s1469 + $0x20] sm:$0xff]
    %v1475 = vld [vmem:[%s1469 + $0x28] sm:$0xff]
    %v1476 = vld [vmem:[%s1469 + $0x30] sm:$0xff]
    %v1477 = vld [vmem:[%s1469 + $0x38] sm:$0xff]
    %v1478 = vld [vmem:[%s1469 + $0x40] sm:$0xff]
    %v1479 = vld [vmem:[%s1469 + $0x48] sm:$0xff]
    %v1480 = vld [vmem:[%s1469 + $0x50] sm:$0xff]
    %v1481 = vld [vmem:[%s1469 + $0x58] sm:$0xff]
    %v1482 = vld [vmem:[%s1469 + $0x60] sm:$0xff]
    %v1483 = vld [vmem:[%s1469 + $0x68] sm:$0xff]
    %v1484 = vld [vmem:[%s1469 + $0x70] sm:$0xff]
    %v1485 = vld [vmem:[%s1469 + $0x78] sm:$0xff]
    %v1486 = vld [vmem:[%s1469 + $0x80] sm:$0xff]
    %v1487 = vld [vmem:[%s1469 + $0x88] sm:$0xff]
    %1488 = vmatprep.subr.mxu0 0.0
    %1489 = vmatpush1.msra.mxu0 %v1485
    %1490 = vmatprep.subr.mxu0 0.0
    %1491 = vmatpush1.msra.mxu0 %v1484
    %1492 = vmatprep.subr.mxu0 0.0
    %1493 = vmatpush1.msra.mxu0 %v1483
    %1494 = vmatprep.subr.mxu0 0.0
    %1495 = vmatpush1.msra.mxu0 %v1482
    %1496 = vmatprep.subr.mxu0 0.0
    %1497 = vmatpush1.msra.mxu0 %v1481
    %1498 = vmatprep.subr.mxu0 0.0
    %1499 = vmatpush1.msra.mxu0 %v1480
    %1500 = vmatprep.subr.mxu0 0.0
    %1501 = vmatpush1.msra.mxu0 %v1479
    %1502 = vmatprep.subr.mxu0 0.0
    %1503 = vmatpush1.msra.mxu0 %v1478
    %1504 = vmatprep.subr.mxu0 0.0
    %1505 = vmatpush1.msra.mxu0 %v1477
    %1506 = vmatprep.subr.mxu0 0.0
    %1507 = vmatpush1.msra.mxu0 %v1476
    %1508 = vmatprep.subr.mxu0 0.0
    %1509 = vmatpush1.msra.mxu0 %v1475
    %1510 = vmatprep.subr.mxu0 0.0
    %1511 = vmatpush1.msra.mxu0 %v1474
    %1512 = vmatprep.subr.mxu0 0.0
    %1513 = vmatpush1.msra.mxu0 %v1473
    %1514 = vmatprep.subr.mxu0 0.0
    %1515 = vmatpush1.msra.mxu0 %v1472
    %1516 = vmatprep.subr.mxu0 0.0
    %1517 = vmatpush1.msra.mxu0 %v1471
    %1518 = vmatprep.subr.mxu0 0.0
    %1519 = vmatpush1.msra.mxu0 %v1470
    %1520 = vmatprep.subr.mxu0 0.0
    %1521 = vmatpush2.msra.mxu0 0.0
    %1522 = vmatprep.subr.mxu0 0.0
    %1523 = vmatpush2.msra.mxu0 0.0
    %1524 = vmatprep.subr.mxu0 0.0
    %1525 = vmatpush2.msra.mxu0 0.0
    %1526 = vmatprep.subr.mxu0 0.0
    %1527 = vmatpush2.msra.mxu0 0.0
    %1528 = vmatprep.subr.mxu0 0.0
    %1529 = vmatpush2.msra.mxu0 0.0
    %1530 = vmatprep.subr.mxu0 0.0
    %1531 = vmatpush2.msra.mxu0 0.0
    %1532 = vmatprep.subr.mxu0 0.0
    %1533 = vmatpush2.msra.mxu0 0.0
    %1534 = vmatprep.subr.mxu0 0.0
    %1535 = vmatpush2.msra.mxu0 0.0
    %1536 = vmatprep.subr.mxu0 0.0
    %1537 = vmatpush2.msra.mxu0 0.0
    %1538 = vmatprep.subr.mxu0 0.0
    %1539 = vmatpush2.msra.mxu0 0.0
    %1540 = vmatprep.subr.mxu0 0.0
    %1541 = vmatpush2.msra.mxu0 0.0
    %1542 = vmatprep.subr.mxu0 0.0
    %1543 = vmatpush2.msra.mxu0 0.0
    %1544 = vmatprep.subr.mxu0 0.0
    %1545 = vmatpush2.msra.mxu0 0.0
    %1546 = vmatprep.subr.mxu0 0.0
    %1547 = vmatpush2.msra.mxu0 0.0
    %1548 = vmatprep.subr.mxu0 0.0
    %1549 = vmatpush2.msra.mxu0 %v1487
    %1550 = vmatprep.subr.mxu0 0.0
    %1551 = vmatpush2.msra.mxu0 %v1486
    %1552 = vmatprep.mubr.f32.mxu0 %v1307
    %1553 = vmatmul.mubr.f32.gmra.mxu0 %v1285
    %v1554 = vpop.f32.mrf.mxu0
    %v1555 = vadd.f32 0.0, %v1554
    %v1556 = vpop.f32.mrf.mxu0
    %1557 = vdwg.mxu0
    %v1558 = vmax.f32 %v1468, %v1555
    %s1559 = scalar_lea.vmem %s6, 432
    %v1560 = vld [vmem:[%s1559] sm:$0xff]
    %v1561 = vld [vmem:[%s1559 + $0x8] sm:$0xff]
    %v1562 = vld [vmem:[%s1559 + $0x10] sm:$0xff]
    %v1563 = vld [vmem:[%s1559 + $0x18] sm:$0xff]
    %v1564 = vld [vmem:[%s1559 + $0x20] sm:$0xff]
    %v1565 = vld [vmem:[%s1559 + $0x28] sm:$0xff]
    %v1566 = vld [vmem:[%s1559 + $0x30] sm:$0xff]
    %v1567 = vld [vmem:[%s1559 + $0x38] sm:$0xff]
    %v1568 = vld [vmem:[%s1559 + $0x40] sm:$0xff]
    %v1569 = vld [vmem:[%s1559 + $0x48] sm:$0xff]
    %v1570 = vld [vmem:[%s1559 + $0x50] sm:$0xff]
    %v1571 = vld [vmem:[%s1559 + $0x58] sm:$0xff]
    %v1572 = vld [vmem:[%s1559 + $0x60] sm:$0xff]
    %v1573 = vld [vmem:[%s1559 + $0x68] sm:$0xff]
    %v1574 = vld [vmem:[%s1559 + $0x70] sm:$0xff]
    %v1575 = vld [vmem:[%s1559 + $0x78] sm:$0xff]
    %v1576 = vld [vmem:[%s1559 + $0x80] sm:$0xff]
    %v1577 = vld [vmem:[%s1559 + $0x88] sm:$0xff]
    %1578 = vmatprep.subr.mxu0 0.0
    %1579 = vmatpush1.msra.mxu0 %v1575
    %1580 = vmatprep.subr.mxu0 0.0
    %1581 = vmatpush1.msra.mxu0 %v1574
    %1582 = vmatprep.subr.mxu0 0.0
    %1583 = vmatpush1.msra.mxu0 %v1573
    %1584 = vmatprep.subr.mxu0 0.0
    %1585 = vmatpush1.msra.mxu0 %v1572
    %1586 = vmatprep.subr.mxu0 0.0
    %1587 = vmatpush1.msra.mxu0 %v1571
    %1588 = vmatprep.subr.mxu0 0.0
    %1589 = vmatpush1.msra.mxu0 %v1570
    %1590 = vmatprep.subr.mxu0 0.0
    %1591 = vmatpush1.msra.mxu0 %v1569
    %1592 = vmatprep.subr.mxu0 0.0
    %1593 = vmatpush1.msra.mxu0 %v1568
    %1594 = vmatprep.subr.mxu0 0.0
    %1595 = vmatpush1.msra.mxu0 %v1567
    %1596 = vmatprep.subr.mxu0 0.0
    %1597 = vmatpush1.msra.mxu0 %v1566
    %1598 = vmatprep.subr.mxu0 0.0
    %1599 = vmatpush1.msra.mxu0 %v1565
    %1600 = vmatprep.subr.mxu0 0.0
    %1601 = vmatpush1.msra.mxu0 %v1564
    %1602 = vmatprep.subr.mxu0 0.0
    %1603 = vmatpush1.msra.mxu0 %v1563
    %1604 = vmatprep.subr.mxu0 0.0
    %1605 = vmatpush1.msra.mxu0 %v1562
    %1606 = vmatprep.subr.mxu0 0.0
    %1607 = vmatpush1.msra.mxu0 %v1561
    %1608 = vmatprep.subr.mxu0 0.0
    %1609 = vmatpush1.msra.mxu0 %v1560
    %1610 = vmatprep.subr.mxu0 0.0
    %1611 = vmatpush2.msra.mxu0 0.0
    %1612 = vmatprep.subr.mxu0 0.0
    %1613 = vmatpush2.msra.mxu0 0.0
    %1614 = vmatprep.subr.mxu0 0.0
    %1615 = vmatpush2.msra.mxu0 0.0
    %1616 = vmatprep.subr.mxu0 0.0
    %1617 = vmatpush2.msra.mxu0 0.0
    %1618 = vmatprep.subr.mxu0 0.0
    %1619 = vmatpush2.msra.mxu0 0.0
    %1620 = vmatprep.subr.mxu0 0.0
    %1621 = vmatpush2.msra.mxu0 0.0
    %1622 = vmatprep.subr.mxu0 0.0
    %1623 = vmatpush2.msra.mxu0 0.0
    %1624 = vmatprep.subr.mxu0 0.0
    %1625 = vmatpush2.msra.mxu0 0.0
    %1626 = vmatprep.subr.mxu0 0.0
    %1627 = vmatpush2.msra.mxu0 0.0
    %1628 = vmatprep.subr.mxu0 0.0
    %1629 = vmatpush2.msra.mxu0 0.0
    %1630 = vmatprep.subr.mxu0 0.0
    %1631 = vmatpush2.msra.mxu0 0.0
    %1632 = vmatprep.subr.mxu0 0.0
    %1633 = vmatpush2.msra.mxu0 0.0
    %1634 = vmatprep.subr.mxu0 0.0
    %1635 = vmatpush2.msra.mxu0 0.0
    %1636 = vmatprep.subr.mxu0 0.0
    %1637 = vmatpush2.msra.mxu0 0.0
    %1638 = vmatprep.subr.mxu0 0.0
    %1639 = vmatpush2.msra.mxu0 %v1577
    %1640 = vmatprep.subr.mxu0 0.0
    %1641 = vmatpush2.msra.mxu0 %v1576
    %1642 = vmatprep.mubr.f32.mxu0 %v1307
    %1643 = vmatmul.mubr.f32.gmra.mxu0 %v1285
    %v1644 = vpop.f32.mrf.mxu0
    %v1645 = vadd.f32 0.0, %v1644
    %v1646 = vpop.f32.mrf.mxu0
    %1647 = vdwg.mxu0
    %v1648 = vmax.f32 %v1558, %v1645
    %v1649 = vld [vmem:[%s7] sm:$0xff]
    %v1650 = vld [vmem:[%s7 + $0x8] sm:$0xff]
    %v1651 = vld [vmem:[%s7 + $0x10] sm:$0xff]
    %v1652 = vld [vmem:[%s7 + $0x18] sm:$0xff]
    %v1653 = vld [vmem:[%s7 + $0x20] sm:$0xf]
    %v1654 = vld [vmem:[%s8] sm:$0x1]
    %v1656 = vlaneseq
    %v1657 = vshrl.u32 %v1656, 7
    %v1658 = vsub.s32 0, %v1657
    %v1659 = vrot.slane %v1654, %v1658
    %vm1661 = vcmask 293888
    %v1663 = vsel %vm1661, %v1648, 0
    %vm1665 = vcmask 1043456
    %v1667 = vsel %vm1665, %v1653, 0
    %1669 = vmatprep.subr.mxu0 0.0
    %1670 = vmatpush1.msra.mxu0 0.0
    %1671 = vmatprep.subr.mxu0 0.0
    %1672 = vmatpush1.msra.mxu0 0.0
    %1673 = vmatprep.subr.mxu0 0.0
    %1674 = vmatpush1.msra.mxu0 0.0
    %1675 = vmatprep.subr.mxu0 0.0
    %1676 = vmatpush1.msra.mxu0 0.0
    %1677 = vmatprep.subr.mxu0 0.0
    %1678 = vmatpush1.msra.mxu0 0.0
    %1679 = vmatprep.subr.mxu0 0.0
    %1680 = vmatpush1.msra.mxu0 0.0
    %1681 = vmatprep.subr.mxu0 0.0
    %1682 = vmatpush1.msra.mxu0 0.0
    %1683 = vmatprep.subr.mxu0 0.0
    %1684 = vmatpush1.msra.mxu0 0.0
    %1685 = vmatprep.subr.mxu0 0.0
    %1686 = vmatpush1.msra.mxu0 0.0
    %1687 = vmatprep.subr.mxu0 0.0
    %1688 = vmatpush1.msra.mxu0 0.0
    %1689 = vmatprep.subr.mxu0 0.0
    %1690 = vmatpush1.msra.mxu0 0.0
    %1691 = vmatprep.subr.mxu0 0.0
    %1692 = vmatpush1.msra.mxu0 %v1667
    %1693 = vmatprep.subr.mxu0 0.0
    %1694 = vmatpush1.msra.mxu0 %v1652
    %1695 = vmatprep.subr.mxu0 0.0
    %1696 = vmatpush1.msra.mxu0 %v1651
    %1697 = vmatprep.subr.mxu0 0.0
    %1698 = vmatpush1.msra.mxu0 %v1650
    %1699 = vmatprep.subr.mxu0 0.0
    %1700 = vmatpush1.msra.mxu0 %v1649
    %1701 = vmatprep.subr.mxu0 0.0
    %1702 = vmatpush2.msra.mxu0 0.0
    %1703 = vmatprep.subr.mxu0 0.0
    %1704 = vmatpush2.msra.mxu0 0.0
    %1705 = vmatprep.subr.mxu0 0.0
    %1706 = vmatpush2.msra.mxu0 0.0
    %1707 = vmatprep.subr.mxu0 0.0
    %1708 = vmatpush2.msra.mxu0 0.0
    %1709 = vmatprep.subr.mxu0 0.0
    %1710 = vmatpush2.msra.mxu0 0.0
    %1711 = vmatprep.subr.mxu0 0.0
    %1712 = vmatpush2.msra.mxu0 0.0
    %1713 = vmatprep.subr.mxu0 0.0
    %1714 = vmatpush2.msra.mxu0 0.0
    %1715 = vmatprep.subr.mxu0 0.0
    %1716 = vmatpush2.msra.mxu0 0.0
    %1717 = vmatprep.subr.mxu0 0.0
    %1718 = vmatpush2.msra.mxu0 0.0
    %1719 = vmatprep.subr.mxu0 0.0
    %1720 = vmatpush2.msra.mxu0 0.0
    %1721 = vmatprep.subr.mxu0 0.0
    %1722 = vmatpush2.msra.mxu0 0.0
    %1723 = vmatprep.subr.mxu0 0.0
    %1724 = vmatpush2.msra.mxu0 0.0
    %1725 = vmatprep.subr.mxu0 0.0
    %1726 = vmatpush2.msra.mxu0 0.0
    %1727 = vmatprep.subr.mxu0 0.0
    %1728 = vmatpush2.msra.mxu0 0.0
    %1729 = vmatprep.subr.mxu0 0.0
    %1730 = vmatpush2.msra.mxu0 0.0
    %1731 = vmatprep.subr.mxu0 0.0
    %1732 = vmatpush2.msra.mxu0 0.0
    %1733 = vmatprep.mubr.f32.mxu0 0.0
    %1734 = vmatmul.mubr.f32.gmra.mxu0 %v1663
    %v1735 = vpop.f32.mrf.mxu0
    %v1736 = vadd.f32 %v1659, %v1735
    %v1737 = vpop.f32.mrf.mxu0
    %1738 = vdwg.mxu0
    %v1739 = vmax.f32 %v1736, 0.0
    %v1740 = vld [vmem:[%s9] sm:$0xff]
    %v1741 = vld [vmem:[%s9 + $0x8] sm:$0xff]
    %v1742 = vld [vmem:[%s9 + $0x10] sm:$0xff]
    %v1743 = vld [vmem:[%s9 + $0x18] sm:$0xff]
    %v1744 = vld [vmem:[%s10] sm:$0x1]
    %v1746 = vlaneseq
    %v1747 = vshrl.u32 %v1746, 7
    %v1748 = vsub.s32 0, %v1747
    %v1749 = vrot.slane %v1744, %v1748
    %vm1751 = vcmask 261120
    %v1753 = vsel %vm1751, %v1739, 0
    %1755 = vmatprep.subr.mxu0 0.0
    %1756 = vmatpush1.msra.mxu0 0.0
    %1757 = vmatprep.subr.mxu0 0.0
    %1758 = vmatpush1.msra.mxu0 0.0
    %1759 = vmatprep.subr.mxu0 0.0
    %1760 = vmatpush1.msra.mxu0 0.0
    %1761 = vmatprep.subr.mxu0 0.0
    %1762 = vmatpush1.msra.mxu0 0.0
    %1763 = vmatprep.subr.mxu0 0.0
    %1764 = vmatpush1.msra.mxu0 0.0
    %1765 = vmatprep.subr.mxu0 0.0
    %1766 = vmatpush1.msra.mxu0 0.0
    %1767 = vmatprep.subr.mxu0 0.0
    %1768 = vmatpush1.msra.mxu0 0.0
    %1769 = vmatprep.subr.mxu0 0.0
    %1770 = vmatpush1.msra.mxu0 0.0
    %1771 = vmatprep.subr.mxu0 0.0
    %1772 = vmatpush1.msra.mxu0 0.0
    %1773 = vmatprep.subr.mxu0 0.0
    %1774 = vmatpush1.msra.mxu0 0.0
    %1775 = vmatprep.subr.mxu0 0.0
    %1776 = vmatpush1.msra.mxu0 0.0
    %1777 = vmatprep.subr.mxu0 0.0
    %1778 = vmatpush1.msra.mxu0 0.0
    %1779 = vmatprep.subr.mxu0 0.0
    %1780 = vmatpush1.msra.mxu0 %v1743
    %1781 = vmatprep.subr.mxu0 0.0
    %1782 = vmatpush1.msra.mxu0 %v1742
    %1783 = vmatprep.subr.mxu0 0.0
    %1784 = vmatpush1.msra.mxu0 %v1741
    %1785 = vmatprep.subr.mxu0 0.0
    %1786 = vmatpush1.msra.mxu0 %v1740
    %1787 = vmatprep.subr.mxu0 0.0
    %1788 = vmatpush2.msra.mxu0 0.0
    %1789 = vmatprep.subr.mxu0 0.0
    %1790 = vmatpush2.msra.mxu0 0.0
    %1791 = vmatprep.subr.mxu0 0.0
    %1792 = vmatpush2.msra.mxu0 0.0
    %1793 = vmatprep.subr.mxu0 0.0
    %1794 = vmatpush2.msra.mxu0 0.0
    %1795 = vmatprep.subr.mxu0 0.0
    %1796 = vmatpush2.msra.mxu0 0.0
    %1797 = vmatprep.subr.mxu0 0.0
    %1798 = vmatpush2.msra.mxu0 0.0
    %1799 = vmatprep.subr.mxu0 0.0
    %1800 = vmatpush2.msra.mxu0 0.0
    %1801 = vmatprep.subr.mxu0 0.0
    %1802 = vmatpush2.msra.mxu0 0.0
    %1803 = vmatprep.subr.mxu0 0.0
    %1804 = vmatpush2.msra.mxu0 0.0
    %1805 = vmatprep.subr.mxu0 0.0
    %1806 = vmatpush2.msra.mxu0 0.0
    %1807 = vmatprep.subr.mxu0 0.0
    %1808 = vmatpush2.msra.mxu0 0.0
    %1809 = vmatprep.subr.mxu0 0.0
    %1810 = vmatpush2.msra.mxu0 0.0
    %1811 = vmatprep.subr.mxu0 0.0
    %1812 = vmatpush2.msra.mxu0 0.0
    %1813 = vmatprep.subr.mxu0 0.0
    %1814 = vmatpush2.msra.mxu0 0.0
    %1815 = vmatprep.subr.mxu0 0.0
    %1816 = vmatpush2.msra.mxu0 0.0
    %1817 = vmatprep.subr.mxu0 0.0
    %1818 = vmatpush2.msra.mxu0 0.0
    %1819 = vmatprep.mubr.f32.mxu0 0.0
    %1820 = vmatmul.mubr.f32.gmra.mxu0 %v1753
    %v1821 = vpop.f32.mrf.mxu0
    %v1822 = vadd.f32 %v1749, %v1821
    %v1823 = vpop.f32.mrf.mxu0
    %1824 = vdwg.mxu0
    %v1825 = vmax.f32 %v1822, 0.0
    %v1826 = vld [vmem:[%s11] sm:$0xff]
    %v1827 = vld [vmem:[%s11 + $0x8] sm:$0xff]
    %v1828 = vld [vmem:[%s11 + $0x10] sm:$0xff]
    %v1829 = vld [vmem:[%s11 + $0x18] sm:$0xff]
    %v1830 = vld [vmem:[%s11 + $0x20] sm:$0xff]
    %v1831 = vld [vmem:[%s11 + $0x28] sm:$0xff]
    %v1832 = vld [vmem:[%s11 + $0x30] sm:$0xff]
    %v1833 = vld [vmem:[%s11 + $0x38] sm:$0xff]
    %v1834 = vld [vmem:[%s11 + $0x40] sm:$0xff]
    %v1835 = vld [vmem:[%s11 + $0x48] sm:$0xff]
    %v1836 = vld [vmem:[%s11 + $0x50] sm:$0xff]
    %v1837 = vld [vmem:[%s11 + $0x58] sm:$0xff]
    %v1838 = vld [vmem:[%s11 + $0x60] sm:$0xff]
    %v1839 = vld [vmem:[%s11 + $0x68] sm:$0xff]
    %v1840 = vld [vmem:[%s11 + $0x70] sm:$0xff]
    %v1841 = vld [vmem:[%s11 + $0x78] sm:$0xff]
    %v1842 = vld [vmem:[%s11 + $0x80] sm:$0xff]
    %v1843 = vld [vmem:[%s11 + $0x88] sm:$0xff]
    %v1844 = vld [vmem:[%s11 + $0x90] sm:$0xff]
    %v1845 = vld [vmem:[%s11 + $0x98] sm:$0xff]
    %v1846 = vld [vmem:[%s12] sm:$0xff]
    %v1847 = vld [vmem:[%s12 + $0x8] sm:$0x3]
    %v1850 = vlaneseq
    %v1851 = vshrl.u32 %v1850, 7
    %v1852 = vsub.s32 0, %v1851
    %v1853 = vrot.slane %v1846, %v1852
    %v1854 = vlaneseq
    %v1855 = vshrl.u32 %v1854, 7
    %v1856 = vsub.s32 1, %v1855
    %v1857 = vrot.slane %v1846, %v1856
    %v1858 = vlaneseq
    %v1859 = vshrl.u32 %v1858, 7
    %v1860 = vsub.s32 2, %v1859
    %v1861 = vrot.slane %v1846, %v1860
    %v1862 = vlaneseq
    %v1863 = vshrl.u32 %v1862, 7
    %v1864 = vsub.s32 3, %v1863
    %v1865 = vrot.slane %v1846, %v1864
    %v1866 = vlaneseq
    %v1867 = vshrl.u32 %v1866, 7
    %v1868 = vsub.s32 4, %v1867
    %v1869 = vrot.slane %v1846, %v1868
    %v1870 = vlaneseq
    %v1871 = vshrl.u32 %v1870, 7
    %v1872 = vsub.s32 5, %v1871
    %v1873 = vrot.slane %v1846, %v1872
    %v1874 = vlaneseq
    %v1875 = vshrl.u32 %v1874, 7
    %v1876 = vsub.s32 6, %v1875
    %v1877 = vrot.slane %v1846, %v1876
    %v1878 = vlaneseq
    %v1879 = vshrl.u32 %v1878, 7
    %v1880 = vsub.s32 7, %v1879
    %v1881 = vrot.slane %v1846, %v1880
    %v1882 = vlaneseq
    %v1883 = vshrl.u32 %v1882, 7
    %v1884 = vsub.s32 0, %v1883
    %v1885 = vrot.slane %v1847, %v1884
    %v1886 = vlaneseq
    %v1887 = vshrl.u32 %v1886, 7
    %v1888 = vsub.s32 1, %v1887
    %v1889 = vrot.slane %v1847, %v1888
    %v1901 = vsel %vm1305, %v1825, 0
    %1903 = vmatprep.subr.mxu0 0.0
    %1904 = vmatpush1.msra.mxu0 0.0
    %1905 = vmatprep.subr.mxu0 0.0
    %1906 = vmatpush1.msra.mxu0 0.0
    %1907 = vmatprep.subr.mxu0 0.0
    %1908 = vmatpush1.msra.mxu0 0.0
    %1909 = vmatprep.subr.mxu0 0.0
    %1910 = vmatpush1.msra.mxu0 0.0
    %1911 = vmatprep.subr.mxu0 0.0
    %1912 = vmatpush1.msra.mxu0 0.0
    %1913 = vmatprep.subr.mxu0 0.0
    %1914 = vmatpush1.msra.mxu0 0.0
    %1915 = vmatprep.subr.mxu0 0.0
    %1916 = vmatpush1.msra.mxu0 0.0
    %1917 = vmatprep.subr.mxu0 0.0
    %1918 = vmatpush1.msra.mxu0 0.0
    %1919 = vmatprep.subr.mxu0 0.0
    %1920 = vmatpush1.msra.mxu0 0.0
    %1921 = vmatprep.subr.mxu0 0.0
    %1922 = vmatpush1.msra.mxu0 0.0
    %1923 = vmatprep.subr.mxu0 0.0
    %1924 = vmatpush1.msra.mxu0 0.0
    %1925 = vmatprep.subr.mxu0 0.0
    %1926 = vmatpush1.msra.mxu0 0.0
    %1927 = vmatprep.subr.mxu0 0.0
    %1928 = vmatpush1.msra.mxu0 0.0
    %1929 = vmatprep.subr.mxu0 0.0
    %1930 = vmatpush1.msra.mxu0 0.0
    %1931 = vmatprep.subr.mxu0 %v1837
    %1932 = vmatpush1.msra.mxu0 %v1836
    %1933 = vmatprep.subr.mxu0 %v1827
    %1934 = vmatpush1.msra.mxu0 %v1826
    %1935 = vmatprep.subr.mxu0 0.0
    %1936 = vmatpush2.msra.mxu0 0.0
    %1937 = vmatprep.subr.mxu0 0.0
    %1938 = vmatpush2.msra.mxu0 0.0
    %1939 = vmatprep.subr.mxu0 0.0
    %1940 = vmatpush2.msra.mxu0 0.0
    %1941 = vmatprep.subr.mxu0 0.0
    %1942 = vmatpush2.msra.mxu0 0.0
    %1943 = vmatprep.subr.mxu0 0.0
    %1944 = vmatpush2.msra.mxu0 0.0
    %1945 = vmatprep.subr.mxu0 0.0
    %1946 = vmatpush2.msra.mxu0 0.0
    %1947 = vmatprep.subr.mxu0 0.0
    %1948 = vmatpush2.msra.mxu0 0.0
    %1949 = vmatprep.subr.mxu0 0.0
    %1950 = vmatpush2.msra.mxu0 0.0
    %1951 = vmatprep.subr.mxu0 0.0
    %1952 = vmatpush2.msra.mxu0 0.0
    %1953 = vmatprep.subr.mxu0 0.0
    %1954 = vmatpush2.msra.mxu0 0.0
    %1955 = vmatprep.subr.mxu0 0.0
    %1956 = vmatpush2.msra.mxu0 0.0
    %1957 = vmatprep.subr.mxu0 0.0
    %1958 = vmatpush2.msra.mxu0 0.0
    %1959 = vmatprep.subr.mxu0 0.0
    %1960 = vmatpush2.msra.mxu0 0.0
    %1961 = vmatprep.subr.mxu0 0.0
    %1962 = vmatpush2.msra.mxu0 0.0
    %1963 = vmatprep.subr.mxu0 0.0
    %1964 = vmatpush2.msra.mxu0 0.0
    %1965 = vmatprep.subr.mxu0 0.0
    %1966 = vmatpush2.msra.mxu0 0.0
    %1967 = vmatprep.mubr.f32.mxu0 0.0
    %1968 = vmatmul.mubr.f32.gmra.mxu0 %v1901
    %v1969 = vpop.f32.mrf.mxu0
    %v1970 = vadd.f32 %v1853, %v1969
    %v1971 = vpop.f32.mrf.mxu0
    %v1972 = vadd.f32 %v1857, %v1971
    %1973 = vdwg.mxu0
    %1974 = vmatprep.subr.mxu0 0.0
    %1975 = vmatpush1.msra.mxu0 0.0
    %1976 = vmatprep.subr.mxu0 0.0
    %1977 = vmatpush1.msra.mxu0 0.0
    %1978 = vmatprep.subr.mxu0 0.0
    %1979 = vmatpush1.msra.mxu0 0.0
    %1980 = vmatprep.subr.mxu0 0.0
    %1981 = vmatpush1.msra.mxu0 0.0
    %1982 = vmatprep.subr.mxu0 0.0
    %1983 = vmatpush1.msra.mxu0 0.0
    %1984 = vmatprep.subr.mxu0 0.0
    %1985 = vmatpush1.msra.mxu0 0.0
    %1986 = vmatprep.subr.mxu0 0.0
    %1987 = vmatpush1.msra.mxu0 0.0
    %1988 = vmatprep.subr.mxu0 0.0
    %1989 = vmatpush1.msra.mxu0 0.0
    %1990 = vmatprep.subr.mxu0 0.0
    %1991 = vmatpush1.msra.mxu0 0.0
    %1992 = vmatprep.subr.mxu0 0.0
    %1993 = vmatpush1.msra.mxu0 0.0
    %1994 = vmatprep.subr.mxu0 0.0
    %1995 = vmatpush1.msra.mxu0 0.0
    %1996 = vmatprep.subr.mxu0 0.0
    %1997 = vmatpush1.msra.mxu0 0.0
    %1998 = vmatprep.subr.mxu0 0.0
    %1999 = vmatpush1.msra.mxu0 0.0
    %2000 = vmatprep.subr.mxu0 0.0
    %2001 = vmatpush1.msra.mxu0 0.0
    %2002 = vmatprep.subr.mxu0 %v1839
    %2003 = vmatpush1.msra.mxu0 %v1838
    %2004 = vmatprep.subr.mxu0 %v1829
    %2005 = vmatpush1.msra.mxu0 %v1828
    %2006 = vmatprep.subr.mxu0 0.0
    %2007 = vmatpush2.msra.mxu0 0.0
    %2008 = vmatprep.subr.mxu0 0.0
    %2009 = vmatpush2.msra.mxu0 0.0
    %2010 = vmatprep.subr.mxu0 0.0
    %2011 = vmatpush2.msra.mxu0 0.0
    %2012 = vmatprep.subr.mxu0 0.0
    %2013 = vmatpush2.msra.mxu0 0.0
    %2014 = vmatprep.subr.mxu0 0.0
    %2015 = vmatpush2.msra.mxu0 0.0
    %2016 = vmatprep.subr.mxu0 0.0
    %2017 = vmatpush2.msra.mxu0 0.0
    %2018 = vmatprep.subr.mxu0 0.0
    %2019 = vmatpush2.msra.mxu0 0.0
    %2020 = vmatprep.subr.mxu0 0.0
    %2021 = vmatpush2.msra.mxu0 0.0
    %2022 = vmatprep.subr.mxu0 0.0
    %2023 = vmatpush2.msra.mxu0 0.0
    %2024 = vmatprep.subr.mxu0 0.0
    %2025 = vmatpush2.msra.mxu0 0.0
    %2026 = vmatprep.subr.mxu0 0.0
    %2027 = vmatpush2.msra.mxu0 0.0
    %2028 = vmatprep.subr.mxu0 0.0
    %2029 = vmatpush2.msra.mxu0 0.0
    %2030 = vmatprep.subr.mxu0 0.0
    %2031 = vmatpush2.msra.mxu0 0.0
    %2032 = vmatprep.subr.mxu0 0.0
    %2033 = vmatpush2.msra.mxu0 0.0
    %2034 = vmatprep.subr.mxu0 0.0
    %2035 = vmatpush2.msra.mxu0 0.0
    %2036 = vmatprep.subr.mxu0 0.0
    %2037 = vmatpush2.msra.mxu0 0.0
    %2038 = vmatprep.mubr.f32.mxu0 0.0
    %2039 = vmatmul.mubr.f32.gmra.mxu0 %v1901
    %v2040 = vpop.f32.mrf.mxu0
    %v2041 = vadd.f32 %v1861, %v2040
    %v2042 = vpop.f32.mrf.mxu0
    %v2043 = vadd.f32 %v1865, %v2042
    %2044 = vdwg.mxu0
    %2045 = vmatprep.subr.mxu0 0.0
    %2046 = vmatpush1.msra.mxu0 0.0
    %2047 = vmatprep.subr.mxu0 0.0
    %2048 = vmatpush1.msra.mxu0 0.0
    %2049 = vmatprep.subr.mxu0 0.0
    %2050 = vmatpush1.msra.mxu0 0.0
    %2051 = vmatprep.subr.mxu0 0.0
    %2052 = vmatpush1.msra.mxu0 0.0
    %2053 = vmatprep.subr.mxu0 0.0
    %2054 = vmatpush1.msra.mxu0 0.0
    %2055 = vmatprep.subr.mxu0 0.0
    %2056 = vmatpush1.msra.mxu0 0.0
    %2057 = vmatprep.subr.mxu0 0.0
    %2058 = vmatpush1.msra.mxu0 0.0
    %2059 = vmatprep.subr.mxu0 0.0
    %2060 = vmatpush1.msra.mxu0 0.0
    %2061 = vmatprep.subr.mxu0 0.0
    %2062 = vmatpush1.msra.mxu0 0.0
    %2063 = vmatprep.subr.mxu0 0.0
    %2064 = vmatpush1.msra.mxu0 0.0
    %2065 = vmatprep.subr.mxu0 0.0
    %2066 = vmatpush1.msra.mxu0 0.0
    %2067 = vmatprep.subr.mxu0 0.0
    %2068 = vmatpush1.msra.mxu0 0.0
    %2069 = vmatprep.subr.mxu0 0.0
    %2070 = vmatpush1.msra.mxu0 0.0
    %2071 = vmatprep.subr.mxu0 0.0
    %2072 = vmatpush1.msra.mxu0 0.0
    %2073 = vmatprep.subr.mxu0 %v1841
    %2074 = vmatpush1.msra.mxu0 %v1840
    %2075 = vmatprep.subr.mxu0 %v1831
    %2076 = vmatpush1.msra.mxu0 %v1830
    %2077 = vmatprep.subr.mxu0 0.0
    %2078 = vmatpush2.msra.mxu0 0.0
    %2079 = vmatprep.subr.mxu0 0.0
    %2080 = vmatpush2.msra.mxu0 0.0
    %2081 = vmatprep.subr.mxu0 0.0
    %2082 = vmatpush2.msra.mxu0 0.0
    %2083 = vmatprep.subr.mxu0 0.0
    %2084 = vmatpush2.msra.mxu0 0.0
    %2085 = vmatprep.subr.mxu0 0.0
    %2086 = vmatpush2.msra.mxu0 0.0
    %2087 = vmatprep.subr.mxu0 0.0
    %2088 = vmatpush2.msra.mxu0 0.0
    %2089 = vmatprep.subr.mxu0 0.0
    %2090 = vmatpush2.msra.mxu0 0.0
    %2091 = vmatprep.subr.mxu0 0.0
    %2092 = vmatpush2.msra.mxu0 0.0
    %2093 = vmatprep.subr.mxu0 0.0
    %2094 = vmatpush2.msra.mxu0 0.0
    %2095 = vmatprep.subr.mxu0 0.0
    %2096 = vmatpush2.msra.mxu0 0.0
    %2097 = vmatprep.subr.mxu0 0.0
    %2098 = vmatpush2.msra.mxu0 0.0
    %2099 = vmatprep.subr.mxu0 0.0
    %2100 = vmatpush2.msra.mxu0 0.0
    %2101 = vmatprep.subr.mxu0 0.0
    %2102 = vmatpush2.msra.mxu0 0.0
    %2103 = vmatprep.subr.mxu0 0.0
    %2104 = vmatpush2.msra.mxu0 0.0
    %2105 = vmatprep.subr.mxu0 0.0
    %2106 = vmatpush2.msra.mxu0 0.0
    %2107 = vmatprep.subr.mxu0 0.0
    %2108 = vmatpush2.msra.mxu0 0.0
    %2109 = vmatprep.mubr.f32.mxu0 0.0
    %2110 = vmatmul.mubr.f32.gmra.mxu0 %v1901
    %v2111 = vpop.f32.mrf.mxu0
    %v2112 = vadd.f32 %v1869, %v2111
    %v2113 = vpop.f32.mrf.mxu0
    %v2114 = vadd.f32 %v1873, %v2113
    %2115 = vdwg.mxu0
    %2116 = vmatprep.subr.mxu0 0.0
    %2117 = vmatpush1.msra.mxu0 0.0
    %2118 = vmatprep.subr.mxu0 0.0
    %2119 = vmatpush1.msra.mxu0 0.0
    %2120 = vmatprep.subr.mxu0 0.0
    %2121 = vmatpush1.msra.mxu0 0.0
    %2122 = vmatprep.subr.mxu0 0.0
    %2123 = vmatpush1.msra.mxu0 0.0
    %2124 = vmatprep.subr.mxu0 0.0
    %2125 = vmatpush1.msra.mxu0 0.0
    %2126 = vmatprep.subr.mxu0 0.0
    %2127 = vmatpush1.msra.mxu0 0.0
    %2128 = vmatprep.subr.mxu0 0.0
    %2129 = vmatpush1.msra.mxu0 0.0
    %2130 = vmatprep.subr.mxu0 0.0
    %2131 = vmatpush1.msra.mxu0 0.0
    %2132 = vmatprep.subr.mxu0 0.0
    %2133 = vmatpush1.msra.mxu0 0.0
    %2134 = vmatprep.subr.mxu0 0.0
    %2135 = vmatpush1.msra.mxu0 0.0
    %2136 = vmatprep.subr.mxu0 0.0
    %2137 = vmatpush1.msra.mxu0 0.0
    %2138 = vmatprep.subr.mxu0 0.0
    %2139 = vmatpush1.msra.mxu0 0.0
    %2140 = vmatprep.subr.mxu0 0.0
    %2141 = vmatpush1.msra.mxu0 0.0
    %2142 = vmatprep.subr.mxu0 0.0
    %2143 = vmatpush1.msra.mxu0 0.0
    %2144 = vmatprep.subr.mxu0 %v1843
    %2145 = vmatpush1.msra.mxu0 %v1842
    %2146 = vmatprep.subr.mxu0 %v1833
    %2147 = vmatpush1.msra.mxu0 %v1832
    %2148 = vmatprep.subr.mxu0 0.0
    %2149 = vmatpush2.msra.mxu0 0.0
    %2150 = vmatprep.subr.mxu0 0.0
    %2151 = vmatpush2.msra.mxu0 0.0
    %2152 = vmatprep.subr.mxu0 0.0
    %2153 = vmatpush2.msra.mxu0 0.0
    %2154 = vmatprep.subr.mxu0 0.0
    %2155 = vmatpush2.msra.mxu0 0.0
    %2156 = vmatprep.subr.mxu0 0.0
    %2157 = vmatpush2.msra.mxu0 0.0
    %2158 = vmatprep.subr.mxu0 0.0
    %2159 = vmatpush2.msra.mxu0 0.0
    %2160 = vmatprep.subr.mxu0 0.0
    %2161 = vmatpush2.msra.mxu0 0.0
    %2162 = vmatprep.subr.mxu0 0.0
    %2163 = vmatpush2.msra.mxu0 0.0
    %2164 = vmatprep.subr.mxu0 0.0
    %2165 = vmatpush2.msra.mxu0 0.0
    %2166 = vmatprep.subr.mxu0 0.0
    %2167 = vmatpush2.msra.mxu0 0.0
    %2168 = vmatprep.subr.mxu0 0.0
    %2169 = vmatpush2.msra.mxu0 0.0
    %2170 = vmatprep.subr.mxu0 0.0
    %2171 = vmatpush2.msra.mxu0 0.0
    %2172 = vmatprep.subr.mxu0 0.0
    %2173 = vmatpush2.msra.mxu0 0.0
    %2174 = vmatprep.subr.mxu0 0.0
    %2175 = vmatpush2.msra.mxu0 0.0
    %2176 = vmatprep.subr.mxu0 0.0
    %2177 = vmatpush2.msra.mxu0 0.0
    %2178 = vmatprep.subr.mxu0 0.0
    %2179 = vmatpush2.msra.mxu0 0.0
    %2180 = vmatprep.mubr.f32.mxu0 0.0
    %2181 = vmatmul.mubr.f32.gmra.mxu0 %v1901
    %v2182 = vpop.f32.mrf.mxu0
    %v2183 = vadd.f32 %v1877, %v2182
    %v2184 = vpop.f32.mrf.mxu0
    %v2185 = vadd.f32 %v1881, %v2184
    %2186 = vdwg.mxu0
    %2187 = vmatprep.subr.mxu0 0.0
    %2188 = vmatpush1.msra.mxu0 0.0
    %2189 = vmatprep.subr.mxu0 0.0
    %2190 = vmatpush1.msra.mxu0 0.0
    %2191 = vmatprep.subr.mxu0 0.0
    %2192 = vmatpush1.msra.mxu0 0.0
    %2193 = vmatprep.subr.mxu0 0.0
    %2194 = vmatpush1.msra.mxu0 0.0
    %2195 = vmatprep.subr.mxu0 0.0
    %2196 = vmatpush1.msra.mxu0 0.0
    %2197 = vmatprep.subr.mxu0 0.0
    %2198 = vmatpush1.msra.mxu0 0.0
    %2199 = vmatprep.subr.mxu0 0.0
    %2200 = vmatpush1.msra.mxu0 0.0
    %2201 = vmatprep.subr.mxu0 0.0
    %2202 = vmatpush1.msra.mxu0 0.0
    %2203 = vmatprep.subr.mxu0 0.0
    %2204 = vmatpush1.msra.mxu0 0.0
    %2205 = vmatprep.subr.mxu0 0.0
    %2206 = vmatpush1.msra.mxu0 0.0
    %2207 = vmatprep.subr.mxu0 0.0
    %2208 = vmatpush1.msra.mxu0 0.0
    %2209 = vmatprep.subr.mxu0 0.0
    %2210 = vmatpush1.msra.mxu0 0.0
    %2211 = vmatprep.subr.mxu0 0.0
    %2212 = vmatpush1.msra.mxu0 0.0
    %2213 = vmatprep.subr.mxu0 0.0
    %2214 = vmatpush1.msra.mxu0 0.0
    %2215 = vmatprep.subr.mxu0 %v1845
    %2216 = vmatpush1.msra.mxu0 %v1844
    %2217 = vmatprep.subr.mxu0 %v1835
    %2218 = vmatpush1.msra.mxu0 %v1834
    %2219 = vmatprep.subr.mxu0 0.0
    %2220 = vmatpush2.msra.mxu0 0.0
    %2221 = vmatprep.subr.mxu0 0.0
    %2222 = vmatpush2.msra.mxu0 0.0
    %2223 = vmatprep.subr.mxu0 0.0
    %2224 = vmatpush2.msra.mxu0 0.0
    %2225 = vmatprep.subr.mxu0 0.0
    %2226 = vmatpush2.msra.mxu0 0.0
    %2227 = vmatprep.subr.mxu0 0.0
    %2228 = vmatpush2.msra.mxu0 0.0
    %2229 = vmatprep.subr.mxu0 0.0
    %2230 = vmatpush2.msra.mxu0 0.0
    %2231 = vmatprep.subr.mxu0 0.0
    %2232 = vmatpush2.msra.mxu0 0.0
    %2233 = vmatprep.subr.mxu0 0.0
    %2234 = vmatpush2.msra.mxu0 0.0
    %2235 = vmatprep.subr.mxu0 0.0
    %2236 = vmatpush2.msra.mxu0 0.0
    %2237 = vmatprep.subr.mxu0 0.0
    %2238 = vmatpush2.msra.mxu0 0.0
    %2239 = vmatprep.subr.mxu0 0.0
    %2240 = vmatpush2.msra.mxu0 0.0
    %2241 = vmatprep.subr.mxu0 0.0
    %2242 = vmatpush2.msra.mxu0 0.0
    %2243 = vmatprep.subr.mxu0 0.0
    %2244 = vmatpush2.msra.mxu0 0.0
    %2245 = vmatprep.subr.mxu0 0.0
    %2246 = vmatpush2.msra.mxu0 0.0
    %2247 = vmatprep.subr.mxu0 0.0
    %2248 = vmatpush2.msra.mxu0 0.0
    %2249 = vmatprep.subr.mxu0 0.0
    %2250 = vmatpush2.msra.mxu0 0.0
    %2251 = vmatprep.mubr.f32.mxu0 0.0
    %2252 = vmatmul.mubr.f32.gmra.mxu0 %v1901
    %v2253 = vpop.f32.mrf.mxu0
    %v2254 = vadd.f32 %v1885, %v2253
    %v2255 = vpop.f32.mrf.mxu0
    %v2256 = vadd.f32 %v1889, %v2255
    %2257 = vdwg.mxu0
    %v2258 = vmax.f32 %v1970, 0.0
    %v2259 = vmax.f32 %v1972, 0.0
    %v2260 = vmax.f32 %v2041, 0.0
    %v2261 = vmax.f32 %v2043, 0.0
    %v2262 = vmax.f32 %v2112, 0.0
    %v2263 = vmax.f32 %v2114, 0.0
    %v2264 = vmax.f32 %v2183, 0.0
    %v2265 = vmax.f32 %v2185, 0.0
    %v2266 = vmax.f32 %v2254, 0.0
    %v2267 = vmax.f32 %v2256, 0.0
    %v2268 = vld [vmem:[%s13] sm:$0xff]
    %v2269 = vld [vmem:[%s13 + $0x8] sm:$0xff]
    %v2270 = vld [vmem:[%s13 + $0x10] sm:$0xff]
    %v2271 = vld [vmem:[%s13 + $0x18] sm:$0xff]
    %v2272 = vld [vmem:[%s13 + $0x20] sm:$0xff]
    %v2273 = vld [vmem:[%s13 + $0x28] sm:$0xff]
    %v2274 = vld [vmem:[%s13 + $0x30] sm:$0xff]
    %v2275 = vld [vmem:[%s13 + $0x38] sm:$0xff]
    %v2276 = vld [vmem:[%s13 + $0x40] sm:$0xff]
    %v2277 = vld [vmem:[%s13 + $0x48] sm:$0xff]
    %v2278 = vld [vmem:[%s13 + $0x50] sm:$0xff]
    %v2279 = vld [vmem:[%s13 + $0x58] sm:$0xff]
    %v2280 = vld [vmem:[%s13 + $0x60] sm:$0xff]
    %v2281 = vld [vmem:[%s13 + $0x68] sm:$0xff]
    %v2282 = vld [vmem:[%s13 + $0x70] sm:$0xff]
    %v2283 = vld [vmem:[%s13 + $0x78] sm:$0xff]
    %v2284 = vld [vmem:[%s13 + $0x80] sm:$0xff]
    %v2285 = vld [vmem:[%s13 + $0x88] sm:$0xff]
    %v2286 = vld [vmem:[%s13 + $0x90] sm:$0xff]
    %v2287 = vld [vmem:[%s13 + $0x98] sm:$0xff]
    %v2288 = vld [vmem:[%s13 + $0xa0] sm:$0xff]
    %v2289 = vld [vmem:[%s13 + $0xa8] sm:$0xff]
    %v2290 = vld [vmem:[%s13 + $0xb0] sm:$0xff]
    %v2291 = vld [vmem:[%s13 + $0xb8] sm:$0xff]
    %v2292 = vld [vmem:[%s13 + $0xc0] sm:$0xff]
    %v2293 = vld [vmem:[%s13 + $0xc8] sm:$0xff]
    %v2294 = vld [vmem:[%s13 + $0xd0] sm:$0xff]
    %v2295 = vld [vmem:[%s13 + $0xd8] sm:$0xff]
    %v2296 = vld [vmem:[%s13 + $0xe0] sm:$0xff]
    %v2297 = vld [vmem:[%s13 + $0xe8] sm:$0xff]
    %v2298 = vld [vmem:[%s13 + $0xf0] sm:$0xff]
    %v2299 = vld [vmem:[%s13 + $0xf8] sm:$0xff]
    %v2300 = vld [vmem:[%s13 + $0x100] sm:$0xff]
    %v2301 = vld [vmem:[%s13 + $0x108] sm:$0xff]
    %v2302 = vld [vmem:[%s13 + $0x110] sm:$0xff]
    %v2303 = vld [vmem:[%s13 + $0x118] sm:$0xff]
    %v2304 = vld [vmem:[%s13 + $0x120] sm:$0xff]
    %v2305 = vld [vmem:[%s13 + $0x128] sm:$0xff]
    %v2306 = vld [vmem:[%s13 + $0x130] sm:$0xff]
    %v2307 = vld [vmem:[%s13 + $0x138] sm:$0xff]
    %v2308 = vld [vmem:[%s13 + $0x140] sm:$0xff]
    %v2309 = vld [vmem:[%s13 + $0x148] sm:$0xff]
    %v2310 = vld [vmem:[%s13 + $0x150] sm:$0xff]
    %v2311 = vld [vmem:[%s13 + $0x158] sm:$0xff]
    %v2312 = vld [vmem:[%s13 + $0x160] sm:$0xff]
    %v2313 = vld [vmem:[%s13 + $0x168] sm:$0xff]
    %v2314 = vld [vmem:[%s13 + $0x170] sm:$0xff]
    %v2315 = vld [vmem:[%s13 + $0x178] sm:$0xff]
    %v2316 = vld [vmem:[%s13 + $0x180] sm:$0xff]
    %v2317 = vld [vmem:[%s13 + $0x188] sm:$0xff]
    %v2318 = vld [vmem:[%s13 + $0x190] sm:$0xff]
    %v2319 = vld [vmem:[%s13 + $0x198] sm:$0xff]
    %v2320 = vld [vmem:[%s13 + $0x1a0] sm:$0xff]
    %v2321 = vld [vmem:[%s13 + $0x1a8] sm:$0xff]
    %v2322 = vld [vmem:[%s13 + $0x1b0] sm:$0xff]
    %v2323 = vld [vmem:[%s13 + $0x1b8] sm:$0xff]
    %v2324 = vld [vmem:[%s13 + $0x1c0] sm:$0xff]
    %v2325 = vld [vmem:[%s13 + $0x1c8] sm:$0xff]
    %v2326 = vld [vmem:[%s13 + $0x1d0] sm:$0xff]
    %v2327 = vld [vmem:[%s13 + $0x1d8] sm:$0xff]
    %v2328 = vld [vmem:[%s13 + $0x1e0] sm:$0xff]
    %v2329 = vld [vmem:[%s13 + $0x1e8] sm:$0xff]
    %v2330 = vld [vmem:[%s13 + $0x1f0] sm:$0xff]
    %v2331 = vld [vmem:[%s13 + $0x1f8] sm:$0xff]
    %v2332 = vld [vmem:[%s13 + $0x200] sm:$0xff]
    %v2333 = vld [vmem:[%s13 + $0x208] sm:$0xff]
    %v2334 = vld [vmem:[%s13 + $0x210] sm:$0xff]
    %v2335 = vld [vmem:[%s13 + $0x218] sm:$0xff]
    %v2336 = vld [vmem:[%s13 + $0x220] sm:$0xff]
    %v2337 = vld [vmem:[%s13 + $0x228] sm:$0xff]
    %v2338 = vld [vmem:[%s13 + $0x230] sm:$0xff]
    %v2339 = vld [vmem:[%s13 + $0x238] sm:$0xff]
    %v2340 = vld [vmem:[%s13 + $0x240] sm:$0xff]
    %v2341 = vld [vmem:[%s13 + $0x248] sm:$0xff]
    %v2342 = vld [vmem:[%s13 + $0x250] sm:$0xff]
    %v2343 = vld [vmem:[%s13 + $0x258] sm:$0xff]
    %v2344 = vld [vmem:[%s13 + $0x260] sm:$0xff]
    %v2345 = vld [vmem:[%s13 + $0x268] sm:$0xff]
    %v2346 = vld [vmem:[%s13 + $0x270] sm:$0xff]
    %v2347 = vld [vmem:[%s13 + $0x278] sm:$0xff]
    %v2348 = vld [vmem:[%s13 + $0x280] sm:$0xff]
    %v2349 = vld [vmem:[%s13 + $0x288] sm:$0xff]
    %v2350 = vld [vmem:[%s13 + $0x290] sm:$0xff]
    %v2351 = vld [vmem:[%s13 + $0x298] sm:$0xff]
    %v2352 = vld [vmem:[%s13 + $0x2a0] sm:$0xff]
    %v2353 = vld [vmem:[%s13 + $0x2a8] sm:$0xff]
    %v2354 = vld [vmem:[%s13 + $0x2b0] sm:$0xff]
    %v2355 = vld [vmem:[%s13 + $0x2b8] sm:$0xff]
    %v2356 = vld [vmem:[%s13 + $0x2c0] sm:$0xff]
    %v2357 = vld [vmem:[%s13 + $0x2c8] sm:$0xff]
    %v2358 = vld [vmem:[%s13 + $0x2d0] sm:$0xff]
    %v2359 = vld [vmem:[%s13 + $0x2d8] sm:$0xff]
    %v2360 = vld [vmem:[%s13 + $0x2e0] sm:$0xff]
    %v2361 = vld [vmem:[%s13 + $0x2e8] sm:$0xff]
    %v2362 = vld [vmem:[%s13 + $0x2f0] sm:$0xff]
    %v2363 = vld [vmem:[%s13 + $0x2f8] sm:$0xff]
    %v2364 = vld [vmem:[%s13 + $0x300] sm:$0xff]
    %v2365 = vld [vmem:[%s13 + $0x308] sm:$0xff]
    %v2366 = vld [vmem:[%s13 + $0x310] sm:$0xff]
    %v2367 = vld [vmem:[%s13 + $0x318] sm:$0xff]
    %v2368 = vld [vmem:[%s13 + $0x320] sm:$0xff]
    %v2369 = vld [vmem:[%s13 + $0x328] sm:$0xff]
    %v2370 = vld [vmem:[%s13 + $0x330] sm:$0xff]
    %v2371 = vld [vmem:[%s13 + $0x338] sm:$0xff]
    %v2372 = vld [vmem:[%s13 + $0x340] sm:$0xff]
    %v2373 = vld [vmem:[%s13 + $0x348] sm:$0xff]
    %v2374 = vld [vmem:[%s13 + $0x350] sm:$0xff]
    %v2375 = vld [vmem:[%s13 + $0x358] sm:$0xff]
    %v2376 = vld [vmem:[%s13 + $0x360] sm:$0xff]
    %v2377 = vld [vmem:[%s13 + $0x368] sm:$0xff]
    %v2378 = vld [vmem:[%s13 + $0x370] sm:$0xff]
    %v2379 = vld [vmem:[%s13 + $0x378] sm:$0xff]
    %v2380 = vld [vmem:[%s13 + $0x380] sm:$0xff]
    %v2381 = vld [vmem:[%s13 + $0x388] sm:$0xff]
    %v2382 = vld [vmem:[%s13 + $0x390] sm:$0xff]
    %v2383 = vld [vmem:[%s13 + $0x398] sm:$0xff]
    %v2384 = vld [vmem:[%s13 + $0x3a0] sm:$0xff]
    %v2385 = vld [vmem:[%s13 + $0x3a8] sm:$0xff]
    %v2386 = vld [vmem:[%s13 + $0x3b0] sm:$0xff]
    %v2387 = vld [vmem:[%s13 + $0x3b8] sm:$0xff]
    %v2388 = vld [vmem:[%s13 + $0x3c0] sm:$0xff]
    %v2389 = vld [vmem:[%s13 + $0x3c8] sm:$0xff]
    %v2390 = vld [vmem:[%s13 + $0x3d0] sm:$0xff]
    %v2391 = vld [vmem:[%s13 + $0x3d8] sm:$0xff]
    %v2392 = vld [vmem:[%s13 + $0x3e0] sm:$0xff]
    %v2393 = vld [vmem:[%s13 + $0x3e8] sm:$0xff]
    %v2394 = vld [vmem:[%s13 + $0x3f0] sm:$0xff]
    %v2395 = vld [vmem:[%s13 + $0x3f8] sm:$0xff]
    %v2396 = vld [vmem:[%s13 + $0x400] sm:$0xff]
    %v2397 = vld [vmem:[%s13 + $0x408] sm:$0xff]
    %v2398 = vld [vmem:[%s13 + $0x410] sm:$0xff]
    %v2399 = vld [vmem:[%s13 + $0x418] sm:$0xff]
    %v2400 = vld [vmem:[%s13 + $0x420] sm:$0xff]
    %v2401 = vld [vmem:[%s13 + $0x428] sm:$0xff]
    %v2402 = vld [vmem:[%s13 + $0x430] sm:$0xff]
    %v2403 = vld [vmem:[%s13 + $0x438] sm:$0xff]
    %v2404 = vld [vmem:[%s13 + $0x440] sm:$0xff]
    %v2405 = vld [vmem:[%s13 + $0x448] sm:$0xff]
    %v2406 = vld [vmem:[%s13 + $0x450] sm:$0xff]
    %v2407 = vld [vmem:[%s13 + $0x458] sm:$0xff]
    %v2408 = vld [vmem:[%s13 + $0x460] sm:$0xff]
    %v2409 = vld [vmem:[%s13 + $0x468] sm:$0xff]
    %v2410 = vld [vmem:[%s13 + $0x470] sm:$0xff]
    %v2411 = vld [vmem:[%s13 + $0x478] sm:$0xff]
    %v2412 = vld [vmem:[%s13 + $0x480] sm:$0xff]
    %v2413 = vld [vmem:[%s13 + $0x488] sm:$0xff]
    %v2414 = vld [vmem:[%s13 + $0x490] sm:$0xff]
    %v2415 = vld [vmem:[%s13 + $0x498] sm:$0xff]
    %v2416 = vld [vmem:[%s13 + $0x4a0] sm:$0xff]
    %v2417 = vld [vmem:[%s13 + $0x4a8] sm:$0xff]
    %v2418 = vld [vmem:[%s13 + $0x4b0] sm:$0xff]
    %v2419 = vld [vmem:[%s13 + $0x4b8] sm:$0xff]
    %v2420 = vld [vmem:[%s13 + $0x4c0] sm:$0xff]
    %v2421 = vld [vmem:[%s13 + $0x4c8] sm:$0xff]
    %v2422 = vld [vmem:[%s13 + $0x4d0] sm:$0xff]
    %v2423 = vld [vmem:[%s13 + $0x4d8] sm:$0xff]
    %v2424 = vld [vmem:[%s13 + $0x4e0] sm:$0xff]
    %v2425 = vld [vmem:[%s13 + $0x4e8] sm:$0xff]
    %v2426 = vld [vmem:[%s13 + $0x4f0] sm:$0xff]
    %v2427 = vld [vmem:[%s13 + $0x4f8] sm:$0xff]
    %v2428 = vld [vmem:[%s14] sm:$0x1]
    %v2430 = vlaneseq
    %v2431 = vshrl.u32 %v2430, 7
    %v2432 = vsub.s32 0, %v2431
    %v2433 = vrot.slane %v2428, %v2432
    %2435 = vmatprep.subr.mxu0 0.0
    %2436 = vmatpush1.msra.mxu0 %v2283
    %2437 = vmatprep.subr.mxu0 0.0
    %2438 = vmatpush1.msra.mxu0 %v2282
    %2439 = vmatprep.subr.mxu0 0.0
    %2440 = vmatpush1.msra.mxu0 %v2281
    %2441 = vmatprep.subr.mxu0 0.0
    %2442 = vmatpush1.msra.mxu0 %v2280
    %2443 = vmatprep.subr.mxu0 0.0
    %2444 = vmatpush1.msra.mxu0 %v2279
    %2445 = vmatprep.subr.mxu0 0.0
    %2446 = vmatpush1.msra.mxu0 %v2278
    %2447 = vmatprep.subr.mxu0 0.0
    %2448 = vmatpush1.msra.mxu0 %v2277
    %2449 = vmatprep.subr.mxu0 0.0
    %2450 = vmatpush1.msra.mxu0 %v2276
    %2451 = vmatprep.subr.mxu0 0.0
    %2452 = vmatpush1.msra.mxu0 %v2275
    %2453 = vmatprep.subr.mxu0 0.0
    %2454 = vmatpush1.msra.mxu0 %v2274
    %2455 = vmatprep.subr.mxu0 0.0
    %2456 = vmatpush1.msra.mxu0 %v2273
    %2457 = vmatprep.subr.mxu0 0.0
    %2458 = vmatpush1.msra.mxu0 %v2272
    %2459 = vmatprep.subr.mxu0 0.0
    %2460 = vmatpush1.msra.mxu0 %v2271
    %2461 = vmatprep.subr.mxu0 0.0
    %2462 = vmatpush1.msra.mxu0 %v2270
    %2463 = vmatprep.subr.mxu0 0.0
    %2464 = vmatpush1.msra.mxu0 %v2269
    %2465 = vmatprep.subr.mxu0 0.0
    %2466 = vmatpush1.msra.mxu0 %v2268
    %2467 = vmatprep.subr.mxu0 0.0
    %2468 = vmatpush2.msra.mxu0 %v2299
    %2469 = vmatprep.subr.mxu0 0.0
    %2470 = vmatpush2.msra.mxu0 %v2298
    %2471 = vmatprep.subr.mxu0 0.0
    %2472 = vmatpush2.msra.mxu0 %v2297
    %2473 = vmatprep.subr.mxu0 0.0
    %2474 = vmatpush2.msra.mxu0 %v2296
    %2475 = vmatprep.subr.mxu0 0.0
    %2476 = vmatpush2.msra.mxu0 %v2295
    %2477 = vmatprep.subr.mxu0 0.0
    %2478 = vmatpush2.msra.mxu0 %v2294
    %2479 = vmatprep.subr.mxu0 0.0
    %2480 = vmatpush2.msra.mxu0 %v2293
    %2481 = vmatprep.subr.mxu0 0.0
    %2482 = vmatpush2.msra.mxu0 %v2292
    %2483 = vmatprep.subr.mxu0 0.0
    %2484 = vmatpush2.msra.mxu0 %v2291
    %2485 = vmatprep.subr.mxu0 0.0
    %2486 = vmatpush2.msra.mxu0 %v2290
    %2487 = vmatprep.subr.mxu0 0.0
    %2488 = vmatpush2.msra.mxu0 %v2289
    %2489 = vmatprep.subr.mxu0 0.0
    %2490 = vmatpush2.msra.mxu0 %v2288
    %2491 = vmatprep.subr.mxu0 0.0
    %2492 = vmatpush2.msra.mxu0 %v2287
    %2493 = vmatprep.subr.mxu0 0.0
    %2494 = vmatpush2.msra.mxu0 %v2286
    %2495 = vmatprep.subr.mxu0 0.0
    %2496 = vmatpush2.msra.mxu0 %v2285
    %2497 = vmatprep.subr.mxu0 0.0
    %2498 = vmatpush2.msra.mxu0 %v2284
    %2499 = vmatprep.mubr.f32.mxu0 %v2259
    %2500 = vmatmul.mubr.f32.gmra.mxu0 %v2258
    %v2501 = vpop.f32.mrf.mxu0
    %v2502 = vadd.f32 %v2433, %v2501
    %v2503 = vpop.f32.mrf.mxu0
    %2504 = vdwg.mxu0
    %2505 = vmatprep.subr.mxu0 0.0
    %2506 = vmatpush1.msra.mxu0 %v2315
    %2507 = vmatprep.subr.mxu0 0.0
    %2508 = vmatpush1.msra.mxu0 %v2314
    %2509 = vmatprep.subr.mxu0 0.0
    %2510 = vmatpush1.msra.mxu0 %v2313
    %2511 = vmatprep.subr.mxu0 0.0
    %2512 = vmatpush1.msra.mxu0 %v2312
    %2513 = vmatprep.subr.mxu0 0.0
    %2514 = vmatpush1.msra.mxu0 %v2311
    %2515 = vmatprep.subr.mxu0 0.0
    %2516 = vmatpush1.msra.mxu0 %v2310
    %2517 = vmatprep.subr.mxu0 0.0
    %2518 = vmatpush1.msra.mxu0 %v2309
    %2519 = vmatprep.subr.mxu0 0.0
    %2520 = vmatpush1.msra.mxu0 %v2308
    %2521 = vmatprep.subr.mxu0 0.0
    %2522 = vmatpush1.msra.mxu0 %v2307
    %2523 = vmatprep.subr.mxu0 0.0
    %2524 = vmatpush1.msra.mxu0 %v2306
    %2525 = vmatprep.subr.mxu0 0.0
    %2526 = vmatpush1.msra.mxu0 %v2305
    %2527 = vmatprep.subr.mxu0 0.0
    %2528 = vmatpush1.msra.mxu0 %v2304
    %2529 = vmatprep.subr.mxu0 0.0
    %2530 = vmatpush1.msra.mxu0 %v2303
    %2531 = vmatprep.subr.mxu0 0.0
    %2532 = vmatpush1.msra.mxu0 %v2302
    %2533 = vmatprep.subr.mxu0 0.0
    %2534 = vmatpush1.msra.mxu0 %v2301
    %2535 = vmatprep.subr.mxu0 0.0
    %2536 = vmatpush1.msra.mxu0 %v2300
    %2537 = vmatprep.subr.mxu0 0.0
    %2538 = vmatpush2.msra.mxu0 %v2331
    %2539 = vmatprep.subr.mxu0 0.0
    %2540 = vmatpush2.msra.mxu0 %v2330
    %2541 = vmatprep.subr.mxu0 0.0
    %2542 = vmatpush2.msra.mxu0 %v2329
    %2543 = vmatprep.subr.mxu0 0.0
    %2544 = vmatpush2.msra.mxu0 %v2328
    %2545 = vmatprep.subr.mxu0 0.0
    %2546 = vmatpush2.msra.mxu0 %v2327
    %2547 = vmatprep.subr.mxu0 0.0
    %2548 = vmatpush2.msra.mxu0 %v2326
    %2549 = vmatprep.subr.mxu0 0.0
    %2550 = vmatpush2.msra.mxu0 %v2325
    %2551 = vmatprep.subr.mxu0 0.0
    %2552 = vmatpush2.msra.mxu0 %v2324
    %2553 = vmatprep.subr.mxu0 0.0
    %2554 = vmatpush2.msra.mxu0 %v2323
    %2555 = vmatprep.subr.mxu0 0.0
    %2556 = vmatpush2.msra.mxu0 %v2322
    %2557 = vmatprep.subr.mxu0 0.0
    %2558 = vmatpush2.msra.mxu0 %v2321
    %2559 = vmatprep.subr.mxu0 0.0
    %2560 = vmatpush2.msra.mxu0 %v2320
    %2561 = vmatprep.subr.mxu0 0.0
    %2562 = vmatpush2.msra.mxu0 %v2319
    %2563 = vmatprep.subr.mxu0 0.0
    %2564 = vmatpush2.msra.mxu0 %v2318
    %2565 = vmatprep.subr.mxu0 0.0
    %2566 = vmatpush2.msra.mxu0 %v2317
    %2567 = vmatprep.subr.mxu0 0.0
    %2568 = vmatpush2.msra.mxu0 %v2316
    %2569 = vmatprep.mubr.f32.mxu0 %v2261
    %2570 = vmatmul.mubr.f32.gmra.mxu0 %v2260
    %v2571 = vpop.f32.mrf.mxu0
    %v2572 = vadd.f32 %v2502, %v2571
    %v2573 = vpop.f32.mrf.mxu0
    %2574 = vdwg.mxu0
    %2575 = vmatprep.subr.mxu0 0.0
    %2576 = vmatpush1.msra.mxu0 %v2347
    %2577 = vmatprep.subr.mxu0 0.0
    %2578 = vmatpush1.msra.mxu0 %v2346
    %2579 = vmatprep.subr.mxu0 0.0
    %2580 = vmatpush1.msra.mxu0 %v2345
    %2581 = vmatprep.subr.mxu0 0.0
    %2582 = vmatpush1.msra.mxu0 %v2344
    %2583 = vmatprep.subr.mxu0 0.0
    %2584 = vmatpush1.msra.mxu0 %v2343
    %2585 = vmatprep.subr.mxu0 0.0
    %2586 = vmatpush1.msra.mxu0 %v2342
    %2587 = vmatprep.subr.mxu0 0.0
    %2588 = vmatpush1.msra.mxu0 %v2341
    %2589 = vmatprep.subr.mxu0 0.0
    %2590 = vmatpush1.msra.mxu0 %v2340
    %2591 = vmatprep.subr.mxu0 0.0
    %2592 = vmatpush1.msra.mxu0 %v2339
    %2593 = vmatprep.subr.mxu0 0.0
    %2594 = vmatpush1.msra.mxu0 %v2338
    %2595 = vmatprep.subr.mxu0 0.0
    %2596 = vmatpush1.msra.mxu0 %v2337
    %2597 = vmatprep.subr.mxu0 0.0
    %2598 = vmatpush1.msra.mxu0 %v2336
    %2599 = vmatprep.subr.mxu0 0.0
    %2600 = vmatpush1.msra.mxu0 %v2335
    %2601 = vmatprep.subr.mxu0 0.0
    %2602 = vmatpush1.msra.mxu0 %v2334
    %2603 = vmatprep.subr.mxu0 0.0
    %2604 = vmatpush1.msra.mxu0 %v2333
    %2605 = vmatprep.subr.mxu0 0.0
    %2606 = vmatpush1.msra.mxu0 %v2332
    %2607 = vmatprep.subr.mxu0 0.0
    %2608 = vmatpush2.msra.mxu0 %v2363
    %2609 = vmatprep.subr.mxu0 0.0
    %2610 = vmatpush2.msra.mxu0 %v2362
    %2611 = vmatprep.subr.mxu0 0.0
    %2612 = vmatpush2.msra.mxu0 %v2361
    %2613 = vmatprep.subr.mxu0 0.0
    %2614 = vmatpush2.msra.mxu0 %v2360
    %2615 = vmatprep.subr.mxu0 0.0
    %2616 = vmatpush2.msra.mxu0 %v2359
    %2617 = vmatprep.subr.mxu0 0.0
    %2618 = vmatpush2.msra.mxu0 %v2358
    %2619 = vmatprep.subr.mxu0 0.0
    %2620 = vmatpush2.msra.mxu0 %v2357
    %2621 = vmatprep.subr.mxu0 0.0
    %2622 = vmatpush2.msra.mxu0 %v2356
    %2623 = vmatprep.subr.mxu0 0.0
    %2624 = vmatpush2.msra.mxu0 %v2355
    %2625 = vmatprep.subr.mxu0 0.0
    %2626 = vmatpush2.msra.mxu0 %v2354
    %2627 = vmatprep.subr.mxu0 0.0
    %2628 = vmatpush2.msra.mxu0 %v2353
    %2629 = vmatprep.subr.mxu0 0.0
    %2630 = vmatpush2.msra.mxu0 %v2352
    %2631 = vmatprep.subr.mxu0 0.0
    %2632 = vmatpush2.msra.mxu0 %v2351
    %2633 = vmatprep.subr.mxu0 0.0
    %2634 = vmatpush2.msra.mxu0 %v2350
    %2635 = vmatprep.subr.mxu0 0.0
    %2636 = vmatpush2.msra.mxu0 %v2349
    %2637 = vmatprep.subr.mxu0 0.0
    %2638 = vmatpush2.msra.mxu0 %v2348
    %2639 = vmatprep.mubr.f32.mxu0 %v2263
    %2640 = vmatmul.mubr.f32.gmra.mxu0 %v2262
    %v2641 = vpop.f32.mrf.mxu0
    %v2642 = vadd.f32 %v2572, %v2641
    %v2643 = vpop.f32.mrf.mxu0
    %2644 = vdwg.mxu0
    %2645 = vmatprep.subr.mxu0 0.0
    %2646 = vmatpush1.msra.mxu0 %v2379
    %2647 = vmatprep.subr.mxu0 0.0
    %2648 = vmatpush1.msra.mxu0 %v2378
    %2649 = vmatprep.subr.mxu0 0.0
    %2650 = vmatpush1.msra.mxu0 %v2377
    %2651 = vmatprep.subr.mxu0 0.0
    %2652 = vmatpush1.msra.mxu0 %v2376
    %2653 = vmatprep.subr.mxu0 0.0
    %2654 = vmatpush1.msra.mxu0 %v2375
    %2655 = vmatprep.subr.mxu0 0.0
    %2656 = vmatpush1.msra.mxu0 %v2374
    %2657 = vmatprep.subr.mxu0 0.0
    %2658 = vmatpush1.msra.mxu0 %v2373
    %2659 = vmatprep.subr.mxu0 0.0
    %2660 = vmatpush1.msra.mxu0 %v2372
    %2661 = vmatprep.subr.mxu0 0.0
    %2662 = vmatpush1.msra.mxu0 %v2371
    %2663 = vmatprep.subr.mxu0 0.0
    %2664 = vmatpush1.msra.mxu0 %v2370
    %2665 = vmatprep.subr.mxu0 0.0
    %2666 = vmatpush1.msra.mxu0 %v2369
    %2667 = vmatprep.subr.mxu0 0.0
    %2668 = vmatpush1.msra.mxu0 %v2368
    %2669 = vmatprep.subr.mxu0 0.0
    %2670 = vmatpush1.msra.mxu0 %v2367
    %2671 = vmatprep.subr.mxu0 0.0
    %2672 = vmatpush1.msra.mxu0 %v2366
    %2673 = vmatprep.subr.mxu0 0.0
    %2674 = vmatpush1.msra.mxu0 %v2365
    %2675 = vmatprep.subr.mxu0 0.0
    %2676 = vmatpush1.msra.mxu0 %v2364
    %2677 = vmatprep.subr.mxu0 0.0
    %2678 = vmatpush2.msra.mxu0 %v2395
    %2679 = vmatprep.subr.mxu0 0.0
    %2680 = vmatpush2.msra.mxu0 %v2394
    %2681 = vmatprep.subr.mxu0 0.0
    %2682 = vmatpush2.msra.mxu0 %v2393
    %2683 = vmatprep.subr.mxu0 0.0
    %2684 = vmatpush2.msra.mxu0 %v2392
    %2685 = vmatprep.subr.mxu0 0.0
    %2686 = vmatpush2.msra.mxu0 %v2391
    %2687 = vmatprep.subr.mxu0 0.0
    %2688 = vmatpush2.msra.mxu0 %v2390
    %2689 = vmatprep.subr.mxu0 0.0
    %2690 = vmatpush2.msra.mxu0 %v2389
    %2691 = vmatprep.subr.mxu0 0.0
    %2692 = vmatpush2.msra.mxu0 %v2388
    %2693 = vmatprep.subr.mxu0 0.0
    %2694 = vmatpush2.msra.mxu0 %v2387
    %2695 = vmatprep.subr.mxu0 0.0
    %2696 = vmatpush2.msra.mxu0 %v2386
    %2697 = vmatprep.subr.mxu0 0.0
    %2698 = vmatpush2.msra.mxu0 %v2385
    %2699 = vmatprep.subr.mxu0 0.0
    %2700 = vmatpush2.msra.mxu0 %v2384
    %2701 = vmatprep.subr.mxu0 0.0
    %2702 = vmatpush2.msra.mxu0 %v2383
    %2703 = vmatprep.subr.mxu0 0.0
    %2704 = vmatpush2.msra.mxu0 %v2382
    %2705 = vmatprep.subr.mxu0 0.0
    %2706 = vmatpush2.msra.mxu0 %v2381
    %2707 = vmatprep.subr.mxu0 0.0
    %2708 = vmatpush2.msra.mxu0 %v2380
    %2709 = vmatprep.mubr.f32.mxu0 %v2265
    %2710 = vmatmul.mubr.f32.gmra.mxu0 %v2264
    %v2711 = vpop.f32.mrf.mxu0
    %v2712 = vadd.f32 %v2642, %v2711
    %v2713 = vpop.f32.mrf.mxu0
    %2714 = vdwg.mxu0
    %2715 = vmatprep.subr.mxu0 0.0
    %2716 = vmatpush1.msra.mxu0 %v2411
    %2717 = vmatprep.subr.mxu0 0.0
    %2718 = vmatpush1.msra.mxu0 %v2410
    %2719 = vmatprep.subr.mxu0 0.0
    %2720 = vmatpush1.msra.mxu0 %v2409
    %2721 = vmatprep.subr.mxu0 0.0
    %2722 = vmatpush1.msra.mxu0 %v2408
    %2723 = vmatprep.subr.mxu0 0.0
    %2724 = vmatpush1.msra.mxu0 %v2407
    %2725 = vmatprep.subr.mxu0 0.0
    %2726 = vmatpush1.msra.mxu0 %v2406
    %2727 = vmatprep.subr.mxu0 0.0
    %2728 = vmatpush1.msra.mxu0 %v2405
    %2729 = vmatprep.subr.mxu0 0.0
    %2730 = vmatpush1.msra.mxu0 %v2404
    %2731 = vmatprep.subr.mxu0 0.0
    %2732 = vmatpush1.msra.mxu0 %v2403
    %2733 = vmatprep.subr.mxu0 0.0
    %2734 = vmatpush1.msra.mxu0 %v2402
    %2735 = vmatprep.subr.mxu0 0.0
    %2736 = vmatpush1.msra.mxu0 %v2401
    %2737 = vmatprep.subr.mxu0 0.0
    %2738 = vmatpush1.msra.mxu0 %v2400
    %2739 = vmatprep.subr.mxu0 0.0
    %2740 = vmatpush1.msra.mxu0 %v2399
    %2741 = vmatprep.subr.mxu0 0.0
    %2742 = vmatpush1.msra.mxu0 %v2398
    %2743 = vmatprep.subr.mxu0 0.0
    %2744 = vmatpush1.msra.mxu0 %v2397
    %2745 = vmatprep.subr.mxu0 0.0
    %2746 = vmatpush1.msra.mxu0 %v2396
    %2747 = vmatprep.subr.mxu0 0.0
    %2748 = vmatpush2.msra.mxu0 %v2427
    %2749 = vmatprep.subr.mxu0 0.0
    %2750 = vmatpush2.msra.mxu0 %v2426
    %2751 = vmatprep.subr.mxu0 0.0
    %2752 = vmatpush2.msra.mxu0 %v2425
    %2753 = vmatprep.subr.mxu0 0.0
    %2754 = vmatpush2.msra.mxu0 %v2424
    %2755 = vmatprep.subr.mxu0 0.0
    %2756 = vmatpush2.msra.mxu0 %v2423
    %2757 = vmatprep.subr.mxu0 0.0
    %2758 = vmatpush2.msra.mxu0 %v2422
    %2759 = vmatprep.subr.mxu0 0.0
    %2760 = vmatpush2.msra.mxu0 %v2421
    %2761 = vmatprep.subr.mxu0 0.0
    %2762 = vmatpush2.msra.mxu0 %v2420
    %2763 = vmatprep.subr.mxu0 0.0
    %2764 = vmatpush2.msra.mxu0 %v2419
    %2765 = vmatprep.subr.mxu0 0.0
    %2766 = vmatpush2.msra.mxu0 %v2418
    %2767 = vmatprep.subr.mxu0 0.0
    %2768 = vmatpush2.msra.mxu0 %v2417
    %2769 = vmatprep.subr.mxu0 0.0
    %2770 = vmatpush2.msra.mxu0 %v2416
    %2771 = vmatprep.subr.mxu0 0.0
    %2772 = vmatpush2.msra.mxu0 %v2415
    %2773 = vmatprep.subr.mxu0 0.0
    %2774 = vmatpush2.msra.mxu0 %v2414
    %2775 = vmatprep.subr.mxu0 0.0
    %2776 = vmatpush2.msra.mxu0 %v2413
    %2777 = vmatprep.subr.mxu0 0.0
    %2778 = vmatpush2.msra.mxu0 %v2412
    %2779 = vmatprep.mubr.f32.mxu0 %v2267
    %2780 = vmatmul.mubr.f32.gmra.mxu0 %v2266
    %v2781 = vpop.f32.mrf.mxu0
    %v2782 = vadd.f32 %v2712, %v2781
    %v2783 = vpop.f32.mrf.mxu0
    %2784 = vdwg.mxu0
    %v2785 = vmax.f32 %v2782, 0.0
    %v2786 = vld [vmem:[%s15] sm:$0xff]
    %v2787 = vld [vmem:[%s15 + $0x8] sm:$0xff]
    %v2788 = vld [vmem:[%s15 + $0x10] sm:$0xff]
    %v2789 = vld [vmem:[%s15 + $0x18] sm:$0xff]
    %v2790 = vld [vmem:[%s15 + $0x20] sm:$0xff]
    %v2791 = vld [vmem:[%s15 + $0x28] sm:$0xff]
    %v2792 = vld [vmem:[%s15 + $0x30] sm:$0xff]
    %v2793 = vld [vmem:[%s15 + $0x38] sm:$0xff]
    %v2794 = vld [vmem:[%s15 + $0x40] sm:$0xff]
    %v2795 = vld [vmem:[%s15 + $0x48] sm:$0xff]
    %v2796 = vld [vmem:[%s15 + $0x50] sm:$0xff]
    %v2797 = vld [vmem:[%s15 + $0x58] sm:$0xff]
    %v2798 = vld [vmem:[%s15 + $0x60] sm:$0xff]
    %v2799 = vld [vmem:[%s15 + $0x68] sm:$0xff]
    %v2800 = vld [vmem:[%s15 + $0x70] sm:$0xff]
    %v2801 = vld [vmem:[%s15 + $0x78] sm:$0xff]
    %v2802 = vld [vmem:[%s16] sm:$0x1]
    %v2804 = vlaneseq
    %v2805 = vshrl.u32 %v2804, 7
    %v2806 = vsub.s32 0, %v2805
    %v2807 = vrot.slane %v2802, %v2806
    %2809 = vmatprep.subr.mxu0 0.0
    %2810 = vmatpush1.msra.mxu0 %v2801
    %2811 = vmatprep.subr.mxu0 0.0
    %2812 = vmatpush1.msra.mxu0 %v2800
    %2813 = vmatprep.subr.mxu0 0.0
    %2814 = vmatpush1.msra.mxu0 %v2799
    %2815 = vmatprep.subr.mxu0 0.0
    %2816 = vmatpush1.msra.mxu0 %v2798
    %2817 = vmatprep.subr.mxu0 0.0
    %2818 = vmatpush1.msra.mxu0 %v2797
    %2819 = vmatprep.subr.mxu0 0.0
    %2820 = vmatpush1.msra.mxu0 %v2796
    %2821 = vmatprep.subr.mxu0 0.0
    %2822 = vmatpush1.msra.mxu0 %v2795
    %2823 = vmatprep.subr.mxu0 0.0
    %2824 = vmatpush1.msra.mxu0 %v2794
    %2825 = vmatprep.subr.mxu0 0.0
    %2826 = vmatpush1.msra.mxu0 %v2793
    %2827 = vmatprep.subr.mxu0 0.0
    %2828 = vmatpush1.msra.mxu0 %v2792
    %2829 = vmatprep.subr.mxu0 0.0
    %2830 = vmatpush1.msra.mxu0 %v2791
    %2831 = vmatprep.subr.mxu0 0.0
    %2832 = vmatpush1.msra.mxu0 %v2790
    %2833 = vmatprep.subr.mxu0 0.0
    %2834 = vmatpush1.msra.mxu0 %v2789
    %2835 = vmatprep.subr.mxu0 0.0
    %2836 = vmatpush1.msra.mxu0 %v2788
    %2837 = vmatprep.subr.mxu0 0.0
    %2838 = vmatpush1.msra.mxu0 %v2787
    %2839 = vmatprep.subr.mxu0 0.0
    %2840 = vmatpush1.msra.mxu0 %v2786
    %2841 = vmatprep.subr.mxu0 0.0
    %2842 = vmatpush2.msra.mxu0 0.0
    %2843 = vmatprep.subr.mxu0 0.0
    %2844 = vmatpush2.msra.mxu0 0.0
    %2845 = vmatprep.subr.mxu0 0.0
    %2846 = vmatpush2.msra.mxu0 0.0
    %2847 = vmatprep.subr.mxu0 0.0
    %2848 = vmatpush2.msra.mxu0 0.0
    %2849 = vmatprep.subr.mxu0 0.0
    %2850 = vmatpush2.msra.mxu0 0.0
    %2851 = vmatprep.subr.mxu0 0.0
    %2852 = vmatpush2.msra.mxu0 0.0
    %2853 = vmatprep.subr.mxu0 0.0
    %2854 = vmatpush2.msra.mxu0 0.0
    %2855 = vmatprep.subr.mxu0 0.0
    %2856 = vmatpush2.msra.mxu0 0.0
    %2857 = vmatprep.subr.mxu0 0.0
    %2858 = vmatpush2.msra.mxu0 0.0
    %2859 = vmatprep.subr.mxu0 0.0
    %2860 = vmatpush2.msra.mxu0 0.0
    %2861 = vmatprep.subr.mxu0 0.0
    %2862 = vmatpush2.msra.mxu0 0.0
    %2863 = vmatprep.subr.mxu0 0.0
    %2864 = vmatpush2.msra.mxu0 0.0
    %2865 = vmatprep.subr.mxu0 0.0
    %2866 = vmatpush2.msra.mxu0 0.0
    %2867 = vmatprep.subr.mxu0 0.0
    %2868 = vmatpush2.msra.mxu0 0.0
    %2869 = vmatprep.subr.mxu0 0.0
    %2870 = vmatpush2.msra.mxu0 0.0
    %2871 = vmatprep.subr.mxu0 0.0
    %2872 = vmatpush2.msra.mxu0 0.0
    %2873 = vmatprep.mubr.f32.mxu0 0.0
    %2874 = vmatmul.mubr.f32.gmra.mxu0 %v2785
    %v2875 = vpop.f32.mrf.mxu0
    %v2876 = vadd.f32 %v2807, %v2875
    %v2877 = vpop.f32.mrf.mxu0
    %2878 = vdwg.mxu0
    %2879 = vst [vmem:[#allocation2] sm:$0xff] %v2876
    // Predicated region
    $region70: #{tpu_custom_call.1} parent=1 // pred_check
      _
    $region71: #{tpu_custom_call.1} parent=1 // pred_check_branch
      %2881 = sbr.rel (0) target = $region73
    $region72: #{tpu_custom_call.1} parent=1 // pred_region
      %s2883 = ssub.s32 128, 128
      %2884 = vsyncadd [#allocation3], %s2883
      %s2886 = sshll.u32 [#allocation2], 4
      %s2887 = int_to_ptr.vmem [resolvable:$true] %s2886
      %2889 = dma.vmem_to_hbm [thread:$0]  %s2887, 128, %s17, [#allocation3]
    $region73: #{tpu_custom_call.1} parent=1 // pred_fallthru
      _
    // Predicated region
    $region74: #{tpu_custom_call.1} parent=1 // pred_check
      _
    $region75: #{tpu_custom_call.1} parent=1 // pred_check_branch
      %2891 = sbr.rel (0) target = $region77
    $region76: #{tpu_custom_call.1} parent=1 // pred_region
      %2892 = dma.done [#allocation3], 128
    $region77: #{tpu_custom_call.1} parent=1 // pred_fallthru
      _
    %2893 = vsyncpa [#allocation3], 1

</llo_original>
